<compile_context>
chip_gen: v5e
topology: v5e:2x2
jax: 0.10.0
libtpu: 0.0.40
codegen_flags: <defaults>
</compile_context>

<pallas_src>
import math
import jax
import jax.numpy as jnp
from jax.experimental import pallas as pl
from jax.experimental.pallas import tpu as pltpu

# ---------------- Config (mirrors the PyTorch Config) ----------------
ADT_TOKENS = 14
ADT_COMPONENT = 14
EMB_DIM = 128
ENCODER_LAYER = 1
MASK_RATIO1 = 0.15

# Mamba defaults (mamba_ssm)
D_STATE = 16
D_CONV = 4
EXPAND = 2
D_INNER = EXPAND * EMB_DIM                 # 256
DT_RANK = math.ceil(EMB_DIM / 16)          # 8

LN_EPS = 1e-5

# Sequence layout inside the kernel
REMAIN_T = int(ADT_COMPONENT * (1 - MASK_RATIO1))   # 11 (int() truncation, as in MAE PatchShuffle)
T_OUT = REMAIN_T + 1                                # 12 = cls + kept tokens
OFF = D_CONV - 1                                    # 3 leading zero rows = causal conv pad
T_PAD = 16                                          # padded rows (multiple of 8 sublanes)
assert OFF + T_OUT <= T_PAD

# selective-scan D_INNER chunking and lane-padded x_proj layout
D_CHUNK = 128
assert D_INNER % D_CHUNK == 0
B_COL = D_INNER                                     # proj columns: [dt 0:256 | B 256:384 | C 384:512]
C_COL = D_INNER + 128
NPROJ = D_INNER + 256                               # 512


# ------------------------------------------------------------------
# Fused encoder kernel
# ------------------------------------------------------------------
def _encoder_kernel(x_ref, s_ref, posc_ref, wtok_ref, btok_ref, wemb_ref,
                    win_ref, convw_ref, convb_ref, wdtbc_ref, bdt_ref, a_ref, d_ref,
                    wout_ref, lng_ref, lnb_ref, o_ref):
    tb = x_ref.shape[0]
    L = win_ref.shape[0]
    f32 = jnp.float32

    # ---- tokens Linear(14->14) on the VPU (exact f32; avoids a 14-lane MXU matmul) ----
    x = x_ref[...].reshape(tb, ADT_TOKENS)                              # (tb, 14)
    ytok = jnp.sum(x[:, :, None] * wtok_ref[...][None, :, :], axis=1) + btok_ref[...]

    # ---- embedding(1->128) + gathered pos (+b_emb) + cls; pad rows (0..2,15) stay 0 ----
    S = s_ref[...]                                                      # (tb, T_PAD, 14), 0/1
    ysel = jnp.sum(S * ytok[:, None, :], axis=2, keepdims=True)         # (tb, T_PAD, 1)
    cur = ysel * wemb_ref[...].reshape(1, 1, EMB_DIM) + posc_ref[...]   # (tb, T_PAD, E)

    zero3 = jnp.zeros((tb, OFF, D_INNER), f32)
    zero1 = jnp.zeros((tb, T_PAD - OFF - T_OUT, D_INNER), f32)

    for l in range(L):
        # fused in_proj: [x | z] in one lane-dense (128,512) matmul; bf16 in / f32 acc
        xz = jnp.dot(cur.reshape(tb * T_PAD, EMB_DIM).astype(jnp.bfloat16), win_ref[l],
                     preferred_element_type=f32).reshape(tb, T_PAD, 2 * D_INNER)
        xin = xz[:, :, :D_INNER]                                        # (tb, T_PAD, 256)
        z_real = xz[:, OFF:OFF + T_OUT, D_INNER:]                       # (tb, T_OUT, 256)

        # causal depthwise conv1d: taps read the in-buffer zero prefix; real rows only
        cw = convw_ref[l]                                               # (D_CONV, 256)
        acc = convb_ref[l][None]                                        # (1, 1, 256)
        for k in range(D_CONV):
            acc = acc + xin[:, k:k + T_OUT, :] * cw[k:k + 1, :][None]
        xc_real = acc * jax.nn.sigmoid(acc)                             # SiLU, (tb, T_OUT, 256)

        # fused x_proj (+ dt_proj folded): lane-padded [dt | B | C] = (256, 512) matmul
        xc16 = jnp.concatenate([zero3, xc_real, zero1], axis=1)         # (tb, T_PAD, 256)
        proj = jnp.dot(xc16.reshape(tb * T_PAD, D_INNER).astype(jnp.bfloat16), wdtbc_ref[l],
                       preferred_element_type=f32).reshape(tb, T_PAD, NPROJ)
        projr = proj[:, OFF:OFF + T_OUT, :]                             # only the 12 real rows
        dt = jax.nn.softplus(projr[:, :, :D_INNER] + bdt_ref[l][None])  # (tb, T_OUT, 256)
        Bm = projr[:, :, B_COL:B_COL + D_STATE]                         # (tb, T_OUT, 16)
        Cm = projr[:, :, C_COL:C_COL + D_STATE]                         # (tb, T_OUT, 16)

        dtxc = dt * xc_real                                             # (tb, T_OUT, 256)
        A = a_ref[l]                                                    # (D_STATE, 256) = -exp(A_log)

        # selective scan, chunked over D_INNER so h = (tb, 16, 128) stays in vregs
        y_chunks = []
        for c in range(0, D_INNER, D_CHUNK):
            dt_c = dt[:, :, c:c + D_CHUNK]
            dA = jnp.exp(dt_c[:, :, None, :] * A[None, None, :, c:c + D_CHUNK])
            dtxc_c = dtxc[:, :, c:c + D_CHUNK]
            h = jnp.zeros((tb, D_STATE, D_CHUNK), f32)
            ys = []
            for i in range(T_OUT):
                h = dA[:, i] * h + dtxc_c[:, i, None, :] * Bm[:, i, :, None]
                ys.append(jnp.sum(h * Cm[:, i, :, None], axis=1))       # (tb, D_CHUNK)
            y_chunks.append(jnp.stack(ys, axis=1))                      # (tb, T_OUT, D_CHUNK)
        y_real = jnp.concatenate(y_chunks, axis=-1)                     # (tb, T_OUT, 256)

        # skip (D * x), gating, out_proj
        y_real = y_real + xc_real * d_ref[l][None]
        y_real = y_real * (z_real * jax.nn.sigmoid(z_real))
        y16 = jnp.concatenate([zero3, y_real, zero1], axis=1)           # (tb, T_PAD, 256)
        cur = jnp.dot(y16.reshape(tb * T_PAD, D_INNER).astype(jnp.bfloat16), wout_ref[l],
                      preferred_element_type=f32).reshape(tb, T_PAD, EMB_DIM)

    # ---- LayerNorm over E; full 16-row aligned store (wrapper slices the 12 real rows) ----
    mean = jnp.mean(cur, axis=-1, keepdims=True)
    xm = cur - mean
    var = jnp.mean(xm * xm, axis=-1, keepdims=True)
    normed = xm * jax.lax.rsqrt(var + LN_EPS)
    o_ref[...] = (normed * lng_ref[...].reshape(1, 1, EMB_DIM)
                  + lnb_ref[...].reshape(1, 1, EMB_DIM))


def _pick_tb(B):
    """Batch tile: M = tb*T_PAD fills the MXU (128-wide on v5e -> tb=8, 256-wide on
    v6e/v7x -> tb=16); prefer >=2 grid steps so v7x's two TensorCores both get work."""
    try:
        kind = jax.devices()[0].device_kind.lower()
    except Exception:
        kind = ""
    v5e = ("v5 lite" in kind) or ("v5e" in kind) or ("v5lite" in kind)
    target = min(8 if v5e else 16, B)
    for cand in range(target, 0, -1):
        if B % cand == 0 and B // cand >= 2:
            return cand
    for cand in range(target, 0, -1):
        if B % cand == 0:
            return cand
    return 1


def _encoder_call(x3, S, posc, p, tb):
    B = x3.shape[0]
    L = p["w_in"].shape[0]

    def bmap(i):
        return (i, 0, 0)

    def c2(i):
        return (0, 0)

    def c3(i):
        return (0, 0, 0)

    in_specs = [
        pl.BlockSpec((tb, 1, ADT_TOKENS), bmap),                  # x
        pl.BlockSpec((tb, T_PAD, ADT_COMPONENT), bmap),           # S (one-hot selection)
        pl.BlockSpec((tb, T_PAD, EMB_DIM), bmap),                 # posc (gathered pos+b_emb+cls)
        pl.BlockSpec((ADT_TOKENS, ADT_TOKENS), c2),               # w_tok
        pl.BlockSpec((1, ADT_TOKENS), c2),                        # b_tok
        pl.BlockSpec((1, EMB_DIM), c2),                           # w_emb
        pl.BlockSpec((L, EMB_DIM, 2 * D_INNER), c3),              # w_in (bf16)
        pl.BlockSpec((L, D_CONV, D_INNER), c3),                   # conv_w
        pl.BlockSpec((L, 1, D_INNER), c3),                        # conv_b
        pl.BlockSpec((L, D_INNER, NPROJ), c3),                    # w_dtbc (bf16, lane-padded)
        pl.BlockSpec((L, 1, D_INNER), c3),                        # b_dt
        pl.BlockSpec((L, D_STATE, D_INNER), c3),                  # A = -exp(A_log)
        pl.BlockSpec((L, 1, D_INNER), c3),                        # D skip
        pl.BlockSpec((L, D_INNER, EMB_DIM), c3),                  # w_out (bf16)
        pl.BlockSpec((1, EMB_DIM), c2),                           # ln_g
        pl.BlockSpec((1, EMB_DIM), c2),                           # ln_b
    ]
    return pl.pallas_call(
        _encoder_kernel,
        grid=(B // tb,),
        in_specs=in_specs,
        out_specs=pl.BlockSpec((tb, T_PAD, EMB_DIM), bmap),
        out_shape=jax.ShapeDtypeStruct((B, T_PAD, EMB_DIM), jnp.float32),
        compiler_params=pltpu.CompilerParams(
            dimension_semantics=("parallel",),
            vmem_limit_bytes=48 * 1024 * 1024),
    )(x3, S, posc, p["w_tok"], p["b_tok"], p["w_emb"],
      p["w_in"], p["conv_w"], p["conv_b"], p["w_dtbc"], p["b_dt"], p["A"], p["d"],
      p["w_out"], p["ln_g"], p["ln_b"])


# ------------------------------------------------------------------
# Parameter init (shapes from the module __init__) + kernel-side packing
# ------------------------------------------------------------------
def init_params(key):
    ks = jax.random.split(key, 8)
    p = {}
    p["w_tok"] = jax.random.normal(ks[0], (ADT_TOKENS, ADT_TOKENS), jnp.float32) / math.sqrt(ADT_TOKENS)
    p["b_tok"] = jnp.zeros((1, ADT_TOKENS), jnp.float32)
    p["w_emb"] = jax.random.normal(ks[1], (1, EMB_DIM), jnp.float32)       # Linear(emb_ADT=1, emb_dim)
    p["b_emb"] = jnp.zeros((1, EMB_DIM), jnp.float32)
    p["cls"] = 0.02 * jax.random.normal(ks[2], (1, 1, EMB_DIM), jnp.float32)
    p["pos"] = 0.02 * jax.random.normal(ks[3], (ADT_COMPONENT, EMB_DIM), jnp.float32)

    layers = []
    for l in range(ENCODER_LAYER):
        kk = jax.random.split(jax.random.fold_in(key, 100 + l), 8)
        lw = {}
        lw["w_in_x"] = jax.random.normal(kk[0], (EMB_DIM, D_INNER), jnp.float32) / math.sqrt(EMB_DIM)
        lw["w_in_z"] = jax.random.normal(kk[1], (EMB_DIM, D_INNER), jnp.float32) / math.sqrt(EMB_DIM)
        lw["conv_w"] = jax.random.normal(kk[2], (D_CONV, D_INNER), jnp.float32) / math.sqrt(D_CONV)
        lw["conv_b"] = jnp.zeros((1, D_INNER), jnp.float32)
        lw["w_xdt"] = jax.random.normal(kk[3], (D_INNER, DT_RANK), jnp.float32) / math.sqrt(D_INNER)
        lw["w_xb"] = jax.random.normal(kk[4], (D_INNER, D_STATE), jnp.float32) / math.sqrt(D_INNER)
        lw["w_xc"] = jax.random.normal(kk[5], (D_INNER, D_STATE), jnp.float32) / math.sqrt(D_INNER)
        lw["w_dt"] = jax.random.normal(kk[6], (DT_RANK, D_INNER), jnp.float32) * (DT_RANK ** -0.5)
        dt0 = jnp.exp(jax.random.uniform(kk[7], (1, D_INNER), jnp.float32)
                      * (math.log(0.1) - math.log(0.001)) + math.log(0.001))
        lw["b_dt"] = jnp.log(jnp.expm1(dt0))                               # inverse softplus
        lw["a_logT"] = jnp.log(
            jnp.tile(jnp.arange(1, D_STATE + 1, dtype=jnp.float32)[:, None], (1, D_INNER)))
        lw["d"] = jnp.ones((1, D_INNER), jnp.float32)
        lw["w_out"] = jax.random.normal(jax.random.fold_in(key, 200 + l),
                                        (D_INNER, EMB_DIM), jnp.float32) / math.sqrt(D_INNER)
        layers.append(lw)
    p["mamba"] = layers
    p["ln_g"] = jnp.ones((1, EMB_DIM), jnp.float32)
    p["ln_b"] = jnp.zeros((1, EMB_DIM), jnp.float32)
    return p


def pack_params(params, mxu_dtype=jnp.bfloat16):
    """One-time packing of the PyTorch-style params into fused kernel weights."""
    packed = {
        "w_tok": params["w_tok"],
        "b_tok": params["b_tok"],
        "w_emb": params["w_emb"],
        "pos_eff": params["pos"] + params["b_emb"],                        # fold embedding bias
        "cls_row": params["cls"].reshape(EMB_DIM),
        "ln_g": params["ln_g"],
        "ln_b": params["ln_b"],
    }
    w_in, conv_w, conv_b, w_dtbc, b_dt, A, d_skip, w_out = [], [], [], [], [], [], [], []
    for lw in params["mamba"]:
        w_in.append(jnp.concatenate([lw["w_in_x"], lw["w_in_z"]], axis=1).astype(mxu_dtype))
        conv_w.append(lw["conv_w"])
        conv_b.append(lw["conv_b"])
        # lane-padded fused x_proj: [ W_xdt @ W_dt | B (pad to 128) | C (pad to 128) ] -> (256, 512)
        wd = jnp.zeros((D_INNER, NPROJ), jnp.float32)
        wd = wd.at[:, :D_INNER].set(lw["w_xdt"] @ lw["w_dt"])
        wd = wd.at[:, B_COL:B_COL + D_STATE].set(lw["w_xb"])
        wd = wd.at[:, C_COL:C_COL + D_STATE].set(lw["w_xc"])
        w_dtbc.append(wd.astype(mxu_dtype))
        b_dt.append(lw["b_dt"])
        A.append(-jnp.exp(lw["a_logT"]))
        d_skip.append(lw["d"])
        w_out.append(lw["w_out"].astype(mxu_dtype))
    packed["w_in"] = jnp.stack(w_in)
    packed["conv_w"] = jnp.stack(conv_w)
    packed["conv_b"] = jnp.stack(conv_b)
    packed["w_dtbc"] = jnp.stack(w_dtbc)
    packed["b_dt"] = jnp.stack(b_dt)
    packed["A"] = jnp.stack(A)
    packed["d"] = jnp.stack(d_skip)
    packed["w_out"] = jnp.stack(w_out)
    return packed


# ------------------------------------------------------------------
# Full ADT_Encoder forward (fused Pallas call + tiny index-only glue)
# ------------------------------------------------------------------
def adt_encoder_forward(patches, packed, shuffle_key):
    B = patches.shape[0]
    T = ADT_COMPONENT

    # PatchShuffle permutations (vmapped, index-only work)
    keys = jax.random.split(shuffle_key, B)
    fwd = jax.vmap(lambda k: jax.random.permutation(k, T))(keys)           # (B, T)
    backward_indexes = jnp.argsort(fwd, axis=1).T                          # (T, B)
    kept = fwd[:, :REMAIN_T]                                               # (B, 11)

    # one-hot selection matrices (rows 0..OFF zero = cls + conv pad, then kept tokens)
    sel = jax.nn.one_hot(kept, T, dtype=jnp.float32)                       # (B, 11, 14)
    S = jnp.zeros((B, T_PAD, T), jnp.float32).at[:, OFF + 1:OFF + 1 + REMAIN_T, :].set(sel)

    # exact f32 pos(+b_emb)/cls plane: row OFF = cls, rows OFF+1.. = pos_eff[kept]
    pos_kept = packed["pos_eff"][kept]                                     # (B, 11, E)
    posc = jnp.zeros((B, T_PAD, EMB_DIM), jnp.float32)
    posc = posc.at[:, OFF + 1:OFF + 1 + REMAIN_T, :].set(pos_kept)
    posc = posc.at[:, OFF, :].set(packed["cls_row"])

    x3 = patches.reshape(B, 1, ADT_TOKENS)
    out16 = _encoder_call(x3, S, posc, packed, _pick_tb(B))                # (B, T_PAD, E)

    features = jnp.transpose(out16[:, OFF:OFF + T_OUT, :], (1, 0, 2))      # (T_OUT, B, E)
    return features, backward_indexes


# ------------------------------------------------------------------
# bf16-matched pure-JAX reference (original op order) for a tight tolerance check
# ------------------------------------------------------------------
def _ref_mamba_layer(x, wl):
    B, T, D = x.shape
    xz = jnp.dot(x.reshape(B * T, D).astype(jnp.bfloat16), wl["w_in"],
                 preferred_element_type=jnp.float32).reshape(B, T, 2 * D_INNER)
    xin, z = xz[..., :D_INNER], xz[..., D_INNER:]
    xpad = jnp.concatenate([jnp.zeros((B, D_CONV - 1, D_INNER), jnp.float32), xin], axis=1)
    xc = jnp.broadcast_to(wl["conv_b"].reshape(1, 1, -1), (B, T, D_INNER))
    for k in range(D_CONV):
        xc = xc + xpad[:, k:k + T, :] * wl["conv_w"][k].reshape(1, 1, -1)
    xc = xc * jax.nn.sigmoid(xc)
    proj = jnp.dot(xc.reshape(B * T, D_INNER).astype(jnp.bfloat16), wl["w_dtbc"],
                   preferred_element_type=jnp.float32).reshape(B, T, NPROJ)
    dt = jax.nn.softplus(proj[..., :D_INNER] + wl["b_dt"].reshape(1, 1, -1))
    Bm = proj[..., B_COL:B_COL + D_STATE]
    Cm = proj[..., C_COL:C_COL + D_STATE]
    A = wl["A"]
    h = jnp.zeros((B, D_STATE, D_INNER), jnp.float32)
    ys = []
    for t in range(T):
        dA = jnp.exp(dt[:, t, None, :] * A[None])
        dBx = (dt[:, t] * xc[:, t])[:, None, :] * Bm[:, t, :, None]
        h = dA * h + dBx
        ys.append(jnp.sum(h * Cm[:, t, :, None], axis=1))
    y = jnp.stack(ys, axis=1) + xc * wl["d"].reshape(1, 1, -1)
    y = y * (z * jax.nn.sigmoid(z))
    return jnp.dot(y.reshape(B * T, D_INNER).astype(jnp.bfloat16), wl["w_out"],
                   preferred_element_type=jnp.float32).reshape(B, T, D)


def reference_forward(patches, params, packed, shuffle_key):
    B = patches.shape[0]
    T = ADT_COMPONENT
    keys = jax.random.split(shuffle_key, B)
    fwd = jax.vmap(lambda k: jax.random.permutation(k, T))(keys)
    kept = fwd[:, :REMAIN_T]
    ytok = jnp.sum(patches[:, :, None] * params["w_tok"][None], axis=1) + params["b_tok"]
    emb = (ytok[:, :, None] * params["w_emb"].reshape(1, 1, EMB_DIM)
           + params["b_emb"].reshape(1, 1, EMB_DIM) + params["pos"][None])
    idx = jnp.broadcast_to(kept[:, :, None], (B, REMAIN_T, EMB_DIM))
    gath = jnp.take_along_axis(emb, idx, axis=1)
    x = jnp.concatenate(
        [jnp.broadcast_to(params["cls"].reshape(1, 1, EMB_DIM), (B, 1, EMB_DIM)), gath], axis=1)
    for l in range(packed["w_in"].shape[0]):
        wl = {k: packed[k][l] for k in ("w_in", "conv_w", "conv_b", "w_dtbc",
                                        "b_dt", "A", "d", "w_out")}
        x = _ref_mamba_layer(x, wl)
    mean = x.mean(-1, keepdims=True)
    xm = x - mean
    var = (xm * xm).mean(-1, keepdims=True)
    x = xm * jax.lax.rsqrt(var + LN_EPS) * packed["ln_g"].reshape(1, 1, -1) \
        + packed["ln_b"].reshape(1, 1, -1)
    return jnp.transpose(x, (1, 0, 2))


if __name__ == "__main__":
    key = jax.random.PRNGKey(0)
    pkey, xkey, skey = jax.random.split(key, 3)
    params = init_params(pkey)
    packed = pack_params(params)

    B = 4
    patches = jax.random.normal(xkey, (B, ADT_TOKENS), jnp.float32)

    fwd_fn = jax.jit(adt_encoder_forward)
    features, backward_indexes = fwd_fn(patches, packed, skey)
    jax.block_until_ready(features)
    jax.block_until_ready(backward_indexes)

    assert features.shape == (T_OUT, B, EMB_DIM), features.shape
    assert backward_indexes.shape == (ADT_COMPONENT, B), backward_indexes.shape
    assert bool(jnp.all(jnp.isfinite(features)))

    # bf16-matched reference -> tight tolerance
    ref = reference_forward(patches, params, packed, skey)
    err = float(jnp.max(jnp.abs(features - ref)))
    assert err < 1e-2, f"kernel/reference mismatch: max abs diff = {err}"

    print("KERNEL_OK")
</pallas_src>

<mosaic_0001>
module attributes {stable_mosaic.version = 11 : i64} {
  func.func @_encoder_kernel(%arg0: i32, %arg1: memref<2x1x14xf32, #tpu.memory_space<vmem>>, %arg2: memref<2x16x14xf32, #tpu.memory_space<vmem>>, %arg3: memref<2x16x128xf32, #tpu.memory_space<vmem>>, %arg4: memref<14x14xf32, #tpu.memory_space<vmem>>, %arg5: memref<1x14xf32, #tpu.memory_space<vmem>>, %arg6: memref<1x128xf32, #tpu.memory_space<vmem>>, %arg7: memref<1x128x512xbf16, #tpu.memory_space<vmem>>, %arg8: memref<1x4x256xf32, #tpu.memory_space<vmem>>, %arg9: memref<1x1x256xf32, #tpu.memory_space<vmem>>, %arg10: memref<1x256x512xbf16, #tpu.memory_space<vmem>>, %arg11: memref<1x1x256xf32, #tpu.memory_space<vmem>>, %arg12: memref<1x16x256xf32, #tpu.memory_space<vmem>>, %arg13: memref<1x1x256xf32, #tpu.memory_space<vmem>>, %arg14: memref<1x256x128xbf16, #tpu.memory_space<vmem>>, %arg15: memref<1x128xf32, #tpu.memory_space<vmem>>, %arg16: memref<1x128xf32, #tpu.memory_space<vmem>>, %arg17: memref<2x16x128xf32, #tpu.memory_space<vmem>>) attributes {dimension_semantics = [#tpu.dimension_semantics<parallel>], iteration_bounds = array<i64: 2>, scalar_prefetch = 0 : i64, scratch_operands = 0 : i64, tpu.core_type = #tpu.core_type<tc>, window_params = [{transform_indices = @transform_0, window_bounds = array<i64: 2, 1, 14>}, {transform_indices = @transform_1, window_bounds = array<i64: 2, 16, 14>}, {transform_indices = @transform_2, window_bounds = array<i64: 2, 16, 128>}, {pipeline_mode = #tpu.pipeline_mode<synchronous>, transform_indices = @transform_3, window_bounds = array<i64: 14, 14>}, {pipeline_mode = #tpu.pipeline_mode<synchronous>, transform_indices = @transform_4, window_bounds = array<i64: 1, 14>}, {pipeline_mode = #tpu.pipeline_mode<synchronous>, transform_indices = @transform_5, window_bounds = array<i64: 1, 128>}, {pipeline_mode = #tpu.pipeline_mode<synchronous>, transform_indices = @transform_6, window_bounds = array<i64: 1, 128, 512>}, {pipeline_mode = #tpu.pipeline_mode<synchronous>, transform_indices = @transform_7, window_bounds = array<i64: 1, 4, 256>}, {pipeline_mode = #tpu.pipeline_mode<synchronous>, transform_indices = @transform_8, window_bounds = array<i64: 1, 1, 256>}, {pipeline_mode = #tpu.pipeline_mode<synchronous>, transform_indices = @transform_9, window_bounds = array<i64: 1, 256, 512>}, {pipeline_mode = #tpu.pipeline_mode<synchronous>, transform_indices = @transform_10, window_bounds = array<i64: 1, 1, 256>}, {pipeline_mode = #tpu.pipeline_mode<synchronous>, transform_indices = @transform_11, window_bounds = array<i64: 1, 16, 256>}, {pipeline_mode = #tpu.pipeline_mode<synchronous>, transform_indices = @transform_12, window_bounds = array<i64: 1, 1, 256>}, {pipeline_mode = #tpu.pipeline_mode<synchronous>, transform_indices = @transform_13, window_bounds = array<i64: 1, 256, 128>}, {pipeline_mode = #tpu.pipeline_mode<synchronous>, transform_indices = @transform_14, window_bounds = array<i64: 1, 128>}, {pipeline_mode = #tpu.pipeline_mode<synchronous>, transform_indices = @transform_15, window_bounds = array<i64: 1, 128>}, {transform_indices = @transform_16, window_bounds = array<i64: 2, 16, 128>}]} {
    %c0 = arith.constant 0 : index
    %c0_0 = arith.constant 0 : index
    %c0_1 = arith.constant 0 : index
    %0 = vector.load %arg1[%c0, %c0_0, %c0_1] : memref<2x1x14xf32, #tpu.memory_space<vmem>>, vector<2x1x14xf32>
    %1 = vector.shape_cast %0 : vector<2x1x14xf32> to vector<2x14xf32>
    %2 = vector.shape_cast %1 : vector<2x14xf32> to vector<2x14x1xf32>
    %c0_2 = arith.constant 0 : index
    %c0_3 = arith.constant 0 : index
    %3 = vector.load %arg4[%c0_2, %c0_3] : memref<14x14xf32, #tpu.memory_space<vmem>>, vector<14x14xf32>
    %4 = vector.shape_cast %3 : vector<14x14xf32> to vector<1x14x14xf32>
    %5 = vector.broadcast %2 : vector<2x14x1xf32> to vector<2x14x14xf32>
    %6 = vector.broadcast %4 : vector<1x14x14xf32> to vector<2x14x14xf32>
    %7 = arith.mulf %5, %6 : vector<2x14x14xf32>
    %cst = arith.constant dense<0.000000e+00> : vector<2x14xf32>
    %8 = vector.multi_reduction <add>, %7, %cst [1] : vector<2x14x14xf32> to vector<2x14xf32>
    %c0_4 = arith.constant 0 : index
    %c0_5 = arith.constant 0 : index
    %9 = vector.load %arg5[%c0_4, %c0_5] : memref<1x14xf32, #tpu.memory_space<vmem>>, vector<1x14xf32>
    %10 = vector.broadcast %9 : vector<1x14xf32> to vector<2x14xf32>
    %11 = arith.addf %8, %10 : vector<2x14xf32>
    %c0_6 = arith.constant 0 : index
    %c0_7 = arith.constant 0 : index
    %c0_8 = arith.constant 0 : index
    %12 = vector.load %arg2[%c0_6, %c0_7, %c0_8] : memref<2x16x14xf32, #tpu.memory_space<vmem>>, vector<2x16x14xf32>
    %13 = vector.shape_cast %11 : vector<2x14xf32> to vector<2x1x14xf32>
    %14 = vector.broadcast %13 : vector<2x1x14xf32> to vector<2x16x14xf32>
    %15 = arith.mulf %12, %14 : vector<2x16x14xf32>
    %cst_9 = arith.constant dense<0.000000e+00> : vector<2x16xf32>
    %16 = vector.multi_reduction <add>, %15, %cst_9 [2] : vector<2x16x14xf32> to vector<2x16xf32>
    %17 = vector.shape_cast %16 : vector<2x16xf32> to vector<2x16x1xf32>
    %c0_10 = arith.constant 0 : index
    %c0_11 = arith.constant 0 : index
    %18 = vector.load %arg6[%c0_10, %c0_11] : memref<1x128xf32, #tpu.memory_space<vmem>>, vector<1x128xf32>
    %19 = vector.shape_cast %18 : vector<1x128xf32> to vector<1x1x128xf32>
    %20 = vector.broadcast %17 : vector<2x16x1xf32> to vector<2x16x128xf32>
    %21 = vector.broadcast %19 : vector<1x1x128xf32> to vector<2x16x128xf32>
    %22 = arith.mulf %20, %21 : vector<2x16x128xf32>
    %c0_12 = arith.constant 0 : index
    %c0_13 = arith.constant 0 : index
    %c0_14 = arith.constant 0 : index
    %23 = vector.load %arg3[%c0_12, %c0_13, %c0_14] : memref<2x16x128xf32, #tpu.memory_space<vmem>>, vector<2x16x128xf32>
    %24 = arith.addf %22, %23 : vector<2x16x128xf32>
    %cst_15 = arith.constant 0.000000e+00 : f32
    %25 = vector.broadcast %cst_15 : f32 to vector<2x3x256xf32>
    %cst_16 = arith.constant 0.000000e+00 : f32
    %26 = vector.broadcast %cst_16 : f32 to vector<2x1x256xf32>
    %27 = vector.shape_cast %24 : vector<2x16x128xf32> to vector<32x128xf32>
    %28 = arith.truncf %27 : vector<32x128xf32> to vector<32x128xbf16>
    %c0_17 = arith.constant 0 : index
    %c0_18 = arith.constant 0 : index
    %c0_19 = arith.constant 0 : index
    %29 = vector.load %arg7[%c0_17, %c0_18, %c0_19] : memref<1x128x512xbf16, #tpu.memory_space<vmem>>, vector<1x128x512xbf16>
    %30 = vector.shape_cast %29 : vector<1x128x512xbf16> to vector<128x512xbf16>
    %cst_20 = arith.constant dense<0.000000e+00> : vector<32x512xf32>
    %31 = tpu.matmul %28, %30, %cst_20 {dimension_numbers = #tpu.dot_dimension_numbers<[1], [0], [0], [1], [0, 0, 1, 1], [], []>} : vector<32x128xbf16>, vector<128x512xbf16>, vector<32x512xf32> -> vector<32x512xf32>
    %32 = vector.shape_cast %31 : vector<32x512xf32> to vector<2x16x512xf32>
    %33 = vector.extract_strided_slice %32 {offsets = [0, 0, 0], sizes = [2, 16, 256], strides = [1, 1, 1]} : vector<2x16x512xf32> to vector<2x16x256xf32>
    %34 = vector.extract_strided_slice %32 {offsets = [0, 3, 256], sizes = [2, 12, 256], strides = [1, 1, 1]} : vector<2x16x512xf32> to vector<2x12x256xf32>
    %c0_21 = arith.constant 0 : index
    %c0_22 = arith.constant 0 : index
    %c0_23 = arith.constant 0 : index
    %35 = vector.load %arg8[%c0_21, %c0_22, %c0_23] : memref<1x4x256xf32, #tpu.memory_space<vmem>>, vector<1x4x256xf32>
    %36 = vector.shape_cast %35 : vector<1x4x256xf32> to vector<4x256xf32>
    %c0_24 = arith.constant 0 : index
    %c0_25 = arith.constant 0 : index
    %c0_26 = arith.constant 0 : index
    %37 = vector.load %arg9[%c0_24, %c0_25, %c0_26] : memref<1x1x256xf32, #tpu.memory_space<vmem>>, vector<1x1x256xf32>
    %38 = vector.shape_cast %37 : vector<1x1x256xf32> to vector<1x256xf32>
    %39 = vector.shape_cast %38 : vector<1x256xf32> to vector<1x1x256xf32>
    %40 = vector.extract_strided_slice %33 {offsets = [0, 0, 0], sizes = [2, 12, 256], strides = [1, 1, 1]} : vector<2x16x256xf32> to vector<2x12x256xf32>
    %41 = vector.extract_strided_slice %36 {offsets = [0, 0], sizes = [1, 256], strides = [1, 1]} : vector<4x256xf32> to vector<1x256xf32>
    %42 = vector.shape_cast %41 : vector<1x256xf32> to vector<1x1x256xf32>
    %43 = vector.broadcast %42 : vector<1x1x256xf32> to vector<2x12x256xf32>
    %44 = arith.mulf %40, %43 : vector<2x12x256xf32>
    %45 = vector.broadcast %39 : vector<1x1x256xf32> to vector<2x12x256xf32>
    %46 = arith.addf %45, %44 : vector<2x12x256xf32>
    %47 = vector.extract_strided_slice %33 {offsets = [0, 1, 0], sizes = [2, 12, 256], strides = [1, 1, 1]} : vector<2x16x256xf32> to vector<2x12x256xf32>
    %48 = vector.extract_strided_slice %36 {offsets = [1, 0], sizes = [1, 256], strides = [1, 1]} : vector<4x256xf32> to vector<1x256xf32>
    %49 = vector.shape_cast %48 : vector<1x256xf32> to vector<1x1x256xf32>
    %50 = vector.broadcast %49 : vector<1x1x256xf32> to vector<2x12x256xf32>
    %51 = arith.mulf %47, %50 : vector<2x12x256xf32>
    %52 = arith.addf %46, %51 : vector<2x12x256xf32>
    %53 = vector.extract_strided_slice %33 {offsets = [0, 2, 0], sizes = [2, 12, 256], strides = [1, 1, 1]} : vector<2x16x256xf32> to vector<2x12x256xf32>
    %54 = vector.extract_strided_slice %36 {offsets = [2, 0], sizes = [1, 256], strides = [1, 1]} : vector<4x256xf32> to vector<1x256xf32>
    %55 = vector.shape_cast %54 : vector<1x256xf32> to vector<1x1x256xf32>
    %56 = vector.broadcast %55 : vector<1x1x256xf32> to vector<2x12x256xf32>
    %57 = arith.mulf %53, %56 : vector<2x12x256xf32>
    %58 = arith.addf %52, %57 : vector<2x12x256xf32>
    %59 = vector.extract_strided_slice %33 {offsets = [0, 3, 0], sizes = [2, 12, 256], strides = [1, 1, 1]} : vector<2x16x256xf32> to vector<2x12x256xf32>
    %60 = vector.extract_strided_slice %36 {offsets = [3, 0], sizes = [1, 256], strides = [1, 1]} : vector<4x256xf32> to vector<1x256xf32>
    %61 = vector.shape_cast %60 : vector<1x256xf32> to vector<1x1x256xf32>
    %62 = vector.broadcast %61 : vector<1x1x256xf32> to vector<2x12x256xf32>
    %63 = arith.mulf %59, %62 : vector<2x12x256xf32>
    %64 = arith.addf %58, %63 : vector<2x12x256xf32>
    %65 = arith.negf %64 : vector<2x12x256xf32>
    %66 = math.exp %65 : vector<2x12x256xf32>
    %cst_27 = arith.constant 1.000000e+00 : f32
    %67 = vector.broadcast %cst_27 : f32 to vector<2x12x256xf32>
    %68 = arith.addf %67, %66 : vector<2x12x256xf32>
    %69 = arith.divf %67, %68 : vector<2x12x256xf32>
    %70 = arith.mulf %64, %69 : vector<2x12x256xf32>
    %71 = tpu.concatenate %25, %70, %26 in 1 : vector<2x3x256xf32>, vector<2x12x256xf32>, vector<2x1x256xf32> -> vector<2x16x256xf32>
    %72 = vector.shape_cast %71 : vector<2x16x256xf32> to vector<32x256xf32>
    %73 = arith.truncf %72 : vector<32x256xf32> to vector<32x256xbf16>
    %c0_28 = arith.constant 0 : index
    %c0_29 = arith.constant 0 : index
    %c0_30 = arith.constant 0 : index
    %74 = vector.load %arg10[%c0_28, %c0_29, %c0_30] : memref<1x256x512xbf16, #tpu.memory_space<vmem>>, vector<1x256x512xbf16>
    %75 = vector.shape_cast %74 : vector<1x256x512xbf16> to vector<256x512xbf16>
    %cst_31 = arith.constant dense<0.000000e+00> : vector<32x512xf32>
    %76 = tpu.matmul %73, %75, %cst_31 {dimension_numbers = #tpu.dot_dimension_numbers<[1], [0], [0], [1], [0, 0, 1, 1], [], []>} : vector<32x256xbf16>, vector<256x512xbf16>, vector<32x512xf32> -> vector<32x512xf32>
    %77 = vector.shape_cast %76 : vector<32x512xf32> to vector<2x16x512xf32>
    %78 = vector.extract_strided_slice %77 {offsets = [0, 3, 0], sizes = [2, 12, 512], strides = [1, 1, 1]} : vector<2x16x512xf32> to vector<2x12x512xf32>
    %79 = vector.extract_strided_slice %78 {offsets = [0, 0, 0], sizes = [2, 12, 256], strides = [1, 1, 1]} : vector<2x12x512xf32> to vector<2x12x256xf32>
    %c0_32 = arith.constant 0 : index
    %c0_33 = arith.constant 0 : index
    %c0_34 = arith.constant 0 : index
    %80 = vector.load %arg11[%c0_32, %c0_33, %c0_34] : memref<1x1x256xf32, #tpu.memory_space<vmem>>, vector<1x1x256xf32>
    %81 = vector.shape_cast %80 : vector<1x1x256xf32> to vector<1x256xf32>
    %82 = vector.shape_cast %81 : vector<1x256xf32> to vector<1x1x256xf32>
    %83 = vector.broadcast %82 : vector<1x1x256xf32> to vector<2x12x256xf32>
    %84 = arith.addf %79, %83 : vector<2x12x256xf32>
    %cst_35 = arith.constant 0.000000e+00 : f32
    %85 = vector.broadcast %cst_35 : f32 to vector<2x12x256xf32>
    %86 = arith.maximumf %84, %85 : vector<2x12x256xf32>
    %87 = vector.broadcast %cst_35 : f32 to vector<2x12x256xf32>
    %88 = arith.subf %84, %87 : vector<2x12x256xf32>
    %89 = arith.cmpf one, %88, %88 : vector<2x12x256xf32>
    %90 = vector.broadcast %cst_35 : f32 to vector<2x12x256xf32>
    %91 = arith.addf %84, %90 : vector<2x12x256xf32>
    %92 = math.absf %88 : vector<2x12x256xf32>
    %cst_36 = arith.constant 0.000000e+00 : f32
    %93 = vector.broadcast %cst_36 : f32 to vector<2x12x256xf32>
    %94 = arith.subf %93, %92 : vector<2x12x256xf32>
    %95 = math.exp %94 : vector<2x12x256xf32>
    %96 = math.log1p %95 : vector<2x12x256xf32>
    %97 = arith.addf %86, %96 : vector<2x12x256xf32>
    %98 = arith.select %89, %91, %97 : vector<2x12x256xi1>, vector<2x12x256xf32>
    %99 = vector.extract_strided_slice %78 {offsets = [0, 0, 256], sizes = [2, 12, 16], strides = [1, 1, 1]} : vector<2x12x512xf32> to vector<2x12x16xf32>
    %100 = vector.extract_strided_slice %78 {offsets = [0, 0, 384], sizes = [2, 12, 16], strides = [1, 1, 1]} : vector<2x12x512xf32> to vector<2x12x16xf32>
    %101 = arith.mulf %98, %70 : vector<2x12x256xf32>
    %c0_37 = arith.constant 0 : index
    %c0_38 = arith.constant 0 : index
    %c0_39 = arith.constant 0 : index
    %102 = vector.load %arg12[%c0_37, %c0_38, %c0_39] : memref<1x16x256xf32, #tpu.memory_space<vmem>>, vector<1x16x256xf32>
    %103 = vector.shape_cast %102 : vector<1x16x256xf32> to vector<16x256xf32>
    %104 = vector.extract_strided_slice %98 {offsets = [0, 0, 0], sizes = [2, 12, 128], strides = [1, 1, 1]} : vector<2x12x256xf32> to vector<2x12x128xf32>
    %105 = vector.shape_cast %104 : vector<2x12x128xf32> to vector<2x12x1x128xf32>
    %106 = vector.extract_strided_slice %103 {offsets = [0, 0], sizes = [16, 128], strides = [1, 1]} : vector<16x256xf32> to vector<16x128xf32>
    %107 = vector.shape_cast %106 : vector<16x128xf32> to vector<1x1x16x128xf32>
    %108 = vector.broadcast %105 : vector<2x12x1x128xf32> to vector<2x12x16x128xf32>
    %109 = vector.broadcast %107 : vector<1x1x16x128xf32> to vector<2x12x16x128xf32>
    %110 = arith.mulf %108, %109 : vector<2x12x16x128xf32>
    %111 = math.exp %110 : vector<2x12x16x128xf32>
    %112 = vector.extract_strided_slice %101 {offsets = [0, 0, 0], sizes = [2, 12, 128], strides = [1, 1, 1]} : vector<2x12x256xf32> to vector<2x12x128xf32>
    %cst_40 = arith.constant 0.000000e+00 : f32
    %113 = vector.broadcast %cst_40 : f32 to vector<2x16x128xf32>
    %114 = vector.extract_strided_slice %111 {offsets = [0, 0, 0, 0], sizes = [2, 1, 16, 128], strides = [1, 1, 1, 1]} : vector<2x12x16x128xf32> to vector<2x1x16x128xf32>
    %115 = vector.shape_cast %114 : vector<2x1x16x128xf32> to vector<2x16x128xf32>
    %116 = arith.mulf %115, %113 : vector<2x16x128xf32>
    %117 = vector.extract_strided_slice %112 {offsets = [0, 0, 0], sizes = [2, 1, 128], strides = [1, 1, 1]} : vector<2x12x128xf32> to vector<2x1x128xf32>
    %118 = vector.shape_cast %117 : vector<2x1x128xf32> to vector<2x128xf32>
    %119 = vector.shape_cast %118 : vector<2x128xf32> to vector<2x1x128xf32>
    %120 = vector.extract_strided_slice %99 {offsets = [0, 0, 0], sizes = [2, 1, 16], strides = [1, 1, 1]} : vector<2x12x16xf32> to vector<2x1x16xf32>
    %121 = vector.shape_cast %120 : vector<2x1x16xf32> to vector<2x16xf32>
    %122 = vector.shape_cast %121 : vector<2x16xf32> to vector<2x16x1xf32>
    %123 = vector.broadcast %119 : vector<2x1x128xf32> to vector<2x16x128xf32>
    %124 = vector.broadcast %122 : vector<2x16x1xf32> to vector<2x16x128xf32>
    %125 = arith.mulf %123, %124 : vector<2x16x128xf32>
    %126 = arith.addf %116, %125 : vector<2x16x128xf32>
    %127 = vector.extract_strided_slice %100 {offsets = [0, 0, 0], sizes = [2, 1, 16], strides = [1, 1, 1]} : vector<2x12x16xf32> to vector<2x1x16xf32>
    %128 = vector.shape_cast %127 : vector<2x1x16xf32> to vector<2x16xf32>
    %129 = vector.shape_cast %128 : vector<2x16xf32> to vector<2x16x1xf32>
    %130 = vector.broadcast %129 : vector<2x16x1xf32> to vector<2x16x128xf32>
    %131 = arith.mulf %126, %130 : vector<2x16x128xf32>
    %cst_41 = arith.constant dense<0.000000e+00> : vector<2x128xf32>
    %132 = vector.multi_reduction <add>, %131, %cst_41 [1] : vector<2x16x128xf32> to vector<2x128xf32>
    %133 = vector.extract_strided_slice %111 {offsets = [0, 1, 0, 0], sizes = [2, 1, 16, 128], strides = [1, 1, 1, 1]} : vector<2x12x16x128xf32> to vector<2x1x16x128xf32>
    %134 = vector.shape_cast %133 : vector<2x1x16x128xf32> to vector<2x16x128xf32>
    %135 = arith.mulf %134, %126 : vector<2x16x128xf32>
    %136 = vector.extract_strided_slice %112 {offsets = [0, 1, 0], sizes = [2, 1, 128], strides = [1, 1, 1]} : vector<2x12x128xf32> to vector<2x1x128xf32>
    %137 = vector.shape_cast %136 : vector<2x1x128xf32> to vector<2x128xf32>
    %138 = vector.shape_cast %137 : vector<2x128xf32> to vector<2x1x128xf32>
    %139 = vector.extract_strided_slice %99 {offsets = [0, 1, 0], sizes = [2, 1, 16], strides = [1, 1, 1]} : vector<2x12x16xf32> to vector<2x1x16xf32>
    %140 = vector.shape_cast %139 : vector<2x1x16xf32> to vector<2x16xf32>
    %141 = vector.shape_cast %140 : vector<2x16xf32> to vector<2x16x1xf32>
    %142 = vector.broadcast %138 : vector<2x1x128xf32> to vector<2x16x128xf32>
    %143 = vector.broadcast %141 : vector<2x16x1xf32> to vector<2x16x128xf32>
    %144 = arith.mulf %142, %143 : vector<2x16x128xf32>
    %145 = arith.addf %135, %144 : vector<2x16x128xf32>
    %146 = vector.extract_strided_slice %100 {offsets = [0, 1, 0], sizes = [2, 1, 16], strides = [1, 1, 1]} : vector<2x12x16xf32> to vector<2x1x16xf32>
    %147 = vector.shape_cast %146 : vector<2x1x16xf32> to vector<2x16xf32>
    %148 = vector.shape_cast %147 : vector<2x16xf32> to vector<2x16x1xf32>
    %149 = vector.broadcast %148 : vector<2x16x1xf32> to vector<2x16x128xf32>
    %150 = arith.mulf %145, %149 : vector<2x16x128xf32>
    %cst_42 = arith.constant dense<0.000000e+00> : vector<2x128xf32>
    %151 = vector.multi_reduction <add>, %150, %cst_42 [1] : vector<2x16x128xf32> to vector<2x128xf32>
    %152 = vector.extract_strided_slice %111 {offsets = [0, 2, 0, 0], sizes = [2, 1, 16, 128], strides = [1, 1, 1, 1]} : vector<2x12x16x128xf32> to vector<2x1x16x128xf32>
    %153 = vector.shape_cast %152 : vector<2x1x16x128xf32> to vector<2x16x128xf32>
    %154 = arith.mulf %153, %145 : vector<2x16x128xf32>
    %155 = vector.extract_strided_slice %112 {offsets = [0, 2, 0], sizes = [2, 1, 128], strides = [1, 1, 1]} : vector<2x12x128xf32> to vector<2x1x128xf32>
    %156 = vector.shape_cast %155 : vector<2x1x128xf32> to vector<2x128xf32>
    %157 = vector.shape_cast %156 : vector<2x128xf32> to vector<2x1x128xf32>
    %158 = vector.extract_strided_slice %99 {offsets = [0, 2, 0], sizes = [2, 1, 16], strides = [1, 1, 1]} : vector<2x12x16xf32> to vector<2x1x16xf32>
    %159 = vector.shape_cast %158 : vector<2x1x16xf32> to vector<2x16xf32>
    %160 = vector.shape_cast %159 : vector<2x16xf32> to vector<2x16x1xf32>
    %161 = vector.broadcast %157 : vector<2x1x128xf32> to vector<2x16x128xf32>
    %162 = vector.broadcast %160 : vector<2x16x1xf32> to vector<2x16x128xf32>
    %163 = arith.mulf %161, %162 : vector<2x16x128xf32>
    %164 = arith.addf %154, %163 : vector<2x16x128xf32>
    %165 = vector.extract_strided_slice %100 {offsets = [0, 2, 0], sizes = [2, 1, 16], strides = [1, 1, 1]} : vector<2x12x16xf32> to vector<2x1x16xf32>
    %166 = vector.shape_cast %165 : vector<2x1x16xf32> to vector<2x16xf32>
    %167 = vector.shape_cast %166 : vector<2x16xf32> to vector<2x16x1xf32>
    %168 = vector.broadcast %167 : vector<2x16x1xf32> to vector<2x16x128xf32>
    %169 = arith.mulf %164, %168 : vector<2x16x128xf32>
    %cst_43 = arith.constant dense<0.000000e+00> : vector<2x128xf32>
    %170 = vector.multi_reduction <add>, %169, %cst_43 [1] : vector<2x16x128xf32> to vector<2x128xf32>
    %171 = vector.extract_strided_slice %111 {offsets = [0, 3, 0, 0], sizes = [2, 1, 16, 128], strides = [1, 1, 1, 1]} : vector<2x12x16x128xf32> to vector<2x1x16x128xf32>
    %172 = vector.shape_cast %171 : vector<2x1x16x128xf32> to vector<2x16x128xf32>
    %173 = arith.mulf %172, %164 : vector<2x16x128xf32>
    %174 = vector.extract_strided_slice %112 {offsets = [0, 3, 0], sizes = [2, 1, 128], strides = [1, 1, 1]} : vector<2x12x128xf32> to vector<2x1x128xf32>
    %175 = vector.shape_cast %174 : vector<2x1x128xf32> to vector<2x128xf32>
    %176 = vector.shape_cast %175 : vector<2x128xf32> to vector<2x1x128xf32>
    %177 = vector.extract_strided_slice %99 {offsets = [0, 3, 0], sizes = [2, 1, 16], strides = [1, 1, 1]} : vector<2x12x16xf32> to vector<2x1x16xf32>
    %178 = vector.shape_cast %177 : vector<2x1x16xf32> to vector<2x16xf32>
    %179 = vector.shape_cast %178 : vector<2x16xf32> to vector<2x16x1xf32>
    %180 = vector.broadcast %176 : vector<2x1x128xf32> to vector<2x16x128xf32>
    %181 = vector.broadcast %179 : vector<2x16x1xf32> to vector<2x16x128xf32>
    %182 = arith.mulf %180, %181 : vector<2x16x128xf32>
    %183 = arith.addf %173, %182 : vector<2x16x128xf32>
    %184 = vector.extract_strided_slice %100 {offsets = [0, 3, 0], sizes = [2, 1, 16], strides = [1, 1, 1]} : vector<2x12x16xf32> to vector<2x1x16xf32>
    %185 = vector.shape_cast %184 : vector<2x1x16xf32> to vector<2x16xf32>
    %186 = vector.shape_cast %185 : vector<2x16xf32> to vector<2x16x1xf32>
    %187 = vector.broadcast %186 : vector<2x16x1xf32> to vector<2x16x128xf32>
    %188 = arith.mulf %183, %187 : vector<2x16x128xf32>
    %cst_44 = arith.constant dense<0.000000e+00> : vector<2x128xf32>
    %189 = vector.multi_reduction <add>, %188, %cst_44 [1] : vector<2x16x128xf32> to vector<2x128xf32>
    %190 = vector.extract_strided_slice %111 {offsets = [0, 4, 0, 0], sizes = [2, 1, 16, 128], strides = [1, 1, 1, 1]} : vector<2x12x16x128xf32> to vector<2x1x16x128xf32>
    %191 = vector.shape_cast %190 : vector<2x1x16x128xf32> to vector<2x16x128xf32>
    %192 = arith.mulf %191, %183 : vector<2x16x128xf32>
    %193 = vector.extract_strided_slice %112 {offsets = [0, 4, 0], sizes = [2, 1, 128], strides = [1, 1, 1]} : vector<2x12x128xf32> to vector<2x1x128xf32>
    %194 = vector.shape_cast %193 : vector<2x1x128xf32> to vector<2x128xf32>
    %195 = vector.shape_cast %194 : vector<2x128xf32> to vector<2x1x128xf32>
    %196 = vector.extract_strided_slice %99 {offsets = [0, 4, 0], sizes = [2, 1, 16], strides = [1, 1, 1]} : vector<2x12x16xf32> to vector<2x1x16xf32>
    %197 = vector.shape_cast %196 : vector<2x1x16xf32> to vector<2x16xf32>
    %198 = vector.shape_cast %197 : vector<2x16xf32> to vector<2x16x1xf32>
    %199 = vector.broadcast %195 : vector<2x1x128xf32> to vector<2x16x128xf32>
    %200 = vector.broadcast %198 : vector<2x16x1xf32> to vector<2x16x128xf32>
    %201 = arith.mulf %199, %200 : vector<2x16x128xf32>
    %202 = arith.addf %192, %201 : vector<2x16x128xf32>
    %203 = vector.extract_strided_slice %100 {offsets = [0, 4, 0], sizes = [2, 1, 16], strides = [1, 1, 1]} : vector<2x12x16xf32> to vector<2x1x16xf32>
    %204 = vector.shape_cast %203 : vector<2x1x16xf32> to vector<2x16xf32>
    %205 = vector.shape_cast %204 : vector<2x16xf32> to vector<2x16x1xf32>
    %206 = vector.broadcast %205 : vector<2x16x1xf32> to vector<2x16x128xf32>
    %207 = arith.mulf %202, %206 : vector<2x16x128xf32>
    %cst_45 = arith.constant dense<0.000000e+00> : vector<2x128xf32>
    %208 = vector.multi_reduction <add>, %207, %cst_45 [1] : vector<2x16x128xf32> to vector<2x128xf32>
    %209 = vector.extract_strided_slice %111 {offsets = [0, 5, 0, 0], sizes = [2, 1, 16, 128], strides = [1, 1, 1, 1]} : vector<2x12x16x128xf32> to vector<2x1x16x128xf32>
    %210 = vector.shape_cast %209 : vector<2x1x16x128xf32> to vector<2x16x128xf32>
    %211 = arith.mulf %210, %202 : vector<2x16x128xf32>
    %212 = vector.extract_strided_slice %112 {offsets = [0, 5, 0], sizes = [2, 1, 128], strides = [1, 1, 1]} : vector<2x12x128xf32> to vector<2x1x128xf32>
    %213 = vector.shape_cast %212 : vector<2x1x128xf32> to vector<2x128xf32>
    %214 = vector.shape_cast %213 : vector<2x128xf32> to vector<2x1x128xf32>
    %215 = vector.extract_strided_slice %99 {offsets = [0, 5, 0], sizes = [2, 1, 16], strides = [1, 1, 1]} : vector<2x12x16xf32> to vector<2x1x16xf32>
    %216 = vector.shape_cast %215 : vector<2x1x16xf32> to vector<2x16xf32>
    %217 = vector.shape_cast %216 : vector<2x16xf32> to vector<2x16x1xf32>
    %218 = vector.broadcast %214 : vector<2x1x128xf32> to vector<2x16x128xf32>
    %219 = vector.broadcast %217 : vector<2x16x1xf32> to vector<2x16x128xf32>
    %220 = arith.mulf %218, %219 : vector<2x16x128xf32>
    %221 = arith.addf %211, %220 : vector<2x16x128xf32>
    %222 = vector.extract_strided_slice %100 {offsets = [0, 5, 0], sizes = [2, 1, 16], strides = [1, 1, 1]} : vector<2x12x16xf32> to vector<2x1x16xf32>
    %223 = vector.shape_cast %222 : vector<2x1x16xf32> to vector<2x16xf32>
    %224 = vector.shape_cast %223 : vector<2x16xf32> to vector<2x16x1xf32>
    %225 = vector.broadcast %224 : vector<2x16x1xf32> to vector<2x16x128xf32>
    %226 = arith.mulf %221, %225 : vector<2x16x128xf32>
    %cst_46 = arith.constant dense<0.000000e+00> : vector<2x128xf32>
    %227 = vector.multi_reduction <add>, %226, %cst_46 [1] : vector<2x16x128xf32> to vector<2x128xf32>
    %228 = vector.extract_strided_slice %111 {offsets = [0, 6, 0, 0], sizes = [2, 1, 16, 128], strides = [1, 1, 1, 1]} : vector<2x12x16x128xf32> to vector<2x1x16x128xf32>
    %229 = vector.shape_cast %228 : vector<2x1x16x128xf32> to vector<2x16x128xf32>
    %230 = arith.mulf %229, %221 : vector<2x16x128xf32>
    %231 = vector.extract_strided_slice %112 {offsets = [0, 6, 0], sizes = [2, 1, 128], strides = [1, 1, 1]} : vector<2x12x128xf32> to vector<2x1x128xf32>
    %232 = vector.shape_cast %231 : vector<2x1x128xf32> to vector<2x128xf32>
    %233 = vector.shape_cast %232 : vector<2x128xf32> to vector<2x1x128xf32>
    %234 = vector.extract_strided_slice %99 {offsets = [0, 6, 0], sizes = [2, 1, 16], strides = [1, 1, 1]} : vector<2x12x16xf32> to vector<2x1x16xf32>
    %235 = vector.shape_cast %234 : vector<2x1x16xf32> to vector<2x16xf32>
    %236 = vector.shape_cast %235 : vector<2x16xf32> to vector<2x16x1xf32>
    %237 = vector.broadcast %233 : vector<2x1x128xf32> to vector<2x16x128xf32>
    %238 = vector.broadcast %236 : vector<2x16x1xf32> to vector<2x16x128xf32>
    %239 = arith.mulf %237, %238 : vector<2x16x128xf32>
    %240 = arith.addf %230, %239 : vector<2x16x128xf32>
    %241 = vector.extract_strided_slice %100 {offsets = [0, 6, 0], sizes = [2, 1, 16], strides = [1, 1, 1]} : vector<2x12x16xf32> to vector<2x1x16xf32>
    %242 = vector.shape_cast %241 : vector<2x1x16xf32> to vector<2x16xf32>
    %243 = vector.shape_cast %242 : vector<2x16xf32> to vector<2x16x1xf32>
    %244 = vector.broadcast %243 : vector<2x16x1xf32> to vector<2x16x128xf32>
    %245 = arith.mulf %240, %244 : vector<2x16x128xf32>
    %cst_47 = arith.constant dense<0.000000e+00> : vector<2x128xf32>
    %246 = vector.multi_reduction <add>, %245, %cst_47 [1] : vector<2x16x128xf32> to vector<2x128xf32>
    %247 = vector.extract_strided_slice %111 {offsets = [0, 7, 0, 0], sizes = [2, 1, 16, 128], strides = [1, 1, 1, 1]} : vector<2x12x16x128xf32> to vector<2x1x16x128xf32>
    %248 = vector.shape_cast %247 : vector<2x1x16x128xf32> to vector<2x16x128xf32>
    %249 = arith.mulf %248, %240 : vector<2x16x128xf32>
    %250 = vector.extract_strided_slice %112 {offsets = [0, 7, 0], sizes = [2, 1, 128], strides = [1, 1, 1]} : vector<2x12x128xf32> to vector<2x1x128xf32>
    %251 = vector.shape_cast %250 : vector<2x1x128xf32> to vector<2x128xf32>
    %252 = vector.shape_cast %251 : vector<2x128xf32> to vector<2x1x128xf32>
    %253 = vector.extract_strided_slice %99 {offsets = [0, 7, 0], sizes = [2, 1, 16], strides = [1, 1, 1]} : vector<2x12x16xf32> to vector<2x1x16xf32>
    %254 = vector.shape_cast %253 : vector<2x1x16xf32> to vector<2x16xf32>
    %255 = vector.shape_cast %254 : vector<2x16xf32> to vector<2x16x1xf32>
    %256 = vector.broadcast %252 : vector<2x1x128xf32> to vector<2x16x128xf32>
    %257 = vector.broadcast %255 : vector<2x16x1xf32> to vector<2x16x128xf32>
    %258 = arith.mulf %256, %257 : vector<2x16x128xf32>
    %259 = arith.addf %249, %258 : vector<2x16x128xf32>
    %260 = vector.extract_strided_slice %100 {offsets = [0, 7, 0], sizes = [2, 1, 16], strides = [1, 1, 1]} : vector<2x12x16xf32> to vector<2x1x16xf32>
    %261 = vector.shape_cast %260 : vector<2x1x16xf32> to vector<2x16xf32>
    %262 = vector.shape_cast %261 : vector<2x16xf32> to vector<2x16x1xf32>
    %263 = vector.broadcast %262 : vector<2x16x1xf32> to vector<2x16x128xf32>
    %264 = arith.mulf %259, %263 : vector<2x16x128xf32>
    %cst_48 = arith.constant dense<0.000000e+00> : vector<2x128xf32>
    %265 = vector.multi_reduction <add>, %264, %cst_48 [1] : vector<2x16x128xf32> to vector<2x128xf32>
    %266 = vector.extract_strided_slice %111 {offsets = [0, 8, 0, 0], sizes = [2, 1, 16, 128], strides = [1, 1, 1, 1]} : vector<2x12x16x128xf32> to vector<2x1x16x128xf32>
    %267 = vector.shape_cast %266 : vector<2x1x16x128xf32> to vector<2x16x128xf32>
    %268 = arith.mulf %267, %259 : vector<2x16x128xf32>
    %269 = vector.extract_strided_slice %112 {offsets = [0, 8, 0], sizes = [2, 1, 128], strides = [1, 1, 1]} : vector<2x12x128xf32> to vector<2x1x128xf32>
    %270 = vector.shape_cast %269 : vector<2x1x128xf32> to vector<2x128xf32>
    %271 = vector.shape_cast %270 : vector<2x128xf32> to vector<2x1x128xf32>
    %272 = vector.extract_strided_slice %99 {offsets = [0, 8, 0], sizes = [2, 1, 16], strides = [1, 1, 1]} : vector<2x12x16xf32> to vector<2x1x16xf32>
    %273 = vector.shape_cast %272 : vector<2x1x16xf32> to vector<2x16xf32>
    %274 = vector.shape_cast %273 : vector<2x16xf32> to vector<2x16x1xf32>
    %275 = vector.broadcast %271 : vector<2x1x128xf32> to vector<2x16x128xf32>
    %276 = vector.broadcast %274 : vector<2x16x1xf32> to vector<2x16x128xf32>
    %277 = arith.mulf %275, %276 : vector<2x16x128xf32>
    %278 = arith.addf %268, %277 : vector<2x16x128xf32>
    %279 = vector.extract_strided_slice %100 {offsets = [0, 8, 0], sizes = [2, 1, 16], strides = [1, 1, 1]} : vector<2x12x16xf32> to vector<2x1x16xf32>
    %280 = vector.shape_cast %279 : vector<2x1x16xf32> to vector<2x16xf32>
    %281 = vector.shape_cast %280 : vector<2x16xf32> to vector<2x16x1xf32>
    %282 = vector.broadcast %281 : vector<2x16x1xf32> to vector<2x16x128xf32>
    %283 = arith.mulf %278, %282 : vector<2x16x128xf32>
    %cst_49 = arith.constant dense<0.000000e+00> : vector<2x128xf32>
    %284 = vector.multi_reduction <add>, %283, %cst_49 [1] : vector<2x16x128xf32> to vector<2x128xf32>
    %285 = vector.extract_strided_slice %111 {offsets = [0, 9, 0, 0], sizes = [2, 1, 16, 128], strides = [1, 1, 1, 1]} : vector<2x12x16x128xf32> to vector<2x1x16x128xf32>
    %286 = vector.shape_cast %285 : vector<2x1x16x128xf32> to vector<2x16x128xf32>
    %287 = arith.mulf %286, %278 : vector<2x16x128xf32>
    %288 = vector.extract_strided_slice %112 {offsets = [0, 9, 0], sizes = [2, 1, 128], strides = [1, 1, 1]} : vector<2x12x128xf32> to vector<2x1x128xf32>
    %289 = vector.shape_cast %288 : vector<2x1x128xf32> to vector<2x128xf32>
    %290 = vector.shape_cast %289 : vector<2x128xf32> to vector<2x1x128xf32>
    %291 = vector.extract_strided_slice %99 {offsets = [0, 9, 0], sizes = [2, 1, 16], strides = [1, 1, 1]} : vector<2x12x16xf32> to vector<2x1x16xf32>
    %292 = vector.shape_cast %291 : vector<2x1x16xf32> to vector<2x16xf32>
    %293 = vector.shape_cast %292 : vector<2x16xf32> to vector<2x16x1xf32>
    %294 = vector.broadcast %290 : vector<2x1x128xf32> to vector<2x16x128xf32>
    %295 = vector.broadcast %293 : vector<2x16x1xf32> to vector<2x16x128xf32>
    %296 = arith.mulf %294, %295 : vector<2x16x128xf32>
    %297 = arith.addf %287, %296 : vector<2x16x128xf32>
    %298 = vector.extract_strided_slice %100 {offsets = [0, 9, 0], sizes = [2, 1, 16], strides = [1, 1, 1]} : vector<2x12x16xf32> to vector<2x1x16xf32>
    %299 = vector.shape_cast %298 : vector<2x1x16xf32> to vector<2x16xf32>
    %300 = vector.shape_cast %299 : vector<2x16xf32> to vector<2x16x1xf32>
    %301 = vector.broadcast %300 : vector<2x16x1xf32> to vector<2x16x128xf32>
    %302 = arith.mulf %297, %301 : vector<2x16x128xf32>
    %cst_50 = arith.constant dense<0.000000e+00> : vector<2x128xf32>
    %303 = vector.multi_reduction <add>, %302, %cst_50 [1] : vector<2x16x128xf32> to vector<2x128xf32>
    %304 = vector.extract_strided_slice %111 {offsets = [0, 10, 0, 0], sizes = [2, 1, 16, 128], strides = [1, 1, 1, 1]} : vector<2x12x16x128xf32> to vector<2x1x16x128xf32>
    %305 = vector.shape_cast %304 : vector<2x1x16x128xf32> to vector<2x16x128xf32>
    %306 = arith.mulf %305, %297 : vector<2x16x128xf32>
    %307 = vector.extract_strided_slice %112 {offsets = [0, 10, 0], sizes = [2, 1, 128], strides = [1, 1, 1]} : vector<2x12x128xf32> to vector<2x1x128xf32>
    %308 = vector.shape_cast %307 : vector<2x1x128xf32> to vector<2x128xf32>
    %309 = vector.shape_cast %308 : vector<2x128xf32> to vector<2x1x128xf32>
    %310 = vector.extract_strided_slice %99 {offsets = [0, 10, 0], sizes = [2, 1, 16], strides = [1, 1, 1]} : vector<2x12x16xf32> to vector<2x1x16xf32>
    %311 = vector.shape_cast %310 : vector<2x1x16xf32> to vector<2x16xf32>
    %312 = vector.shape_cast %311 : vector<2x16xf32> to vector<2x16x1xf32>
    %313 = vector.broadcast %309 : vector<2x1x128xf32> to vector<2x16x128xf32>
    %314 = vector.broadcast %312 : vector<2x16x1xf32> to vector<2x16x128xf32>
    %315 = arith.mulf %313, %314 : vector<2x16x128xf32>
    %316 = arith.addf %306, %315 : vector<2x16x128xf32>
    %317 = vector.extract_strided_slice %100 {offsets = [0, 10, 0], sizes = [2, 1, 16], strides = [1, 1, 1]} : vector<2x12x16xf32> to vector<2x1x16xf32>
    %318 = vector.shape_cast %317 : vector<2x1x16xf32> to vector<2x16xf32>
    %319 = vector.shape_cast %318 : vector<2x16xf32> to vector<2x16x1xf32>
    %320 = vector.broadcast %319 : vector<2x16x1xf32> to vector<2x16x128xf32>
    %321 = arith.mulf %316, %320 : vector<2x16x128xf32>
    %cst_51 = arith.constant dense<0.000000e+00> : vector<2x128xf32>
    %322 = vector.multi_reduction <add>, %321, %cst_51 [1] : vector<2x16x128xf32> to vector<2x128xf32>
    %323 = vector.extract_strided_slice %111 {offsets = [0, 11, 0, 0], sizes = [2, 1, 16, 128], strides = [1, 1, 1, 1]} : vector<2x12x16x128xf32> to vector<2x1x16x128xf32>
    %324 = vector.shape_cast %323 : vector<2x1x16x128xf32> to vector<2x16x128xf32>
    %325 = arith.mulf %324, %316 : vector<2x16x128xf32>
    %326 = vector.extract_strided_slice %112 {offsets = [0, 11, 0], sizes = [2, 1, 128], strides = [1, 1, 1]} : vector<2x12x128xf32> to vector<2x1x128xf32>
    %327 = vector.shape_cast %326 : vector<2x1x128xf32> to vector<2x128xf32>
    %328 = vector.shape_cast %327 : vector<2x128xf32> to vector<2x1x128xf32>
    %329 = vector.extract_strided_slice %99 {offsets = [0, 11, 0], sizes = [2, 1, 16], strides = [1, 1, 1]} : vector<2x12x16xf32> to vector<2x1x16xf32>
    %330 = vector.shape_cast %329 : vector<2x1x16xf32> to vector<2x16xf32>
    %331 = vector.shape_cast %330 : vector<2x16xf32> to vector<2x16x1xf32>
    %332 = vector.broadcast %328 : vector<2x1x128xf32> to vector<2x16x128xf32>
    %333 = vector.broadcast %331 : vector<2x16x1xf32> to vector<2x16x128xf32>
    %334 = arith.mulf %332, %333 : vector<2x16x128xf32>
    %335 = arith.addf %325, %334 : vector<2x16x128xf32>
    %336 = vector.extract_strided_slice %100 {offsets = [0, 11, 0], sizes = [2, 1, 16], strides = [1, 1, 1]} : vector<2x12x16xf32> to vector<2x1x16xf32>
    %337 = vector.shape_cast %336 : vector<2x1x16xf32> to vector<2x16xf32>
    %338 = vector.shape_cast %337 : vector<2x16xf32> to vector<2x16x1xf32>
    %339 = vector.broadcast %338 : vector<2x16x1xf32> to vector<2x16x128xf32>
    %340 = arith.mulf %335, %339 : vector<2x16x128xf32>
    %cst_52 = arith.constant dense<0.000000e+00> : vector<2x128xf32>
    %341 = vector.multi_reduction <add>, %340, %cst_52 [1] : vector<2x16x128xf32> to vector<2x128xf32>
    %342 = vector.shape_cast %132 : vector<2x128xf32> to vector<2x1x128xf32>
    %343 = vector.shape_cast %151 : vector<2x128xf32> to vector<2x1x128xf32>
    %344 = vector.shape_cast %170 : vector<2x128xf32> to vector<2x1x128xf32>
    %345 = vector.shape_cast %189 : vector<2x128xf32> to vector<2x1x128xf32>
    %346 = vector.shape_cast %208 : vector<2x128xf32> to vector<2x1x128xf32>
    %347 = vector.shape_cast %227 : vector<2x128xf32> to vector<2x1x128xf32>
    %348 = vector.shape_cast %246 : vector<2x128xf32> to vector<2x1x128xf32>
    %349 = vector.shape_cast %265 : vector<2x128xf32> to vector<2x1x128xf32>
    %350 = vector.shape_cast %284 : vector<2x128xf32> to vector<2x1x128xf32>
    %351 = vector.shape_cast %303 : vector<2x128xf32> to vector<2x1x128xf32>
    %352 = vector.shape_cast %322 : vector<2x128xf32> to vector<2x1x128xf32>
    %353 = vector.shape_cast %341 : vector<2x128xf32> to vector<2x1x128xf32>
    %354 = tpu.concatenate %342, %343, %344, %345, %346, %347, %348, %349, %350, %351, %352, %353 in 1 : vector<2x1x128xf32>, vector<2x1x128xf32>, vector<2x1x128xf32>, vector<2x1x128xf32>, vector<2x1x128xf32>, vector<2x1x128xf32>, vector<2x1x128xf32>, vector<2x1x128xf32>, vector<2x1x128xf32>, vector<2x1x128xf32>, vector<2x1x128xf32>, vector<2x1x128xf32> -> vector<2x12x128xf32>
    %355 = vector.extract_strided_slice %98 {offsets = [0, 0, 128], sizes = [2, 12, 128], strides = [1, 1, 1]} : vector<2x12x256xf32> to vector<2x12x128xf32>
    %356 = vector.shape_cast %355 : vector<2x12x128xf32> to vector<2x12x1x128xf32>
    %357 = vector.extract_strided_slice %103 {offsets = [0, 128], sizes = [16, 128], strides = [1, 1]} : vector<16x256xf32> to vector<16x128xf32>
    %358 = vector.shape_cast %357 : vector<16x128xf32> to vector<1x1x16x128xf32>
    %359 = vector.broadcast %356 : vector<2x12x1x128xf32> to vector<2x12x16x128xf32>
    %360 = vector.broadcast %358 : vector<1x1x16x128xf32> to vector<2x12x16x128xf32>
    %361 = arith.mulf %359, %360 : vector<2x12x16x128xf32>
    %362 = math.exp %361 : vector<2x12x16x128xf32>
    %363 = vector.extract_strided_slice %101 {offsets = [0, 0, 128], sizes = [2, 12, 128], strides = [1, 1, 1]} : vector<2x12x256xf32> to vector<2x12x128xf32>
    %cst_53 = arith.constant 0.000000e+00 : f32
    %364 = vector.broadcast %cst_53 : f32 to vector<2x16x128xf32>
    %365 = vector.extract_strided_slice %362 {offsets = [0, 0, 0, 0], sizes = [2, 1, 16, 128], strides = [1, 1, 1, 1]} : vector<2x12x16x128xf32> to vector<2x1x16x128xf32>
    %366 = vector.shape_cast %365 : vector<2x1x16x128xf32> to vector<2x16x128xf32>
    %367 = arith.mulf %366, %364 : vector<2x16x128xf32>
    %368 = vector.extract_strided_slice %363 {offsets = [0, 0, 0], sizes = [2, 1, 128], strides = [1, 1, 1]} : vector<2x12x128xf32> to vector<2x1x128xf32>
    %369 = vector.shape_cast %368 : vector<2x1x128xf32> to vector<2x128xf32>
    %370 = vector.shape_cast %369 : vector<2x128xf32> to vector<2x1x128xf32>
    %371 = vector.extract_strided_slice %99 {offsets = [0, 0, 0], sizes = [2, 1, 16], strides = [1, 1, 1]} : vector<2x12x16xf32> to vector<2x1x16xf32>
    %372 = vector.shape_cast %371 : vector<2x1x16xf32> to vector<2x16xf32>
    %373 = vector.shape_cast %372 : vector<2x16xf32> to vector<2x16x1xf32>
    %374 = vector.broadcast %370 : vector<2x1x128xf32> to vector<2x16x128xf32>
    %375 = vector.broadcast %373 : vector<2x16x1xf32> to vector<2x16x128xf32>
    %376 = arith.mulf %374, %375 : vector<2x16x128xf32>
    %377 = arith.addf %367, %376 : vector<2x16x128xf32>
    %378 = vector.extract_strided_slice %100 {offsets = [0, 0, 0], sizes = [2, 1, 16], strides = [1, 1, 1]} : vector<2x12x16xf32> to vector<2x1x16xf32>
    %379 = vector.shape_cast %378 : vector<2x1x16xf32> to vector<2x16xf32>
    %380 = vector.shape_cast %379 : vector<2x16xf32> to vector<2x16x1xf32>
    %381 = vector.broadcast %380 : vector<2x16x1xf32> to vector<2x16x128xf32>
    %382 = arith.mulf %377, %381 : vector<2x16x128xf32>
    %cst_54 = arith.constant dense<0.000000e+00> : vector<2x128xf32>
    %383 = vector.multi_reduction <add>, %382, %cst_54 [1] : vector<2x16x128xf32> to vector<2x128xf32>
    %384 = vector.extract_strided_slice %362 {offsets = [0, 1, 0, 0], sizes = [2, 1, 16, 128], strides = [1, 1, 1, 1]} : vector<2x12x16x128xf32> to vector<2x1x16x128xf32>
    %385 = vector.shape_cast %384 : vector<2x1x16x128xf32> to vector<2x16x128xf32>
    %386 = arith.mulf %385, %377 : vector<2x16x128xf32>
    %387 = vector.extract_strided_slice %363 {offsets = [0, 1, 0], sizes = [2, 1, 128], strides = [1, 1, 1]} : vector<2x12x128xf32> to vector<2x1x128xf32>
    %388 = vector.shape_cast %387 : vector<2x1x128xf32> to vector<2x128xf32>
    %389 = vector.shape_cast %388 : vector<2x128xf32> to vector<2x1x128xf32>
    %390 = vector.extract_strided_slice %99 {offsets = [0, 1, 0], sizes = [2, 1, 16], strides = [1, 1, 1]} : vector<2x12x16xf32> to vector<2x1x16xf32>
    %391 = vector.shape_cast %390 : vector<2x1x16xf32> to vector<2x16xf32>
    %392 = vector.shape_cast %391 : vector<2x16xf32> to vector<2x16x1xf32>
    %393 = vector.broadcast %389 : vector<2x1x128xf32> to vector<2x16x128xf32>
    %394 = vector.broadcast %392 : vector<2x16x1xf32> to vector<2x16x128xf32>
    %395 = arith.mulf %393, %394 : vector<2x16x128xf32>
    %396 = arith.addf %386, %395 : vector<2x16x128xf32>
    %397 = vector.extract_strided_slice %100 {offsets = [0, 1, 0], sizes = [2, 1, 16], strides = [1, 1, 1]} : vector<2x12x16xf32> to vector<2x1x16xf32>
    %398 = vector.shape_cast %397 : vector<2x1x16xf32> to vector<2x16xf32>
    %399 = vector.shape_cast %398 : vector<2x16xf32> to vector<2x16x1xf32>
    %400 = vector.broadcast %399 : vector<2x16x1xf32> to vector<2x16x128xf32>
    %401 = arith.mulf %396, %400 : vector<2x16x128xf32>
    %cst_55 = arith.constant dense<0.000000e+00> : vector<2x128xf32>
    %402 = vector.multi_reduction <add>, %401, %cst_55 [1] : vector<2x16x128xf32> to vector<2x128xf32>
    %403 = vector.extract_strided_slice %362 {offsets = [0, 2, 0, 0], sizes = [2, 1, 16, 128], strides = [1, 1, 1, 1]} : vector<2x12x16x128xf32> to vector<2x1x16x128xf32>
    %404 = vector.shape_cast %403 : vector<2x1x16x128xf32> to vector<2x16x128xf32>
    %405 = arith.mulf %404, %396 : vector<2x16x128xf32>
    %406 = vector.extract_strided_slice %363 {offsets = [0, 2, 0], sizes = [2, 1, 128], strides = [1, 1, 1]} : vector<2x12x128xf32> to vector<2x1x128xf32>
    %407 = vector.shape_cast %406 : vector<2x1x128xf32> to vector<2x128xf32>
    %408 = vector.shape_cast %407 : vector<2x128xf32> to vector<2x1x128xf32>
    %409 = vector.extract_strided_slice %99 {offsets = [0, 2, 0], sizes = [2, 1, 16], strides = [1, 1, 1]} : vector<2x12x16xf32> to vector<2x1x16xf32>
    %410 = vector.shape_cast %409 : vector<2x1x16xf32> to vector<2x16xf32>
    %411 = vector.shape_cast %410 : vector<2x16xf32> to vector<2x16x1xf32>
    %412 = vector.broadcast %408 : vector<2x1x128xf32> to vector<2x16x128xf32>
    %413 = vector.broadcast %411 : vector<2x16x1xf32> to vector<2x16x128xf32>
    %414 = arith.mulf %412, %413 : vector<2x16x128xf32>
    %415 = arith.addf %405, %414 : vector<2x16x128xf32>
    %416 = vector.extract_strided_slice %100 {offsets = [0, 2, 0], sizes = [2, 1, 16], strides = [1, 1, 1]} : vector<2x12x16xf32> to vector<2x1x16xf32>
    %417 = vector.shape_cast %416 : vector<2x1x16xf32> to vector<2x16xf32>
    %418 = vector.shape_cast %417 : vector<2x16xf32> to vector<2x16x1xf32>
    %419 = vector.broadcast %418 : vector<2x16x1xf32> to vector<2x16x128xf32>
    %420 = arith.mulf %415, %419 : vector<2x16x128xf32>
    %cst_56 = arith.constant dense<0.000000e+00> : vector<2x128xf32>
    %421 = vector.multi_reduction <add>, %420, %cst_56 [1] : vector<2x16x128xf32> to vector<2x128xf32>
    %422 = vector.extract_strided_slice %362 {offsets = [0, 3, 0, 0], sizes = [2, 1, 16, 128], strides = [1, 1, 1, 1]} : vector<2x12x16x128xf32> to vector<2x1x16x128xf32>
    %423 = vector.shape_cast %422 : vector<2x1x16x128xf32> to vector<2x16x128xf32>
    %424 = arith.mulf %423, %415 : vector<2x16x128xf32>
    %425 = vector.extract_strided_slice %363 {offsets = [0, 3, 0], sizes = [2, 1, 128], strides = [1, 1, 1]} : vector<2x12x128xf32> to vector<2x1x128xf32>
    %426 = vector.shape_cast %425 : vector<2x1x128xf32> to vector<2x128xf32>
    %427 = vector.shape_cast %426 : vector<2x128xf32> to vector<2x1x128xf32>
    %428 = vector.extract_strided_slice %99 {offsets = [0, 3, 0], sizes = [2, 1, 16], strides = [1, 1, 1]} : vector<2x12x16xf32> to vector<2x1x16xf32>
    %429 = vector.shape_cast %428 : vector<2x1x16xf32> to vector<2x16xf32>
    %430 = vector.shape_cast %429 : vector<2x16xf32> to vector<2x16x1xf32>
    %431 = vector.broadcast %427 : vector<2x1x128xf32> to vector<2x16x128xf32>
    %432 = vector.broadcast %430 : vector<2x16x1xf32> to vector<2x16x128xf32>
    %433 = arith.mulf %431, %432 : vector<2x16x128xf32>
    %434 = arith.addf %424, %433 : vector<2x16x128xf32>
    %435 = vector.extract_strided_slice %100 {offsets = [0, 3, 0], sizes = [2, 1, 16], strides = [1, 1, 1]} : vector<2x12x16xf32> to vector<2x1x16xf32>
    %436 = vector.shape_cast %435 : vector<2x1x16xf32> to vector<2x16xf32>
    %437 = vector.shape_cast %436 : vector<2x16xf32> to vector<2x16x1xf32>
    %438 = vector.broadcast %437 : vector<2x16x1xf32> to vector<2x16x128xf32>
    %439 = arith.mulf %434, %438 : vector<2x16x128xf32>
    %cst_57 = arith.constant dense<0.000000e+00> : vector<2x128xf32>
    %440 = vector.multi_reduction <add>, %439, %cst_57 [1] : vector<2x16x128xf32> to vector<2x128xf32>
    %441 = vector.extract_strided_slice %362 {offsets = [0, 4, 0, 0], sizes = [2, 1, 16, 128], strides = [1, 1, 1, 1]} : vector<2x12x16x128xf32> to vector<2x1x16x128xf32>
    %442 = vector.shape_cast %441 : vector<2x1x16x128xf32> to vector<2x16x128xf32>
    %443 = arith.mulf %442, %434 : vector<2x16x128xf32>
    %444 = vector.extract_strided_slice %363 {offsets = [0, 4, 0], sizes = [2, 1, 128], strides = [1, 1, 1]} : vector<2x12x128xf32> to vector<2x1x128xf32>
    %445 = vector.shape_cast %444 : vector<2x1x128xf32> to vector<2x128xf32>
    %446 = vector.shape_cast %445 : vector<2x128xf32> to vector<2x1x128xf32>
    %447 = vector.extract_strided_slice %99 {offsets = [0, 4, 0], sizes = [2, 1, 16], strides = [1, 1, 1]} : vector<2x12x16xf32> to vector<2x1x16xf32>
    %448 = vector.shape_cast %447 : vector<2x1x16xf32> to vector<2x16xf32>
    %449 = vector.shape_cast %448 : vector<2x16xf32> to vector<2x16x1xf32>
    %450 = vector.broadcast %446 : vector<2x1x128xf32> to vector<2x16x128xf32>
    %451 = vector.broadcast %449 : vector<2x16x1xf32> to vector<2x16x128xf32>
    %452 = arith.mulf %450, %451 : vector<2x16x128xf32>
    %453 = arith.addf %443, %452 : vector<2x16x128xf32>
    %454 = vector.extract_strided_slice %100 {offsets = [0, 4, 0], sizes = [2, 1, 16], strides = [1, 1, 1]} : vector<2x12x16xf32> to vector<2x1x16xf32>
    %455 = vector.shape_cast %454 : vector<2x1x16xf32> to vector<2x16xf32>
    %456 = vector.shape_cast %455 : vector<2x16xf32> to vector<2x16x1xf32>
    %457 = vector.broadcast %456 : vector<2x16x1xf32> to vector<2x16x128xf32>
    %458 = arith.mulf %453, %457 : vector<2x16x128xf32>
    %cst_58 = arith.constant dense<0.000000e+00> : vector<2x128xf32>
    %459 = vector.multi_reduction <add>, %458, %cst_58 [1] : vector<2x16x128xf32> to vector<2x128xf32>
    %460 = vector.extract_strided_slice %362 {offsets = [0, 5, 0, 0], sizes = [2, 1, 16, 128], strides = [1, 1, 1, 1]} : vector<2x12x16x128xf32> to vector<2x1x16x128xf32>
    %461 = vector.shape_cast %460 : vector<2x1x16x128xf32> to vector<2x16x128xf32>
    %462 = arith.mulf %461, %453 : vector<2x16x128xf32>
    %463 = vector.extract_strided_slice %363 {offsets = [0, 5, 0], sizes = [2, 1, 128], strides = [1, 1, 1]} : vector<2x12x128xf32> to vector<2x1x128xf32>
    %464 = vector.shape_cast %463 : vector<2x1x128xf32> to vector<2x128xf32>
    %465 = vector.shape_cast %464 : vector<2x128xf32> to vector<2x1x128xf32>
    %466 = vector.extract_strided_slice %99 {offsets = [0, 5, 0], sizes = [2, 1, 16], strides = [1, 1, 1]} : vector<2x12x16xf32> to vector<2x1x16xf32>
    %467 = vector.shape_cast %466 : vector<2x1x16xf32> to vector<2x16xf32>
    %468 = vector.shape_cast %467 : vector<2x16xf32> to vector<2x16x1xf32>
    %469 = vector.broadcast %465 : vector<2x1x128xf32> to vector<2x16x128xf32>
    %470 = vector.broadcast %468 : vector<2x16x1xf32> to vector<2x16x128xf32>
    %471 = arith.mulf %469, %470 : vector<2x16x128xf32>
    %472 = arith.addf %462, %471 : vector<2x16x128xf32>
    %473 = vector.extract_strided_slice %100 {offsets = [0, 5, 0], sizes = [2, 1, 16], strides = [1, 1, 1]} : vector<2x12x16xf32> to vector<2x1x16xf32>
    %474 = vector.shape_cast %473 : vector<2x1x16xf32> to vector<2x16xf32>
    %475 = vector.shape_cast %474 : vector<2x16xf32> to vector<2x16x1xf32>
    %476 = vector.broadcast %475 : vector<2x16x1xf32> to vector<2x16x128xf32>
    %477 = arith.mulf %472, %476 : vector<2x16x128xf32>
    %cst_59 = arith.constant dense<0.000000e+00> : vector<2x128xf32>
    %478 = vector.multi_reduction <add>, %477, %cst_59 [1] : vector<2x16x128xf32> to vector<2x128xf32>
    %479 = vector.extract_strided_slice %362 {offsets = [0, 6, 0, 0], sizes = [2, 1, 16, 128], strides = [1, 1, 1, 1]} : vector<2x12x16x128xf32> to vector<2x1x16x128xf32>
    %480 = vector.shape_cast %479 : vector<2x1x16x128xf32> to vector<2x16x128xf32>
    %481 = arith.mulf %480, %472 : vector<2x16x128xf32>
    %482 = vector.extract_strided_slice %363 {offsets = [0, 6, 0], sizes = [2, 1, 128], strides = [1, 1, 1]} : vector<2x12x128xf32> to vector<2x1x128xf32>
    %483 = vector.shape_cast %482 : vector<2x1x128xf32> to vector<2x128xf32>
    %484 = vector.shape_cast %483 : vector<2x128xf32> to vector<2x1x128xf32>
    %485 = vector.extract_strided_slice %99 {offsets = [0, 6, 0], sizes = [2, 1, 16], strides = [1, 1, 1]} : vector<2x12x16xf32> to vector<2x1x16xf32>
    %486 = vector.shape_cast %485 : vector<2x1x16xf32> to vector<2x16xf32>
    %487 = vector.shape_cast %486 : vector<2x16xf32> to vector<2x16x1xf32>
    %488 = vector.broadcast %484 : vector<2x1x128xf32> to vector<2x16x128xf32>
    %489 = vector.broadcast %487 : vector<2x16x1xf32> to vector<2x16x128xf32>
    %490 = arith.mulf %488, %489 : vector<2x16x128xf32>
    %491 = arith.addf %481, %490 : vector<2x16x128xf32>
    %492 = vector.extract_strided_slice %100 {offsets = [0, 6, 0], sizes = [2, 1, 16], strides = [1, 1, 1]} : vector<2x12x16xf32> to vector<2x1x16xf32>
    %493 = vector.shape_cast %492 : vector<2x1x16xf32> to vector<2x16xf32>
    %494 = vector.shape_cast %493 : vector<2x16xf32> to vector<2x16x1xf32>
    %495 = vector.broadcast %494 : vector<2x16x1xf32> to vector<2x16x128xf32>
    %496 = arith.mulf %491, %495 : vector<2x16x128xf32>
    %cst_60 = arith.constant dense<0.000000e+00> : vector<2x128xf32>
    %497 = vector.multi_reduction <add>, %496, %cst_60 [1] : vector<2x16x128xf32> to vector<2x128xf32>
    %498 = vector.extract_strided_slice %362 {offsets = [0, 7, 0, 0], sizes = [2, 1, 16, 128], strides = [1, 1, 1, 1]} : vector<2x12x16x128xf32> to vector<2x1x16x128xf32>
    %499 = vector.shape_cast %498 : vector<2x1x16x128xf32> to vector<2x16x128xf32>
    %500 = arith.mulf %499, %491 : vector<2x16x128xf32>
    %501 = vector.extract_strided_slice %363 {offsets = [0, 7, 0], sizes = [2, 1, 128], strides = [1, 1, 1]} : vector<2x12x128xf32> to vector<2x1x128xf32>
    %502 = vector.shape_cast %501 : vector<2x1x128xf32> to vector<2x128xf32>
    %503 = vector.shape_cast %502 : vector<2x128xf32> to vector<2x1x128xf32>
    %504 = vector.extract_strided_slice %99 {offsets = [0, 7, 0], sizes = [2, 1, 16], strides = [1, 1, 1]} : vector<2x12x16xf32> to vector<2x1x16xf32>
    %505 = vector.shape_cast %504 : vector<2x1x16xf32> to vector<2x16xf32>
    %506 = vector.shape_cast %505 : vector<2x16xf32> to vector<2x16x1xf32>
    %507 = vector.broadcast %503 : vector<2x1x128xf32> to vector<2x16x128xf32>
    %508 = vector.broadcast %506 : vector<2x16x1xf32> to vector<2x16x128xf32>
    %509 = arith.mulf %507, %508 : vector<2x16x128xf32>
    %510 = arith.addf %500, %509 : vector<2x16x128xf32>
    %511 = vector.extract_strided_slice %100 {offsets = [0, 7, 0], sizes = [2, 1, 16], strides = [1, 1, 1]} : vector<2x12x16xf32> to vector<2x1x16xf32>
    %512 = vector.shape_cast %511 : vector<2x1x16xf32> to vector<2x16xf32>
    %513 = vector.shape_cast %512 : vector<2x16xf32> to vector<2x16x1xf32>
    %514 = vector.broadcast %513 : vector<2x16x1xf32> to vector<2x16x128xf32>
    %515 = arith.mulf %510, %514 : vector<2x16x128xf32>
    %cst_61 = arith.constant dense<0.000000e+00> : vector<2x128xf32>
    %516 = vector.multi_reduction <add>, %515, %cst_61 [1] : vector<2x16x128xf32> to vector<2x128xf32>
    %517 = vector.extract_strided_slice %362 {offsets = [0, 8, 0, 0], sizes = [2, 1, 16, 128], strides = [1, 1, 1, 1]} : vector<2x12x16x128xf32> to vector<2x1x16x128xf32>
    %518 = vector.shape_cast %517 : vector<2x1x16x128xf32> to vector<2x16x128xf32>
    %519 = arith.mulf %518, %510 : vector<2x16x128xf32>
    %520 = vector.extract_strided_slice %363 {offsets = [0, 8, 0], sizes = [2, 1, 128], strides = [1, 1, 1]} : vector<2x12x128xf32> to vector<2x1x128xf32>
    %521 = vector.shape_cast %520 : vector<2x1x128xf32> to vector<2x128xf32>
    %522 = vector.shape_cast %521 : vector<2x128xf32> to vector<2x1x128xf32>
    %523 = vector.extract_strided_slice %99 {offsets = [0, 8, 0], sizes = [2, 1, 16], strides = [1, 1, 1]} : vector<2x12x16xf32> to vector<2x1x16xf32>
    %524 = vector.shape_cast %523 : vector<2x1x16xf32> to vector<2x16xf32>
    %525 = vector.shape_cast %524 : vector<2x16xf32> to vector<2x16x1xf32>
    %526 = vector.broadcast %522 : vector<2x1x128xf32> to vector<2x16x128xf32>
    %527 = vector.broadcast %525 : vector<2x16x1xf32> to vector<2x16x128xf32>
    %528 = arith.mulf %526, %527 : vector<2x16x128xf32>
    %529 = arith.addf %519, %528 : vector<2x16x128xf32>
    %530 = vector.extract_strided_slice %100 {offsets = [0, 8, 0], sizes = [2, 1, 16], strides = [1, 1, 1]} : vector<2x12x16xf32> to vector<2x1x16xf32>
    %531 = vector.shape_cast %530 : vector<2x1x16xf32> to vector<2x16xf32>
    %532 = vector.shape_cast %531 : vector<2x16xf32> to vector<2x16x1xf32>
    %533 = vector.broadcast %532 : vector<2x16x1xf32> to vector<2x16x128xf32>
    %534 = arith.mulf %529, %533 : vector<2x16x128xf32>
    %cst_62 = arith.constant dense<0.000000e+00> : vector<2x128xf32>
    %535 = vector.multi_reduction <add>, %534, %cst_62 [1] : vector<2x16x128xf32> to vector<2x128xf32>
    %536 = vector.extract_strided_slice %362 {offsets = [0, 9, 0, 0], sizes = [2, 1, 16, 128], strides = [1, 1, 1, 1]} : vector<2x12x16x128xf32> to vector<2x1x16x128xf32>
    %537 = vector.shape_cast %536 : vector<2x1x16x128xf32> to vector<2x16x128xf32>
    %538 = arith.mulf %537, %529 : vector<2x16x128xf32>
    %539 = vector.extract_strided_slice %363 {offsets = [0, 9, 0], sizes = [2, 1, 128], strides = [1, 1, 1]} : vector<2x12x128xf32> to vector<2x1x128xf32>
    %540 = vector.shape_cast %539 : vector<2x1x128xf32> to vector<2x128xf32>
    %541 = vector.shape_cast %540 : vector<2x128xf32> to vector<2x1x128xf32>
    %542 = vector.extract_strided_slice %99 {offsets = [0, 9, 0], sizes = [2, 1, 16], strides = [1, 1, 1]} : vector<2x12x16xf32> to vector<2x1x16xf32>
    %543 = vector.shape_cast %542 : vector<2x1x16xf32> to vector<2x16xf32>
    %544 = vector.shape_cast %543 : vector<2x16xf32> to vector<2x16x1xf32>
    %545 = vector.broadcast %541 : vector<2x1x128xf32> to vector<2x16x128xf32>
    %546 = vector.broadcast %544 : vector<2x16x1xf32> to vector<2x16x128xf32>
    %547 = arith.mulf %545, %546 : vector<2x16x128xf32>
    %548 = arith.addf %538, %547 : vector<2x16x128xf32>
    %549 = vector.extract_strided_slice %100 {offsets = [0, 9, 0], sizes = [2, 1, 16], strides = [1, 1, 1]} : vector<2x12x16xf32> to vector<2x1x16xf32>
    %550 = vector.shape_cast %549 : vector<2x1x16xf32> to vector<2x16xf32>
    %551 = vector.shape_cast %550 : vector<2x16xf32> to vector<2x16x1xf32>
    %552 = vector.broadcast %551 : vector<2x16x1xf32> to vector<2x16x128xf32>
    %553 = arith.mulf %548, %552 : vector<2x16x128xf32>
    %cst_63 = arith.constant dense<0.000000e+00> : vector<2x128xf32>
    %554 = vector.multi_reduction <add>, %553, %cst_63 [1] : vector<2x16x128xf32> to vector<2x128xf32>
    %555 = vector.extract_strided_slice %362 {offsets = [0, 10, 0, 0], sizes = [2, 1, 16, 128], strides = [1, 1, 1, 1]} : vector<2x12x16x128xf32> to vector<2x1x16x128xf32>
    %556 = vector.shape_cast %555 : vector<2x1x16x128xf32> to vector<2x16x128xf32>
    %557 = arith.mulf %556, %548 : vector<2x16x128xf32>
    %558 = vector.extract_strided_slice %363 {offsets = [0, 10, 0], sizes = [2, 1, 128], strides = [1, 1, 1]} : vector<2x12x128xf32> to vector<2x1x128xf32>
    %559 = vector.shape_cast %558 : vector<2x1x128xf32> to vector<2x128xf32>
    %560 = vector.shape_cast %559 : vector<2x128xf32> to vector<2x1x128xf32>
    %561 = vector.extract_strided_slice %99 {offsets = [0, 10, 0], sizes = [2, 1, 16], strides = [1, 1, 1]} : vector<2x12x16xf32> to vector<2x1x16xf32>
    %562 = vector.shape_cast %561 : vector<2x1x16xf32> to vector<2x16xf32>
    %563 = vector.shape_cast %562 : vector<2x16xf32> to vector<2x16x1xf32>
    %564 = vector.broadcast %560 : vector<2x1x128xf32> to vector<2x16x128xf32>
    %565 = vector.broadcast %563 : vector<2x16x1xf32> to vector<2x16x128xf32>
    %566 = arith.mulf %564, %565 : vector<2x16x128xf32>
    %567 = arith.addf %557, %566 : vector<2x16x128xf32>
    %568 = vector.extract_strided_slice %100 {offsets = [0, 10, 0], sizes = [2, 1, 16], strides = [1, 1, 1]} : vector<2x12x16xf32> to vector<2x1x16xf32>
    %569 = vector.shape_cast %568 : vector<2x1x16xf32> to vector<2x16xf32>
    %570 = vector.shape_cast %569 : vector<2x16xf32> to vector<2x16x1xf32>
    %571 = vector.broadcast %570 : vector<2x16x1xf32> to vector<2x16x128xf32>
    %572 = arith.mulf %567, %571 : vector<2x16x128xf32>
    %cst_64 = arith.constant dense<0.000000e+00> : vector<2x128xf32>
    %573 = vector.multi_reduction <add>, %572, %cst_64 [1] : vector<2x16x128xf32> to vector<2x128xf32>
    %574 = vector.extract_strided_slice %362 {offsets = [0, 11, 0, 0], sizes = [2, 1, 16, 128], strides = [1, 1, 1, 1]} : vector<2x12x16x128xf32> to vector<2x1x16x128xf32>
    %575 = vector.shape_cast %574 : vector<2x1x16x128xf32> to vector<2x16x128xf32>
    %576 = arith.mulf %575, %567 : vector<2x16x128xf32>
    %577 = vector.extract_strided_slice %363 {offsets = [0, 11, 0], sizes = [2, 1, 128], strides = [1, 1, 1]} : vector<2x12x128xf32> to vector<2x1x128xf32>
    %578 = vector.shape_cast %577 : vector<2x1x128xf32> to vector<2x128xf32>
    %579 = vector.shape_cast %578 : vector<2x128xf32> to vector<2x1x128xf32>
    %580 = vector.extract_strided_slice %99 {offsets = [0, 11, 0], sizes = [2, 1, 16], strides = [1, 1, 1]} : vector<2x12x16xf32> to vector<2x1x16xf32>
    %581 = vector.shape_cast %580 : vector<2x1x16xf32> to vector<2x16xf32>
    %582 = vector.shape_cast %581 : vector<2x16xf32> to vector<2x16x1xf32>
    %583 = vector.broadcast %579 : vector<2x1x128xf32> to vector<2x16x128xf32>
    %584 = vector.broadcast %582 : vector<2x16x1xf32> to vector<2x16x128xf32>
    %585 = arith.mulf %583, %584 : vector<2x16x128xf32>
    %586 = arith.addf %576, %585 : vector<2x16x128xf32>
    %587 = vector.extract_strided_slice %100 {offsets = [0, 11, 0], sizes = [2, 1, 16], strides = [1, 1, 1]} : vector<2x12x16xf32> to vector<2x1x16xf32>
    %588 = vector.shape_cast %587 : vector<2x1x16xf32> to vector<2x16xf32>
    %589 = vector.shape_cast %588 : vector<2x16xf32> to vector<2x16x1xf32>
    %590 = vector.broadcast %589 : vector<2x16x1xf32> to vector<2x16x128xf32>
    %591 = arith.mulf %586, %590 : vector<2x16x128xf32>
    %cst_65 = arith.constant dense<0.000000e+00> : vector<2x128xf32>
    %592 = vector.multi_reduction <add>, %591, %cst_65 [1] : vector<2x16x128xf32> to vector<2x128xf32>
    %593 = vector.shape_cast %383 : vector<2x128xf32> to vector<2x1x128xf32>
    %594 = vector.shape_cast %402 : vector<2x128xf32> to vector<2x1x128xf32>
    %595 = vector.shape_cast %421 : vector<2x128xf32> to vector<2x1x128xf32>
    %596 = vector.shape_cast %440 : vector<2x128xf32> to vector<2x1x128xf32>
    %597 = vector.shape_cast %459 : vector<2x128xf32> to vector<2x1x128xf32>
    %598 = vector.shape_cast %478 : vector<2x128xf32> to vector<2x1x128xf32>
    %599 = vector.shape_cast %497 : vector<2x128xf32> to vector<2x1x128xf32>
    %600 = vector.shape_cast %516 : vector<2x128xf32> to vector<2x1x128xf32>
    %601 = vector.shape_cast %535 : vector<2x128xf32> to vector<2x1x128xf32>
    %602 = vector.shape_cast %554 : vector<2x128xf32> to vector<2x1x128xf32>
    %603 = vector.shape_cast %573 : vector<2x128xf32> to vector<2x1x128xf32>
    %604 = vector.shape_cast %592 : vector<2x128xf32> to vector<2x1x128xf32>
    %605 = tpu.concatenate %593, %594, %595, %596, %597, %598, %599, %600, %601, %602, %603, %604 in 1 : vector<2x1x128xf32>, vector<2x1x128xf32>, vector<2x1x128xf32>, vector<2x1x128xf32>, vector<2x1x128xf32>, vector<2x1x128xf32>, vector<2x1x128xf32>, vector<2x1x128xf32>, vector<2x1x128xf32>, vector<2x1x128xf32>, vector<2x1x128xf32>, vector<2x1x128xf32> -> vector<2x12x128xf32>
    %606 = tpu.concatenate %354, %605 in 2 : vector<2x12x128xf32>, vector<2x12x128xf32> -> vector<2x12x256xf32>
    %c0_66 = arith.constant 0 : index
    %c0_67 = arith.constant 0 : index
    %c0_68 = arith.constant 0 : index
    %607 = vector.load %arg13[%c0_66, %c0_67, %c0_68] : memref<1x1x256xf32, #tpu.memory_space<vmem>>, vector<1x1x256xf32>
    %608 = vector.shape_cast %607 : vector<1x1x256xf32> to vector<1x256xf32>
    %609 = vector.shape_cast %608 : vector<1x256xf32> to vector<1x1x256xf32>
    %610 = vector.broadcast %609 : vector<1x1x256xf32> to vector<2x12x256xf32>
    %611 = arith.mulf %70, %610 : vector<2x12x256xf32>
    %612 = arith.addf %606, %611 : vector<2x12x256xf32>
    %613 = arith.negf %34 : vector<2x12x256xf32>
    %614 = math.exp %613 : vector<2x12x256xf32>
    %cst_69 = arith.constant 1.000000e+00 : f32
    %615 = vector.broadcast %cst_69 : f32 to vector<2x12x256xf32>
    %616 = arith.addf %615, %614 : vector<2x12x256xf32>
    %617 = arith.divf %615, %616 : vector<2x12x256xf32>
    %618 = arith.mulf %34, %617 : vector<2x12x256xf32>
    %619 = arith.mulf %612, %618 : vector<2x12x256xf32>
    %620 = tpu.concatenate %25, %619, %26 in 1 : vector<2x3x256xf32>, vector<2x12x256xf32>, vector<2x1x256xf32> -> vector<2x16x256xf32>
    %621 = vector.shape_cast %620 : vector<2x16x256xf32> to vector<32x256xf32>
    %622 = arith.truncf %621 : vector<32x256xf32> to vector<32x256xbf16>
    %c0_70 = arith.constant 0 : index
    %c0_71 = arith.constant 0 : index
    %c0_72 = arith.constant 0 : index
    %623 = vector.load %arg14[%c0_70, %c0_71, %c0_72] : memref<1x256x128xbf16, #tpu.memory_space<vmem>>, vector<1x256x128xbf16>
    %624 = vector.shape_cast %623 : vector<1x256x128xbf16> to vector<256x128xbf16>
    %cst_73 = arith.constant dense<0.000000e+00> : vector<32x128xf32>
    %625 = tpu.matmul %622, %624, %cst_73 {dimension_numbers = #tpu.dot_dimension_numbers<[1], [0], [0], [1], [0, 0, 1, 1], [], []>} : vector<32x256xbf16>, vector<256x128xbf16>, vector<32x128xf32> -> vector<32x128xf32>
    %626 = vector.shape_cast %625 : vector<32x128xf32> to vector<2x16x128xf32>
    %cst_74 = arith.constant dense<0.000000e+00> : vector<2x16xf32>
    %627 = vector.multi_reduction <add>, %626, %cst_74 [2] : vector<2x16x128xf32> to vector<2x16xf32>
    %628 = vector.shape_cast %627 : vector<2x16xf32> to vector<2x16x1xf32>
    %cst_75 = arith.constant 1.280000e+02 : f32
    %629 = vector.broadcast %cst_75 : f32 to vector<2x16x1xf32>
    %630 = arith.divf %628, %629 : vector<2x16x1xf32>
    %631 = vector.broadcast %630 : vector<2x16x1xf32> to vector<2x16x128xf32>
    %632 = arith.subf %626, %631 : vector<2x16x128xf32>
    %633 = arith.mulf %632, %632 : vector<2x16x128xf32>
    %cst_76 = arith.constant dense<0.000000e+00> : vector<2x16xf32>
    %634 = vector.multi_reduction <add>, %633, %cst_76 [2] : vector<2x16x128xf32> to vector<2x16xf32>
    %635 = vector.shape_cast %634 : vector<2x16xf32> to vector<2x16x1xf32>
    %cst_77 = arith.constant 1.280000e+02 : f32
    %636 = vector.broadcast %cst_77 : f32 to vector<2x16x1xf32>
    %637 = arith.divf %635, %636 : vector<2x16x1xf32>
    %cst_78 = arith.constant 9.99999974E-6 : f32
    %638 = vector.broadcast %cst_78 : f32 to vector<2x16x1xf32>
    %639 = arith.addf %637, %638 : vector<2x16x1xf32>
    %640 = math.rsqrt %639 : vector<2x16x1xf32>
    %641 = vector.broadcast %640 : vector<2x16x1xf32> to vector<2x16x128xf32>
    %642 = arith.mulf %632, %641 : vector<2x16x128xf32>
    %c0_79 = arith.constant 0 : index
    %c0_80 = arith.constant 0 : index
    %643 = vector.load %arg15[%c0_79, %c0_80] : memref<1x128xf32, #tpu.memory_space<vmem>>, vector<1x128xf32>
    %644 = vector.shape_cast %643 : vector<1x128xf32> to vector<1x1x128xf32>
    %645 = vector.broadcast %644 : vector<1x1x128xf32> to vector<2x16x128xf32>
    %646 = arith.mulf %642, %645 : vector<2x16x128xf32>
    %c0_81 = arith.constant 0 : index
    %c0_82 = arith.constant 0 : index
    %647 = vector.load %arg16[%c0_81, %c0_82] : memref<1x128xf32, #tpu.memory_space<vmem>>, vector<1x128xf32>
    %648 = vector.shape_cast %647 : vector<1x128xf32> to vector<1x1x128xf32>
    %649 = vector.broadcast %648 : vector<1x1x128xf32> to vector<2x16x128xf32>
    %650 = arith.addf %646, %649 : vector<2x16x128xf32>
    %c0_83 = arith.constant 0 : index
    %c0_84 = arith.constant 0 : index
    %c0_85 = arith.constant 0 : index
    %651 = vector.load %arg17[%c0_83, %c0_84, %c0_85] : memref<2x16x128xf32, #tpu.memory_space<vmem>>, vector<2x16x128xf32>
    tpu.vector_store %arg17[%c0_83, %c0_84, %c0_85], %650 {strides = array<i32>} : memref<2x16x128xf32, #tpu.memory_space<vmem>>, vector<2x16x128xf32>,
    return
  }
  func.func @transform_0(%arg0: i32) -> (i32, i32, i32) {
    %c0_i32 = arith.constant 0 : i32
    %c0_i32_0 = arith.constant 0 : i32
    %c0_i32_1 = arith.constant 0 : i32
    return %arg0, %c0_i32, %c0_i32_0 : i32, i32, i32
  }
  func.func @transform_1(%arg0: i32) -> (i32, i32, i32) {
    %c0_i32 = arith.constant 0 : i32
    %c0_i32_0 = arith.constant 0 : i32
    %c0_i32_1 = arith.constant 0 : i32
    return %arg0, %c0_i32, %c0_i32_0 : i32, i32, i32
  }
  func.func @transform_2(%arg0: i32) -> (i32, i32, i32) {
    %c0_i32 = arith.constant 0 : i32
    %c0_i32_0 = arith.constant 0 : i32
    %c0_i32_1 = arith.constant 0 : i32
    return %arg0, %c0_i32, %c0_i32_0 : i32, i32, i32
  }
  func.func @transform_3(%arg0: i32) -> (i32, i32) {
    %c0_i32 = arith.constant 0 : i32
    %c0_i32_0 = arith.constant 0 : i32
    %c0_i32_1 = arith.constant 0 : i32
    return %c0_i32, %c0_i32_0 : i32, i32
  }
  func.func @transform_4(%arg0: i32) -> (i32, i32) {
    %c0_i32 = arith.constant 0 : i32
    %c0_i32_0 = arith.constant 0 : i32
    %c0_i32_1 = arith.constant 0 : i32
    return %c0_i32, %c0_i32_0 : i32, i32
  }
  func.func @transform_5(%arg0: i32) -> (i32, i32) {
    %c0_i32 = arith.constant 0 : i32
    %c0_i32_0 = arith.constant 0 : i32
    %c0_i32_1 = arith.constant 0 : i32
    return %c0_i32, %c0_i32_0 : i32, i32
  }
  func.func @transform_6(%arg0: i32) -> (i32, i32, i32) {
    %c0_i32 = arith.constant 0 : i32
    %c0_i32_0 = arith.constant 0 : i32
    %c0_i32_1 = arith.constant 0 : i32
    %c0_i32_2 = arith.constant 0 : i32
    return %c0_i32, %c0_i32_0, %c0_i32_1 : i32, i32, i32
  }
  func.func @transform_7(%arg0: i32) -> (i32, i32, i32) {
    %c0_i32 = arith.constant 0 : i32
    %c0_i32_0 = arith.constant 0 : i32
    %c0_i32_1 = arith.constant 0 : i32
    %c0_i32_2 = arith.constant 0 : i32
    return %c0_i32, %c0_i32_0, %c0_i32_1 : i32, i32, i32
  }
  func.func @transform_8(%arg0: i32) -> (i32, i32, i32) {
    %c0_i32 = arith.constant 0 : i32
    %c0_i32_0 = arith.constant 0 : i32
    %c0_i32_1 = arith.constant 0 : i32
    %c0_i32_2 = arith.constant 0 : i32
    return %c0_i32, %c0_i32_0, %c0_i32_1 : i32, i32, i32
  }
  func.func @transform_9(%arg0: i32) -> (i32, i32, i32) {
    %c0_i32 = arith.constant 0 : i32
    %c0_i32_0 = arith.constant 0 : i32
    %c0_i32_1 = arith.constant 0 : i32
    %c0_i32_2 = arith.constant 0 : i32
    return %c0_i32, %c0_i32_0, %c0_i32_1 : i32, i32, i32
  }
  func.func @transform_10(%arg0: i32) -> (i32, i32, i32) {
    %c0_i32 = arith.constant 0 : i32
    %c0_i32_0 = arith.constant 0 : i32
    %c0_i32_1 = arith.constant 0 : i32
    %c0_i32_2 = arith.constant 0 : i32
    return %c0_i32, %c0_i32_0, %c0_i32_1 : i32, i32, i32
  }
  func.func @transform_11(%arg0: i32) -> (i32, i32, i32) {
    %c0_i32 = arith.constant 0 : i32
    %c0_i32_0 = arith.constant 0 : i32
    %c0_i32_1 = arith.constant 0 : i32
    %c0_i32_2 = arith.constant 0 : i32
    return %c0_i32, %c0_i32_0, %c0_i32_1 : i32, i32, i32
  }
  func.func @transform_12(%arg0: i32) -> (i32, i32, i32) {
    %c0_i32 = arith.constant 0 : i32
    %c0_i32_0 = arith.constant 0 : i32
    %c0_i32_1 = arith.constant 0 : i32
    %c0_i32_2 = arith.constant 0 : i32
    return %c0_i32, %c0_i32_0, %c0_i32_1 : i32, i32, i32
  }
  func.func @transform_13(%arg0: i32) -> (i32, i32, i32) {
    %c0_i32 = arith.constant 0 : i32
    %c0_i32_0 = arith.constant 0 : i32
    %c0_i32_1 = arith.constant 0 : i32
    %c0_i32_2 = arith.constant 0 : i32
    return %c0_i32, %c0_i32_0, %c0_i32_1 : i32, i32, i32
  }
  func.func @transform_14(%arg0: i32) -> (i32, i32) {
    %c0_i32 = arith.constant 0 : i32
    %c0_i32_0 = arith.constant 0 : i32
    %c0_i32_1 = arith.constant 0 : i32
    return %c0_i32, %c0_i32_0 : i32, i32
  }
  func.func @transform_15(%arg0: i32) -> (i32, i32) {
    %c0_i32 = arith.constant 0 : i32
    %c0_i32_0 = arith.constant 0 : i32
    %c0_i32_1 = arith.constant 0 : i32
    return %c0_i32, %c0_i32_0 : i32, i32
  }
  func.func @transform_16(%arg0: i32) -> (i32, i32, i32) {
    %c0_i32 = arith.constant 0 : i32
    %c0_i32_0 = arith.constant 0 : i32
    %c0_i32_1 = arith.constant 0 : i32
    return %arg0, %c0_i32, %c0_i32_0 : i32, i32, i32
  }
}

</mosaic_0001>

<llo_original>
// kernel: adt_encoder_forward.3
$region0: #{adt_encoder_forward.3}
  #allocation0 [shape = 'u32[]', space=smem, size = 0x4, offset = 0x4, fixed_abs, tag = 'smem constant byte address 0x4 - core index']
  #allocation1 [shape = 'u32[72,128]{1,0:T(1,128)}', space=vmem, size = 0x9000, scoped, tag = 'internal scratch']
  %s0 = inlined_call_operand.vmem [shape: f32[4,1,14], index: 0, kind: input, shape index: {}]
  %s1 = inlined_call_operand.vmem [shape: f32[4,16,14], index: 1, kind: input, shape index: {}]
  %s2 = inlined_call_operand.vmem [shape: f32[4,16,128], index: 2, kind: input, shape index: {}]
  %s3 = inlined_call_operand.vmem [shape: f32[14,14], index: 3, kind: input, shape index: {}]
  %s4 = inlined_call_operand.vmem [shape: f32[1,14], index: 4, kind: input, shape index: {}]
  %s5 = inlined_call_operand.vmem [shape: f32[1,128], index: 5, kind: input, shape index: {}]
  %s6 = inlined_call_operand.vmem [shape: bf16[1,128,512], index: 6, kind: input, shape index: {}]
  %s7 = inlined_call_operand.vmem [shape: f32[1,4,256], index: 7, kind: input, shape index: {}]
  %s8 = inlined_call_operand.vmem [shape: f32[1,1,256], index: 8, kind: input, shape index: {}]
  %s9 = inlined_call_operand.vmem [shape: bf16[1,256,512], index: 9, kind: input, shape index: {}]
  %s10 = inlined_call_operand.vmem [shape: f32[1,1,256], index: 10, kind: input, shape index: {}]
  %s11 = inlined_call_operand.vmem [shape: f32[1,16,256], index: 11, kind: input, shape index: {}]
  %s12 = inlined_call_operand.vmem [shape: f32[1,1,256], index: 12, kind: input, shape index: {}]
  %s13 = inlined_call_operand.vmem [shape: bf16[1,256,128], index: 13, kind: input, shape index: {}]
  %s14 = inlined_call_operand.vmem [shape: f32[1,128], index: 14, kind: input, shape index: {}]
  %s15 = inlined_call_operand.vmem [shape: f32[1,128], index: 15, kind: input, shape index: {}]
  %s16 = inlined_call_operand.vmem [shape: f32[4,16,128], index: 16, kind: output, shape index: {}]
  %s17 = sld [smem:[#allocation0]]
  $region97: #{adt_encoder_forward.3} parent=0
    _
  %s19 = ssub.s32 1, %s17
  %s20 = scalar_select 0, %s19, %s17
  loop: start=0, step=1, limit=4
  $region2: #{adt_encoder_forward.3} parent=0 // loop_pre_header
    _
  $region3: #{adt_encoder_forward.3} parent=0 // loop_header
    %s22 = sphi 0, %s26
    %p23 = scmp.ge.s32.totalorder %s22, 4
    %s32 = sphi 0, %s34
    %s35 = sphi 0, %s32
    %s36 = sphi 0, %s35
    %s52 = sphi 0, %s36
    %s58 = sphi 0, %s60
    %s61 = sphi 0, %s58
    %s62 = sphi 0, %s61
    %s78 = sphi 0, %s62
    %s84 = sphi 0, %s86
    %s87 = sphi 0, %s84
    %s88 = sphi 0, %s87
    %s104 = sphi 0, %s88
    %s108 = sphi 0, %s108
    %s110 = sphi 0, %s108
    %s111 = sphi 0, %s110
    %s125 = sphi 0, %s111
    %s129 = sphi 0, %s129
    %s131 = sphi 0, %s129
    %s132 = sphi 0, %s131
    %s146 = sphi 0, %s132
    %s150 = sphi 0, %s150
    %s152 = sphi 0, %s150
    %s153 = sphi 0, %s152
    %s167 = sphi 0, %s153
    %s171 = sphi 0, %s171
    %s173 = sphi 0, %s171
    %s174 = sphi 0, %s173
    %s188 = sphi 0, %s174
    %s192 = sphi 0, %s192
    %s194 = sphi 0, %s192
    %s195 = sphi 0, %s194
    %s209 = sphi 0, %s195
    %s213 = sphi 0, %s213
    %s215 = sphi 0, %s213
    %s216 = sphi 0, %s215
    %s230 = sphi 0, %s216
    %s234 = sphi 0, %s234
    %s236 = sphi 0, %s234
    %s237 = sphi 0, %s236
    %s251 = sphi 0, %s237
    %s255 = sphi 0, %s255
    %s257 = sphi 0, %s255
    %s258 = sphi 0, %s257
    %s272 = sphi 0, %s258
    %s276 = sphi 0, %s276
    %s278 = sphi 0, %s276
    %s279 = sphi 0, %s278
    %s293 = sphi 0, %s279
    %s297 = sphi 0, %s297
    %s299 = sphi 0, %s297
    %s300 = sphi 0, %s299
    %s314 = sphi 0, %s300
    %s318 = sphi 0, %s318
    %s320 = sphi 0, %s318
    %s321 = sphi 0, %s320
    %s335 = sphi 0, %s321
    %s339 = sphi 0, %s339
    %s341 = sphi 0, %s339
    %s342 = sphi 0, %s341
    %s356 = sphi 0, %s342
    %s360 = sphi 0, %s360
    %s362 = sphi 0, %s360
    %s363 = sphi 0, %s362
    %s377 = sphi 0, %s363
    %s383 = sphi 0, %s385
    %s386 = sphi 0, %s383
    %s387 = sphi 0, %s386
    %s403 = sphi 0, %s387
  $region4: #{adt_encoder_forward.3} parent=0 // loop_header_branch
    %25 = sbr.rel (%p23) target = $region8
  $region5: #{adt_encoder_forward.3} parent=0 // loop_body
    %s27 = ssub.s32 %s22, 1
    %s28 = ssub.s32 %s22, 2
    %s29 = sadd.s32 %s22, 1
    %s30 = ssub.s32 %s22, %s29
    %p31 = scmp.eq.s32.totalorder %s30, 0
    %s33 = sadd.s32 %s32, 1
    %s34 = scalar_select %p31, %s32, %s33
    %p37 = pneg %p31
    %p38 = scmp.eq.s32.totalorder %s22, 1
    %p39 = por %p37, %p38
    %p40 = scmp.ne.s32.totalorder %s32, %s35
    %p41 = scmp.eq.s32.totalorder %s22, 0
    %p42 = por %p40, %p41
    %p43 = scmp.ne.s32.totalorder %s32, %s35
    %p44 = scmp.eq.s32.totalorder %s27, 1
    %p45 = por %p43, %p44
    %p46 = scmp.ne.s32.totalorder %s35, %s36
    %p47 = scmp.eq.s32.totalorder %s27, 0
    %p48 = por %p46, %p47
    %p49 = scmp.ne.s32.totalorder %s35, %s36
    %p50 = scmp.eq.s32.totalorder %s28, 1
    %p51 = por %p49, %p50
    %p53 = scmp.ne.s32.totalorder %s36, %s52
    %p54 = scmp.eq.s32.totalorder %s28, 0
    %p55 = por %p53, %p54
    %s56 = ssub.s32 %s22, %s29
    %p57 = scmp.eq.s32.totalorder %s56, 0
    %s59 = sadd.s32 %s58, 1
    %s60 = scalar_select %p57, %s58, %s59
    %p63 = pneg %p57
    %p64 = scmp.eq.s32.totalorder %s22, 1
    %p65 = por %p63, %p64
    %p66 = scmp.ne.s32.totalorder %s58, %s61
    %p67 = scmp.eq.s32.totalorder %s22, 0
    %p68 = por %p66, %p67
    %p69 = scmp.ne.s32.totalorder %s58, %s61
    %p70 = scmp.eq.s32.totalorder %s27, 1
    %p71 = por %p69, %p70
    %p72 = scmp.ne.s32.totalorder %s61, %s62
    %p73 = scmp.eq.s32.totalorder %s27, 0
    %p74 = por %p72, %p73
    %p75 = scmp.ne.s32.totalorder %s61, %s62
    %p76 = scmp.eq.s32.totalorder %s28, 1
    %p77 = por %p75, %p76
    %p79 = scmp.ne.s32.totalorder %s62, %s78
    %p80 = scmp.eq.s32.totalorder %s28, 0
    %p81 = por %p79, %p80
    %s82 = ssub.s32 %s22, %s29
    %p83 = scmp.eq.s32.totalorder %s82, 0
    %s85 = sadd.s32 %s84, 1
    %s86 = scalar_select %p83, %s84, %s85
    %p89 = pneg %p83
    %p90 = scmp.eq.s32.totalorder %s22, 1
    %p91 = por %p89, %p90
    %p92 = scmp.ne.s32.totalorder %s84, %s87
    %p93 = scmp.eq.s32.totalorder %s22, 0
    %p94 = por %p92, %p93
    %p95 = scmp.ne.s32.totalorder %s84, %s87
    %p96 = scmp.eq.s32.totalorder %s27, 1
    %p97 = por %p95, %p96
    %p98 = scmp.ne.s32.totalorder %s87, %s88
    %p99 = scmp.eq.s32.totalorder %s27, 0
    %p100 = por %p98, %p99
    %p101 = scmp.ne.s32.totalorder %s87, %s88
    %p102 = scmp.eq.s32.totalorder %s28, 1
    %p103 = por %p101, %p102
    %p105 = scmp.ne.s32.totalorder %s88, %s104
    %p106 = scmp.eq.s32.totalorder %s28, 0
    %p107 = por %p105, %p106
    %s109 = sadd.s32 %s108, 1
    %p112 = scmp.eq.s32.totalorder %s22, 1
    %p113 = scmp.ne.s32.totalorder %s108, %s110
    %p114 = scmp.eq.s32.totalorder %s22, 0
    %p115 = por %p113, %p114
    %p116 = scmp.ne.s32.totalorder %s108, %s110
    %p117 = scmp.eq.s32.totalorder %s27, 1
    %p118 = por %p116, %p117
    %p119 = scmp.ne.s32.totalorder %s110, %s111
    %p120 = scmp.eq.s32.totalorder %s27, 0
    %p121 = por %p119, %p120
    %p122 = scmp.ne.s32.totalorder %s110, %s111
    %p123 = scmp.eq.s32.totalorder %s28, 1
    %p124 = por %p122, %p123
    %p126 = scmp.ne.s32.totalorder %s111, %s125
    %p127 = scmp.eq.s32.totalorder %s28, 0
    %p128 = por %p126, %p127
    %s130 = sadd.s32 %s129, 1
    %p133 = scmp.eq.s32.totalorder %s22, 1
    %p134 = scmp.ne.s32.totalorder %s129, %s131
    %p135 = scmp.eq.s32.totalorder %s22, 0
    %p136 = por %p134, %p135
    %p137 = scmp.ne.s32.totalorder %s129, %s131
    %p138 = scmp.eq.s32.totalorder %s27, 1
    %p139 = por %p137, %p138
    %p140 = scmp.ne.s32.totalorder %s131, %s132
    %p141 = scmp.eq.s32.totalorder %s27, 0
    %p142 = por %p140, %p141
    %p143 = scmp.ne.s32.totalorder %s131, %s132
    %p144 = scmp.eq.s32.totalorder %s28, 1
    %p145 = por %p143, %p144
    %p147 = scmp.ne.s32.totalorder %s132, %s146
    %p148 = scmp.eq.s32.totalorder %s28, 0
    %p149 = por %p147, %p148
    %s151 = sadd.s32 %s150, 1
    %p154 = scmp.eq.s32.totalorder %s22, 1
    %p155 = scmp.ne.s32.totalorder %s150, %s152
    %p156 = scmp.eq.s32.totalorder %s22, 0
    %p157 = por %p155, %p156
    %p158 = scmp.ne.s32.totalorder %s150, %s152
    %p159 = scmp.eq.s32.totalorder %s27, 1
    %p160 = por %p158, %p159
    %p161 = scmp.ne.s32.totalorder %s152, %s153
    %p162 = scmp.eq.s32.totalorder %s27, 0
    %p163 = por %p161, %p162
    %p164 = scmp.ne.s32.totalorder %s152, %s153
    %p165 = scmp.eq.s32.totalorder %s28, 1
    %p166 = por %p164, %p165
    %p168 = scmp.ne.s32.totalorder %s153, %s167
    %p169 = scmp.eq.s32.totalorder %s28, 0
    %p170 = por %p168, %p169
    %s172 = sadd.s32 %s171, 1
    %p175 = scmp.eq.s32.totalorder %s22, 1
    %p176 = scmp.ne.s32.totalorder %s171, %s173
    %p177 = scmp.eq.s32.totalorder %s22, 0
    %p178 = por %p176, %p177
    %p179 = scmp.ne.s32.totalorder %s171, %s173
    %p180 = scmp.eq.s32.totalorder %s27, 1
    %p181 = por %p179, %p180
    %p182 = scmp.ne.s32.totalorder %s173, %s174
    %p183 = scmp.eq.s32.totalorder %s27, 0
    %p184 = por %p182, %p183
    %p185 = scmp.ne.s32.totalorder %s173, %s174
    %p186 = scmp.eq.s32.totalorder %s28, 1
    %p187 = por %p185, %p186
    %p189 = scmp.ne.s32.totalorder %s174, %s188
    %p190 = scmp.eq.s32.totalorder %s28, 0
    %p191 = por %p189, %p190
    %s193 = sadd.s32 %s192, 1
    %p196 = scmp.eq.s32.totalorder %s22, 1
    %p197 = scmp.ne.s32.totalorder %s192, %s194
    %p198 = scmp.eq.s32.totalorder %s22, 0
    %p199 = por %p197, %p198
    %p200 = scmp.ne.s32.totalorder %s192, %s194
    %p201 = scmp.eq.s32.totalorder %s27, 1
    %p202 = por %p200, %p201
    %p203 = scmp.ne.s32.totalorder %s194, %s195
    %p204 = scmp.eq.s32.totalorder %s27, 0
    %p205 = por %p203, %p204
    %p206 = scmp.ne.s32.totalorder %s194, %s195
    %p207 = scmp.eq.s32.totalorder %s28, 1
    %p208 = por %p206, %p207
    %p210 = scmp.ne.s32.totalorder %s195, %s209
    %p211 = scmp.eq.s32.totalorder %s28, 0
    %p212 = por %p210, %p211
    %s214 = sadd.s32 %s213, 1
    %p217 = scmp.eq.s32.totalorder %s22, 1
    %p218 = scmp.ne.s32.totalorder %s213, %s215
    %p219 = scmp.eq.s32.totalorder %s22, 0
    %p220 = por %p218, %p219
    %p221 = scmp.ne.s32.totalorder %s213, %s215
    %p222 = scmp.eq.s32.totalorder %s27, 1
    %p223 = por %p221, %p222
    %p224 = scmp.ne.s32.totalorder %s215, %s216
    %p225 = scmp.eq.s32.totalorder %s27, 0
    %p226 = por %p224, %p225
    %p227 = scmp.ne.s32.totalorder %s215, %s216
    %p228 = scmp.eq.s32.totalorder %s28, 1
    %p229 = por %p227, %p228
    %p231 = scmp.ne.s32.totalorder %s216, %s230
    %p232 = scmp.eq.s32.totalorder %s28, 0
    %p233 = por %p231, %p232
    %s235 = sadd.s32 %s234, 1
    %p238 = scmp.eq.s32.totalorder %s22, 1
    %p239 = scmp.ne.s32.totalorder %s234, %s236
    %p240 = scmp.eq.s32.totalorder %s22, 0
    %p241 = por %p239, %p240
    %p242 = scmp.ne.s32.totalorder %s234, %s236
    %p243 = scmp.eq.s32.totalorder %s27, 1
    %p244 = por %p242, %p243
    %p245 = scmp.ne.s32.totalorder %s236, %s237
    %p246 = scmp.eq.s32.totalorder %s27, 0
    %p247 = por %p245, %p246
    %p248 = scmp.ne.s32.totalorder %s236, %s237
    %p249 = scmp.eq.s32.totalorder %s28, 1
    %p250 = por %p248, %p249
    %p252 = scmp.ne.s32.totalorder %s237, %s251
    %p253 = scmp.eq.s32.totalorder %s28, 0
    %p254 = por %p252, %p253
    %s256 = sadd.s32 %s255, 1
    %p259 = scmp.eq.s32.totalorder %s22, 1
    %p260 = scmp.ne.s32.totalorder %s255, %s257
    %p261 = scmp.eq.s32.totalorder %s22, 0
    %p262 = por %p260, %p261
    %p263 = scmp.ne.s32.totalorder %s255, %s257
    %p264 = scmp.eq.s32.totalorder %s27, 1
    %p265 = por %p263, %p264
    %p266 = scmp.ne.s32.totalorder %s257, %s258
    %p267 = scmp.eq.s32.totalorder %s27, 0
    %p268 = por %p266, %p267
    %p269 = scmp.ne.s32.totalorder %s257, %s258
    %p270 = scmp.eq.s32.totalorder %s28, 1
    %p271 = por %p269, %p270
    %p273 = scmp.ne.s32.totalorder %s258, %s272
    %p274 = scmp.eq.s32.totalorder %s28, 0
    %p275 = por %p273, %p274
    %s277 = sadd.s32 %s276, 1
    %p280 = scmp.eq.s32.totalorder %s22, 1
    %p281 = scmp.ne.s32.totalorder %s276, %s278
    %p282 = scmp.eq.s32.totalorder %s22, 0
    %p283 = por %p281, %p282
    %p284 = scmp.ne.s32.totalorder %s276, %s278
    %p285 = scmp.eq.s32.totalorder %s27, 1
    %p286 = por %p284, %p285
    %p287 = scmp.ne.s32.totalorder %s278, %s279
    %p288 = scmp.eq.s32.totalorder %s27, 0
    %p289 = por %p287, %p288
    %p290 = scmp.ne.s32.totalorder %s278, %s279
    %p291 = scmp.eq.s32.totalorder %s28, 1
    %p292 = por %p290, %p291
    %p294 = scmp.ne.s32.totalorder %s279, %s293
    %p295 = scmp.eq.s32.totalorder %s28, 0
    %p296 = por %p294, %p295
    %s298 = sadd.s32 %s297, 1
    %p301 = scmp.eq.s32.totalorder %s22, 1
    %p302 = scmp.ne.s32.totalorder %s297, %s299
    %p303 = scmp.eq.s32.totalorder %s22, 0
    %p304 = por %p302, %p303
    %p305 = scmp.ne.s32.totalorder %s297, %s299
    %p306 = scmp.eq.s32.totalorder %s27, 1
    %p307 = por %p305, %p306
    %p308 = scmp.ne.s32.totalorder %s299, %s300
    %p309 = scmp.eq.s32.totalorder %s27, 0
    %p310 = por %p308, %p309
    %p311 = scmp.ne.s32.totalorder %s299, %s300
    %p312 = scmp.eq.s32.totalorder %s28, 1
    %p313 = por %p311, %p312
    %p315 = scmp.ne.s32.totalorder %s300, %s314
    %p316 = scmp.eq.s32.totalorder %s28, 0
    %p317 = por %p315, %p316
    %s319 = sadd.s32 %s318, 1
    %p322 = scmp.eq.s32.totalorder %s22, 1
    %p323 = scmp.ne.s32.totalorder %s318, %s320
    %p324 = scmp.eq.s32.totalorder %s22, 0
    %p325 = por %p323, %p324
    %p326 = scmp.ne.s32.totalorder %s318, %s320
    %p327 = scmp.eq.s32.totalorder %s27, 1
    %p328 = por %p326, %p327
    %p329 = scmp.ne.s32.totalorder %s320, %s321
    %p330 = scmp.eq.s32.totalorder %s27, 0
    %p331 = por %p329, %p330
    %p332 = scmp.ne.s32.totalorder %s320, %s321
    %p333 = scmp.eq.s32.totalorder %s28, 1
    %p334 = por %p332, %p333
    %p336 = scmp.ne.s32.totalorder %s321, %s335
    %p337 = scmp.eq.s32.totalorder %s28, 0
    %p338 = por %p336, %p337
    %s340 = sadd.s32 %s339, 1
    %p343 = scmp.eq.s32.totalorder %s22, 1
    %p344 = scmp.ne.s32.totalorder %s339, %s341
    %p345 = scmp.eq.s32.totalorder %s22, 0
    %p346 = por %p344, %p345
    %p347 = scmp.ne.s32.totalorder %s339, %s341
    %p348 = scmp.eq.s32.totalorder %s27, 1
    %p349 = por %p347, %p348
    %p350 = scmp.ne.s32.totalorder %s341, %s342
    %p351 = scmp.eq.s32.totalorder %s27, 0
    %p352 = por %p350, %p351
    %p353 = scmp.ne.s32.totalorder %s341, %s342
    %p354 = scmp.eq.s32.totalorder %s28, 1
    %p355 = por %p353, %p354
    %p357 = scmp.ne.s32.totalorder %s342, %s356
    %p358 = scmp.eq.s32.totalorder %s28, 0
    %p359 = por %p357, %p358
    %s361 = sadd.s32 %s360, 1
    %p364 = scmp.eq.s32.totalorder %s22, 1
    %p365 = scmp.ne.s32.totalorder %s360, %s362
    %p366 = scmp.eq.s32.totalorder %s22, 0
    %p367 = por %p365, %p366
    %p368 = scmp.ne.s32.totalorder %s360, %s362
    %p369 = scmp.eq.s32.totalorder %s27, 1
    %p370 = por %p368, %p369
    %p371 = scmp.ne.s32.totalorder %s362, %s363
    %p372 = scmp.eq.s32.totalorder %s27, 0
    %p373 = por %p371, %p372
    %p374 = scmp.ne.s32.totalorder %s362, %s363
    %p375 = scmp.eq.s32.totalorder %s28, 1
    %p376 = por %p374, %p375
    %p378 = scmp.ne.s32.totalorder %s363, %s377
    %p379 = scmp.eq.s32.totalorder %s28, 0
    %p380 = por %p378, %p379
    %s381 = ssub.s32 %s22, %s29
    %p382 = scmp.eq.s32.totalorder %s381, 0
    %s384 = sadd.s32 %s383, 1
    %s385 = scalar_select %p382, %s383, %s384
    %p388 = pneg %p382
    %p389 = scmp.eq.s32.totalorder %s22, 1
    %p390 = por %p388, %p389
    %p391 = scmp.ne.s32.totalorder %s383, %s386
    %p392 = scmp.eq.s32.totalorder %s22, 0
    %p393 = por %p391, %p392
    %p394 = scmp.ne.s32.totalorder %s383, %s386
    %p395 = scmp.eq.s32.totalorder %s27, 1
    %p396 = por %p394, %p395
    %p397 = scmp.ne.s32.totalorder %s386, %s387
    %p398 = scmp.eq.s32.totalorder %s27, 0
    %p399 = por %p397, %p398
    %p400 = scmp.ne.s32.totalorder %s386, %s387
    %p401 = scmp.eq.s32.totalorder %s28, 1
    %p402 = por %p400, %p401
    %p404 = scmp.ne.s32.totalorder %s387, %s403
    %p405 = scmp.eq.s32.totalorder %s28, 0
    %p406 = por %p404, %p405
    %p407 = scmp.le.s32.totalorder 1, %s22
    %p408 = scmp.lt.s32.totalorder %s22, 3
    %p409 = pnand %p407, %p408
    %p410 = pneg %p409
    // Predicated region
    $region9: #{adt_encoder_forward.3} parent=5 // pred_check
      _
    $region10: #{adt_encoder_forward.3} parent=5 // pred_check_branch
      %412 = sbr.rel (%p409) target = $region12
    $region11: #{adt_encoder_forward.3} parent=5 // pred_region
      %s413 = ssub.s32 %s22, 1
      // Predicated region
      $region13: #{adt_encoder_forward.3} parent=11 // pred_check
        %p414 = pneg %p121
      $region14: #{adt_encoder_forward.3} parent=11 // pred_check_branch
        %416 = sbr.rel (%p414) target = $region16
      $region15: #{adt_encoder_forward.3} parent=11 // pred_region
        _
      $region16: #{adt_encoder_forward.3} parent=11 // pred_fallthru
        _
      // Predicated region
      $region17: #{adt_encoder_forward.3} parent=11 // pred_check
        %p417 = pneg %p142
      $region18: #{adt_encoder_forward.3} parent=11 // pred_check_branch
        %419 = sbr.rel (%p417) target = $region20
      $region19: #{adt_encoder_forward.3} parent=11 // pred_region
        _
      $region20: #{adt_encoder_forward.3} parent=11 // pred_fallthru
        _
      // Predicated region
      $region21: #{adt_encoder_forward.3} parent=11 // pred_check
        %p420 = pneg %p163
      $region22: #{adt_encoder_forward.3} parent=11 // pred_check_branch
        %422 = sbr.rel (%p420) target = $region24
      $region23: #{adt_encoder_forward.3} parent=11 // pred_region
        _
      $region24: #{adt_encoder_forward.3} parent=11 // pred_fallthru
        _
      // Predicated region
      $region25: #{adt_encoder_forward.3} parent=11 // pred_check
        %p423 = pneg %p184
      $region26: #{adt_encoder_forward.3} parent=11 // pred_check_branch
        %425 = sbr.rel (%p423) target = $region28
      $region27: #{adt_encoder_forward.3} parent=11 // pred_region
        _
      $region28: #{adt_encoder_forward.3} parent=11 // pred_fallthru
        _
      // Predicated region
      $region29: #{adt_encoder_forward.3} parent=11 // pred_check
        %p426 = pneg %p205
      $region30: #{adt_encoder_forward.3} parent=11 // pred_check_branch
        %428 = sbr.rel (%p426) target = $region32
      $region31: #{adt_encoder_forward.3} parent=11 // pred_region
        _
      $region32: #{adt_encoder_forward.3} parent=11 // pred_fallthru
        _
      // Predicated region
      $region33: #{adt_encoder_forward.3} parent=11 // pred_check
        %p429 = pneg %p226
      $region34: #{adt_encoder_forward.3} parent=11 // pred_check_branch
        %431 = sbr.rel (%p429) target = $region36
      $region35: #{adt_encoder_forward.3} parent=11 // pred_region
        _
      $region36: #{adt_encoder_forward.3} parent=11 // pred_fallthru
        _
      // Predicated region
      $region37: #{adt_encoder_forward.3} parent=11 // pred_check
        %p432 = pneg %p247
      $region38: #{adt_encoder_forward.3} parent=11 // pred_check_branch
        %434 = sbr.rel (%p432) target = $region40
      $region39: #{adt_encoder_forward.3} parent=11 // pred_region
        _
      $region40: #{adt_encoder_forward.3} parent=11 // pred_fallthru
        _
      // Predicated region
      $region41: #{adt_encoder_forward.3} parent=11 // pred_check
        %p435 = pneg %p268
      $region42: #{adt_encoder_forward.3} parent=11 // pred_check_branch
        %437 = sbr.rel (%p435) target = $region44
      $region43: #{adt_encoder_forward.3} parent=11 // pred_region
        _
      $region44: #{adt_encoder_forward.3} parent=11 // pred_fallthru
        _
      // Predicated region
      $region45: #{adt_encoder_forward.3} parent=11 // pred_check
        %p438 = pneg %p289
      $region46: #{adt_encoder_forward.3} parent=11 // pred_check_branch
        %440 = sbr.rel (%p438) target = $region48
      $region47: #{adt_encoder_forward.3} parent=11 // pred_region
        _
      $region48: #{adt_encoder_forward.3} parent=11 // pred_fallthru
        _
      // Predicated region
      $region49: #{adt_encoder_forward.3} parent=11 // pred_check
        %p441 = pneg %p310
      $region50: #{adt_encoder_forward.3} parent=11 // pred_check_branch
        %443 = sbr.rel (%p441) target = $region52
      $region51: #{adt_encoder_forward.3} parent=11 // pred_region
        _
      $region52: #{adt_encoder_forward.3} parent=11 // pred_fallthru
        _
      // Predicated region
      $region53: #{adt_encoder_forward.3} parent=11 // pred_check
        %p444 = pneg %p331
      $region54: #{adt_encoder_forward.3} parent=11 // pred_check_branch
        %446 = sbr.rel (%p444) target = $region56
      $region55: #{adt_encoder_forward.3} parent=11 // pred_region
        _
      $region56: #{adt_encoder_forward.3} parent=11 // pred_fallthru
        _
      // Predicated region
      $region57: #{adt_encoder_forward.3} parent=11 // pred_check
        %p447 = pneg %p352
      $region58: #{adt_encoder_forward.3} parent=11 // pred_check_branch
        %449 = sbr.rel (%p447) target = $region60
      $region59: #{adt_encoder_forward.3} parent=11 // pred_region
        _
      $region60: #{adt_encoder_forward.3} parent=11 // pred_fallthru
        _
      // Predicated region
      $region61: #{adt_encoder_forward.3} parent=11 // pred_check
        %p450 = pneg %p373
      $region62: #{adt_encoder_forward.3} parent=11 // pred_check_branch
        %452 = sbr.rel (%p450) target = $region64
      $region63: #{adt_encoder_forward.3} parent=11 // pred_region
        _
      $region64: #{adt_encoder_forward.3} parent=11 // pred_fallthru
        _
    $region12: #{adt_encoder_forward.3} parent=5 // pred_fallthru
      _
    %p453 = scmp.lt.s32.totalorder %s22, 2
    // Predicated region
    $region65: #{adt_encoder_forward.3} parent=5 // pred_check
      %p454 = pneg %p453
    $region66: #{adt_encoder_forward.3} parent=5 // pred_check_branch
      %456 = sbr.rel (%p454) target = $region68
    $region67: #{adt_encoder_forward.3} parent=5 // pred_region
      // Predicated region
      $region69: #{adt_encoder_forward.3} parent=67 // pred_check
        %p457 = pneg %p42
      $region70: #{adt_encoder_forward.3} parent=67 // pred_check_branch
        %459 = sbr.rel (%p457) target = $region72
      $region71: #{adt_encoder_forward.3} parent=67 // pred_region
        %s460 = smul.u32 2, %s22
        %p461 = scmp.lt.s32.totalorder %s460, 3
        %s462 = scalar_select %p461, %s460, 3
        %s463 = scalar_lea.vmem %s0, %s462
        %s464 = smul.u32 2, %s22
      $region72: #{adt_encoder_forward.3} parent=67 // pred_fallthru
        _
      // Predicated region
      $region73: #{adt_encoder_forward.3} parent=67 // pred_check
        %p465 = pneg %p68
      $region74: #{adt_encoder_forward.3} parent=67 // pred_check_branch
        %467 = sbr.rel (%p465) target = $region76
      $region75: #{adt_encoder_forward.3} parent=67 // pred_region
        %s468 = smul.u32 2, %s22
        %p469 = scmp.lt.s32.totalorder %s468, 3
        %s470 = scalar_select %p469, %s468, 3
        %s471 = smul.addr %s470, 2
        %s472 = smul.addr %s471, 8
        %s473 = scalar_lea.vmem %s1, %s472
        %s474 = smul.u32 2, %s22
      $region76: #{adt_encoder_forward.3} parent=67 // pred_fallthru
        _
      // Predicated region
      $region77: #{adt_encoder_forward.3} parent=67 // pred_check
        %p475 = pneg %p94
      $region78: #{adt_encoder_forward.3} parent=67 // pred_check_branch
        %477 = sbr.rel (%p475) target = $region80
      $region79: #{adt_encoder_forward.3} parent=67 // pred_region
        %s478 = smul.u32 2, %s22
        %p479 = scmp.lt.s32.totalorder %s478, 3
        %s480 = scalar_select %p479, %s478, 3
        %s481 = smul.addr %s480, 2
        %s482 = smul.addr %s481, 8
        %s483 = scalar_lea.vmem %s2, %s482
        %s484 = smul.u32 2, %s22
      $region80: #{adt_encoder_forward.3} parent=67 // pred_fallthru
        _
    $region68: #{adt_encoder_forward.3} parent=5 // pred_fallthru
      _
    %p485 = scmp.le.s32.totalorder 1, %s22
    %p486 = scmp.lt.s32.totalorder %s22, 3
    %p487 = pnand %p485, %p486
    %p488 = pneg %p487
    // Predicated region
    $region81: #{adt_encoder_forward.3} parent=5 // pred_check
      _
    $region82: #{adt_encoder_forward.3} parent=5 // pred_check_branch
      %490 = sbr.rel (%p487) target = $region84
    $region83: #{adt_encoder_forward.3} parent=5 // pred_region
      %s491 = ssub.s32 %s22, 1
      %s492 = smul.u32 2, %s27
      %p493 = scmp.lt.s32.totalorder %s492, 3
      %s494 = scalar_select %p493, %s492, 3
      %s495 = scalar_lea.vmem %s0, %s494
      %p496 = pneg %p48
      %p497 = pneg %p45
      %s498 = smul.u32 2, %s27
      %p499 = scmp.lt.s32.totalorder %s498, 3
      %s500 = scalar_select %p499, %s498, 3
      %s501 = smul.addr %s500, 2
      %s502 = smul.addr %s501, 8
      %s503 = scalar_lea.vmem %s1, %s502
      %p504 = pneg %p74
      %p505 = pneg %p71
      %s506 = smul.u32 2, %s27
      %p507 = scmp.lt.s32.totalorder %s506, 3
      %s508 = scalar_select %p507, %s506, 3
      %s509 = smul.addr %s508, 2
      %s510 = smul.addr %s509, 8
      %s511 = scalar_lea.vmem %s2, %s510
      %p512 = pneg %p100
      %p513 = pneg %p97
      %p514 = pneg %p121
      %p515 = pneg %p118
      %p516 = pneg %p142
      %p517 = pneg %p139
      %p518 = pneg %p163
      %p519 = pneg %p160
      %p520 = pneg %p184
      %p521 = pneg %p181
      %p522 = pneg %p205
      %p523 = pneg %p202
      %p524 = pneg %p226
      %p525 = pneg %p223
      %p526 = pneg %p247
      %p527 = pneg %p244
      %p528 = pneg %p268
      %p529 = pneg %p265
      %p530 = pneg %p289
      %p531 = pneg %p286
      %p532 = pneg %p310
      %p533 = pneg %p307
      %p534 = pneg %p331
      %p535 = pneg %p328
      %p536 = pneg %p352
      %p537 = pneg %p349
      %p538 = pneg %p373
      %p539 = pneg %p370
      %p540 = pneg %p399
      %p541 = pneg %p396
      %s542 = smul.u32 2, %s27
      %p543 = scmp.lt.s32.totalorder %s542, 3
      %s544 = scalar_select %p543, %s542, 3
      %s545 = smul.addr %s544, 2
      %s546 = smul.addr %s545, 8
      %s547 = scalar_lea.vmem %s16, %s546
      %s548 = smul.u32 2, %s27
      %p549 = scmp.lt.s32.totalorder %s548, 3
      %s550 = scalar_select %p549, %s548, 3
      %s551 = scalar_lea.vmem %s0, %s550
      %s552 = smul.u32 2, %s27
      %s553 = smul.u32 2, %s27
      %p554 = scmp.lt.s32.totalorder %s553, 3
      %s555 = scalar_select %p554, %s553, 3
      %s556 = smul.addr %s555, 2
      %s557 = smul.addr %s556, 8
      %s558 = scalar_lea.vmem %s1, %s557
      %s559 = smul.u32 2, %s27
      %s560 = smul.u32 2, %s27
      %p561 = scmp.lt.s32.totalorder %s560, 3
      %s562 = scalar_select %p561, %s560, 3
      %s563 = smul.addr %s562, 2
      %s564 = smul.addr %s563, 8
      %s565 = scalar_lea.vmem %s2, %s564
      %s566 = smul.u32 2, %s27
      %s567 = smul.u32 2, %s27
      %p568 = scmp.lt.s32.totalorder %s567, 3
      %s569 = scalar_select %p568, %s567, 3
      %s570 = smul.addr %s569, 2
      %s571 = smul.addr %s570, 8
      %s572 = scalar_lea.vmem %s16, %s571
      %s573 = smul.u32 2, %s27
      %v574 = vld [vmem:[%s551] sm:$0x1]
      %v575 = vld [vmem:[%s551 + $0x1] sm:$0x1]
      %v576 = vperm.slane %v574, 0
      %v577 = vlaneseq
      %v578 = vshrl.u32 %v577, 7
      %580 = vset.pattern.permute.xlu0 %v578
      %581 = vperm.xlu0 %580, %v576
      %v582 = vpop.permute.xlu0 %581
      %v583 = vlaneseq
      %v584 = vshrl.u32 %v583, 7
      %v585 = vadd.s32 %v584, 8
      %586 = vset.pattern.permute.xlu0 %v585
      %587 = vperm.xlu0 %586, %v576
      %v588 = vpop.permute.xlu0 %587
      %v589 = vperm.slane %v575, 0
      %v590 = vlaneseq
      %v591 = vshrl.u32 %v590, 7
      %593 = vset.pattern.permute.xlu0 %v591
      %594 = vperm.xlu0 %593, %v589
      %v595 = vpop.permute.xlu0 %594
      %v596 = vlaneseq
      %v597 = vshrl.u32 %v596, 7
      %v598 = vadd.s32 %v597, 8
      %599 = vset.pattern.permute.xlu0 %v598
      %600 = vperm.xlu0 %599, %v589
      %v601 = vpop.permute.xlu0 %600
      %v602 = vld [vmem:[%s3] sm:$0xff]
      %v603 = vld [vmem:[%s3 + $0x8] sm:$0x3f]
      %v604 = vmul.f32 %v582, %v602
      %v605 = vmul.f32 %v588, %v603
      %v606 = vmul.f32 %v595, %v602
      %v607 = vmul.f32 %v601, %v603
      %vm608 = vcmask 113664
      %v609 = vsel %vm608, %v604, 0.0
      %vm610 = vcmask 111616
      %v611 = vsel %vm610, %v605, 0.0
      %v612 = vadd.f32 %v609, %v611
      %v613 = vrot.slane %v612, 4
      %v614 = vadd.f32 %v612, %v613
      %v615 = vrot.slane %v614, 2
      %v616 = vadd.f32 %v614, %v615
      %v617 = vrot.slane %v616, 1
      %v618 = vadd.f32 %v616, %v617
      %v619 = vsel %vm608, %v606, 0.0
      %v620 = vsel %vm610, %v607, 0.0
      %v621 = vadd.f32 %v619, %v620
      %v622 = vrot.slane %v621, 4
      %v623 = vadd.f32 %v621, %v622
      %v624 = vrot.slane %v623, 2
      %v625 = vadd.f32 %v623, %v624
      %v626 = vrot.slane %v625, 1
      %v627 = vadd.f32 %v625, %v626
      %v628 = vld [vmem:[%s4] sm:$0x1]
      %v630 = vperm.slane %v628, 0
      %v632 = vadd.f32 %v618, %v630
      %v633 = vadd.f32 %v627, %v630
      %v634 = vld [vmem:[%s558] sm:$0xff]
      %v635 = vld [vmem:[%s558 + $0x8] sm:$0xff]
      %v636 = vld [vmem:[%s558 + $0x10] sm:$0xff]
      %v637 = vld [vmem:[%s558 + $0x18] sm:$0xff]
      %v638 = vperm.slane %v632, 0
      %v639 = vperm.slane %v633, 0
      %v640 = vmul.f32 %v634, %v638
      %v641 = vmul.f32 %v635, %v638
      %v642 = vmul.f32 %v636, %v639
      %v643 = vmul.f32 %v637, %v639
      %v644 = vsel %vm608, %v640, 0.0
      %645 = vadd.xlane.f32.xlu0 %v644
      %v646 = vpop.xlane.xlu0 %645
      %v647 = vsel %vm608, %v641, 0.0
      %648 = vadd.xlane.f32.xlu0 %v647
      %v649 = vpop.xlane.xlu0 %648
      %v650 = vsel %vm608, %v642, 0.0
      %651 = vadd.xlane.f32.xlu0 %v650
      %v652 = vpop.xlane.xlu0 %651
      %v653 = vsel %vm608, %v643, 0.0
      %654 = vadd.xlane.f32.xlu0 %v653
      %v655 = vpop.xlane.xlu0 %654
      %v656 = vld [vmem:[%s5] sm:$0x1]
      %v658 = vperm.slane %v656, 0
      %v660 = vmul.f32 %v646, %v658
      %v661 = vmul.f32 %v649, %v658
      %v662 = vmul.f32 %v652, %v658
      %v663 = vmul.f32 %v655, %v658
      %v664 = vld [vmem:[%s565] sm:$0xff]
      %v665 = vld [vmem:[%s565 + $0x8] sm:$0xff]
      %v666 = vld [vmem:[%s565 + $0x10] sm:$0xff]
      %v667 = vld [vmem:[%s565 + $0x18] sm:$0xff]
      %v668 = vadd.f32 %v660, %v664
      %v669 = vadd.f32 %v661, %v665
      %v670 = vadd.f32 %v662, %v666
      %v671 = vadd.f32 %v663, %v667
      %v672 = vpack.c.bf16 %v669, %v668
      %v673 = vpack.c.bf16 %v671, %v670
      %v674 = vld [vmem:[%s6] sm:$0xff]
      %v675 = vld [vmem:[%s6 + $0x8] sm:$0xff]
      %v676 = vld [vmem:[%s6 + $0x10] sm:$0xff]
      %v677 = vld [vmem:[%s6 + $0x18] sm:$0xff]
      %v678 = vld [vmem:[%s6 + $0x20] sm:$0xff]
      %v679 = vld [vmem:[%s6 + $0x28] sm:$0xff]
      %v680 = vld [vmem:[%s6 + $0x30] sm:$0xff]
      %v681 = vld [vmem:[%s6 + $0x38] sm:$0xff]
      %v682 = vld [vmem:[%s6 + $0x40] sm:$0xff]
      %v683 = vld [vmem:[%s6 + $0x48] sm:$0xff]
      %v684 = vld [vmem:[%s6 + $0x50] sm:$0xff]
      %v685 = vld [vmem:[%s6 + $0x58] sm:$0xff]
      %v686 = vld [vmem:[%s6 + $0x60] sm:$0xff]
      %v687 = vld [vmem:[%s6 + $0x68] sm:$0xff]
      %v688 = vld [vmem:[%s6 + $0x70] sm:$0xff]
      %v689 = vld [vmem:[%s6 + $0x78] sm:$0xff]
      %v690 = vld [vmem:[%s6 + $0x80] sm:$0xff]
      %v691 = vld [vmem:[%s6 + $0x88] sm:$0xff]
      %v692 = vld [vmem:[%s6 + $0x90] sm:$0xff]
      %v693 = vld [vmem:[%s6 + $0x98] sm:$0xff]
      %v694 = vld [vmem:[%s6 + $0xa0] sm:$0xff]
      %v695 = vld [vmem:[%s6 + $0xa8] sm:$0xff]
      %v696 = vld [vmem:[%s6 + $0xb0] sm:$0xff]
      %v697 = vld [vmem:[%s6 + $0xb8] sm:$0xff]
      %v698 = vld [vmem:[%s6 + $0xc0] sm:$0xff]
      %v699 = vld [vmem:[%s6 + $0xc8] sm:$0xff]
      %v700 = vld [vmem:[%s6 + $0xd0] sm:$0xff]
      %v701 = vld [vmem:[%s6 + $0xd8] sm:$0xff]
      %v702 = vld [vmem:[%s6 + $0xe0] sm:$0xff]
      %v703 = vld [vmem:[%s6 + $0xe8] sm:$0xff]
      %v704 = vld [vmem:[%s6 + $0xf0] sm:$0xff]
      %v705 = vld [vmem:[%s6 + $0xf8] sm:$0xff]
      %v738 = vunpack.c.l.b16 %v674
      %v739 = vunpack.c.h.b16 %v674
      %v740 = vunpack.c.l.b16 %v675
      %v741 = vunpack.c.h.b16 %v675
      %v742 = vunpack.c.l.b16 %v676
      %v743 = vunpack.c.h.b16 %v676
      %v744 = vunpack.c.l.b16 %v677
      %v745 = vunpack.c.h.b16 %v677
      %v746 = vunpack.c.l.b16 %v678
      %v747 = vunpack.c.h.b16 %v678
      %v748 = vunpack.c.l.b16 %v679
      %v749 = vunpack.c.h.b16 %v679
      %v750 = vunpack.c.l.b16 %v680
      %v751 = vunpack.c.h.b16 %v680
      %v752 = vunpack.c.l.b16 %v681
      %v753 = vunpack.c.h.b16 %v681
      %v754 = vunpack.c.l.b16 %v682
      %v755 = vunpack.c.h.b16 %v682
      %v756 = vunpack.c.l.b16 %v683
      %v757 = vunpack.c.h.b16 %v683
      %v758 = vunpack.c.l.b16 %v684
      %v759 = vunpack.c.h.b16 %v684
      %v760 = vunpack.c.l.b16 %v685
      %v761 = vunpack.c.h.b16 %v685
      %v762 = vunpack.c.l.b16 %v686
      %v763 = vunpack.c.h.b16 %v686
      %v764 = vunpack.c.l.b16 %v687
      %v765 = vunpack.c.h.b16 %v687
      %v766 = vunpack.c.l.b16 %v688
      %v767 = vunpack.c.h.b16 %v688
      %v768 = vunpack.c.l.b16 %v689
      %v769 = vunpack.c.h.b16 %v689
      %v770 = vunpack.c.l.b16 %v690
      %v771 = vunpack.c.h.b16 %v690
      %v772 = vunpack.c.l.b16 %v691
      %v773 = vunpack.c.h.b16 %v691
      %v774 = vunpack.c.l.b16 %v692
      %v775 = vunpack.c.h.b16 %v692
      %v776 = vunpack.c.l.b16 %v693
      %v777 = vunpack.c.h.b16 %v693
      %v778 = vunpack.c.l.b16 %v694
      %v779 = vunpack.c.h.b16 %v694
      %v780 = vunpack.c.l.b16 %v695
      %v781 = vunpack.c.h.b16 %v695
      %v782 = vunpack.c.l.b16 %v696
      %v783 = vunpack.c.h.b16 %v696
      %v784 = vunpack.c.l.b16 %v697
      %v785 = vunpack.c.h.b16 %v697
      %v786 = vunpack.c.l.b16 %v698
      %v787 = vunpack.c.h.b16 %v698
      %v788 = vunpack.c.l.b16 %v699
      %v789 = vunpack.c.h.b16 %v699
      %v790 = vunpack.c.l.b16 %v700
      %v791 = vunpack.c.h.b16 %v700
      %v792 = vunpack.c.l.b16 %v701
      %v793 = vunpack.c.h.b16 %v701
      %v794 = vunpack.c.l.b16 %v702
      %v795 = vunpack.c.h.b16 %v702
      %v796 = vunpack.c.l.b16 %v703
      %v797 = vunpack.c.h.b16 %v703
      %v798 = vunpack.c.l.b16 %v704
      %v799 = vunpack.c.h.b16 %v704
      %v800 = vunpack.c.l.b16 %v705
      %v801 = vunpack.c.h.b16 %v705
      %v802 = vpack.c.b16 %v742, %v738
      %v803 = vpack.c.b16 %v743, %v739
      %v804 = vpack.c.b16 %v744, %v740
      %v805 = vpack.c.b16 %v745, %v741
      %v806 = vpack.c.b16 %v750, %v746
      %v807 = vpack.c.b16 %v751, %v747
      %v808 = vpack.c.b16 %v752, %v748
      %v809 = vpack.c.b16 %v753, %v749
      %v810 = vpack.c.b16 %v758, %v754
      %v811 = vpack.c.b16 %v759, %v755
      %v812 = vpack.c.b16 %v760, %v756
      %v813 = vpack.c.b16 %v761, %v757
      %v814 = vpack.c.b16 %v766, %v762
      %v815 = vpack.c.b16 %v767, %v763
      %v816 = vpack.c.b16 %v768, %v764
      %v817 = vpack.c.b16 %v769, %v765
      %v818 = vpack.c.b16 %v774, %v770
      %v819 = vpack.c.b16 %v775, %v771
      %v820 = vpack.c.b16 %v776, %v772
      %v821 = vpack.c.b16 %v777, %v773
      %v822 = vpack.c.b16 %v782, %v778
      %v823 = vpack.c.b16 %v783, %v779
      %v824 = vpack.c.b16 %v784, %v780
      %v825 = vpack.c.b16 %v785, %v781
      %v826 = vpack.c.b16 %v790, %v786
      %v827 = vpack.c.b16 %v791, %v787
      %v828 = vpack.c.b16 %v792, %v788
      %v829 = vpack.c.b16 %v793, %v789
      %v830 = vpack.c.b16 %v798, %v794
      %v831 = vpack.c.b16 %v799, %v795
      %v832 = vpack.c.b16 %v800, %v796
      %v833 = vpack.c.b16 %v801, %v797
      %866 = vmatpush.bf16.msra.mxu0 %v830
      %867 = vmatpush.bf16.msra.mxu0 %v826
      %868 = vmatpush.bf16.msra.mxu0 %v822
      %869 = vmatpush.bf16.msra.mxu0 %v818
      %870 = vmatpush.bf16.msra.mxu0 %v814
      %871 = vmatpush.bf16.msra.mxu0 %v810
      %872 = vmatpush.bf16.msra.mxu0 %v806
      %873 = vmatpush.bf16.msra.mxu0 %v802
      %874 = vmatmul.bf16.gmra.mxu0 %v672
      %v875 = vpop.f32.mrf.mxu0
      %v876 = vadd.f32 0.0, %v875
      %v877 = vpop.f32.mrf.mxu0
      %v878 = vadd.f32 0.0, %v877
      %879 = vmatmul.bf16.gmra.mxu0 %v673
      %v880 = vpop.f32.mrf.mxu0
      %v881 = vadd.f32 0.0, %v880
      %v882 = vpop.f32.mrf.mxu0
      %v883 = vadd.f32 0.0, %v882
      %884 = vdwg.mxu0
      %885 = vmatpush.bf16.msra.mxu0 %v831
      %886 = vmatpush.bf16.msra.mxu0 %v827
      %887 = vmatpush.bf16.msra.mxu0 %v823
      %888 = vmatpush.bf16.msra.mxu0 %v819
      %889 = vmatpush.bf16.msra.mxu0 %v815
      %890 = vmatpush.bf16.msra.mxu0 %v811
      %891 = vmatpush.bf16.msra.mxu0 %v807
      %892 = vmatpush.bf16.msra.mxu0 %v803
      %893 = vmatmul.bf16.gmra.mxu0 %v672
      %v894 = vpop.f32.mrf.mxu0
      %v895 = vadd.f32 0.0, %v894
      %v896 = vpop.f32.mrf.mxu0
      %v897 = vadd.f32 0.0, %v896
      %898 = vmatmul.bf16.gmra.mxu0 %v673
      %v899 = vpop.f32.mrf.mxu0
      %v900 = vadd.f32 0.0, %v899
      %v901 = vpop.f32.mrf.mxu0
      %v902 = vadd.f32 0.0, %v901
      %903 = vdwg.mxu0
      %904 = vmatpush.bf16.msra.mxu0 %v832
      %905 = vmatpush.bf16.msra.mxu0 %v828
      %906 = vmatpush.bf16.msra.mxu0 %v824
      %907 = vmatpush.bf16.msra.mxu0 %v820
      %908 = vmatpush.bf16.msra.mxu0 %v816
      %909 = vmatpush.bf16.msra.mxu0 %v812
      %910 = vmatpush.bf16.msra.mxu0 %v808
      %911 = vmatpush.bf16.msra.mxu0 %v804
      %912 = vmatmul.bf16.gmra.mxu0 %v672
      %v913 = vpop.f32.mrf.mxu0
      %v914 = vadd.f32 0.0, %v913
      %v915 = vpop.f32.mrf.mxu0
      %v916 = vadd.f32 0.0, %v915
      %917 = vmatmul.bf16.gmra.mxu0 %v673
      %v918 = vpop.f32.mrf.mxu0
      %v919 = vadd.f32 0.0, %v918
      %v920 = vpop.f32.mrf.mxu0
      %v921 = vadd.f32 0.0, %v920
      %922 = vdwg.mxu0
      %923 = vmatpush.bf16.msra.mxu0 %v833
      %924 = vmatpush.bf16.msra.mxu0 %v829
      %925 = vmatpush.bf16.msra.mxu0 %v825
      %926 = vmatpush.bf16.msra.mxu0 %v821
      %927 = vmatpush.bf16.msra.mxu0 %v817
      %928 = vmatpush.bf16.msra.mxu0 %v813
      %929 = vmatpush.bf16.msra.mxu0 %v809
      %930 = vmatpush.bf16.msra.mxu0 %v805
      %931 = vmatmul.bf16.gmra.mxu0 %v672
      %v932 = vpop.f32.mrf.mxu0
      %v933 = vadd.f32 0.0, %v932
      %v934 = vpop.f32.mrf.mxu0
      %v935 = vadd.f32 0.0, %v934
      %936 = vmatmul.bf16.gmra.mxu0 %v673
      %v937 = vpop.f32.mrf.mxu0
      %v938 = vadd.f32 0.0, %v937
      %v939 = vpop.f32.mrf.mxu0
      %v940 = vadd.f32 0.0, %v939
      %941 = vdwg.mxu0
      %v942 = vld [vmem:[%s7] sm:$0xff]
      %v943 = vld [vmem:[%s8] sm:$0x3]
      %v945 = vperm.slane %v942, 0
      %v946 = vperm.slane %v942, 4
      %v949 = vperm.slane %v945, 0
      %v950 = vperm.slane %v946, 0
      %v951 = vmul.f32 %v876, %v949
      %v952 = vmul.f32 %v895, %v950
      %v953 = vmul.f32 %v878, %v949
      %v954 = vmul.f32 %v897, %v950
      %v955 = vmul.f32 %v881, %v949
      %v956 = vmul.f32 %v900, %v950
      %v957 = vmul.f32 %v883, %v949
      %v958 = vmul.f32 %v902, %v950
      %v960 = vperm.slane %v943, 0
      %v961 = vperm.slane %v943, 1
      %v964 = vadd.f32 %v960, %v951
      %v965 = vadd.f32 %v961, %v952
      %v966 = vadd.f32 %v960, %v953
      %v967 = vadd.f32 %v961, %v954
      %v968 = vadd.f32 %v960, %v955
      %v969 = vadd.f32 %v961, %v956
      %v970 = vadd.f32 %v960, %v957
      %v971 = vadd.f32 %v961, %v958
      %v972 = vperm.slane %v942, 1
      %v973 = vperm.slane %v942, 5
      %v976 = vperm.slane %v972, 1
      %v977 = vperm.slane %v973, 1
      %v978 = vmul.f32 %v876, %v976
      %v979 = vmul.f32 %v895, %v977
      %v980 = vmul.f32 %v878, %v976
      %v981 = vmul.f32 %v897, %v977
      %v982 = vmul.f32 %v881, %v976
      %v983 = vmul.f32 %v900, %v977
      %v984 = vmul.f32 %v883, %v976
      %v985 = vmul.f32 %v902, %v977
      %vm994 = vcmask 1046528
      %v995 = vrot.slane %v978, 1
      %v996 = vrot.slane %v980, 1
      %v997 = vsel %vm994, %v995, %v996
      %v998 = vrot.slane %v979, 1
      %v999 = vrot.slane %v981, 1
      %v1000 = vsel %vm994, %v998, %v999
      %v1001 = vrot.slane %v982, 1
      %v1002 = vrot.slane %v984, 1
      %v1003 = vsel %vm994, %v1001, %v1002
      %v1004 = vrot.slane %v983, 1
      %v1005 = vrot.slane %v985, 1
      %v1006 = vsel %vm994, %v1004, %v1005
      %v1015 = vadd.f32 %v964, %v997
      %v1016 = vadd.f32 %v965, %v1000
      %v1017 = vadd.f32 %v966, %v996
      %v1018 = vadd.f32 %v967, %v999
      %v1019 = vadd.f32 %v968, %v1003
      %v1020 = vadd.f32 %v969, %v1006
      %v1021 = vadd.f32 %v970, %v1002
      %v1022 = vadd.f32 %v971, %v1005
      %v1023 = vperm.slane %v942, 2
      %v1024 = vperm.slane %v942, 6
      %v1027 = vperm.slane %v1023, 2
      %v1028 = vperm.slane %v1024, 2
      %v1029 = vmul.f32 %v876, %v1027
      %v1030 = vmul.f32 %v895, %v1028
      %v1031 = vmul.f32 %v878, %v1027
      %v1032 = vmul.f32 %v897, %v1028
      %v1033 = vmul.f32 %v881, %v1027
      %v1034 = vmul.f32 %v900, %v1028
      %v1035 = vmul.f32 %v883, %v1027
      %v1036 = vmul.f32 %v902, %v1028
      %vm1045 = vcmask 1045504
      %v1046 = vrot.slane %v1029, 2
      %v1047 = vrot.slane %v1031, 2
      %v1048 = vsel %vm1045, %v1046, %v1047
      %v1049 = vrot.slane %v1030, 2
      %v1050 = vrot.slane %v1032, 2
      %v1051 = vsel %vm1045, %v1049, %v1050
      %v1052 = vrot.slane %v1033, 2
      %v1053 = vrot.slane %v1035, 2
      %v1054 = vsel %vm1045, %v1052, %v1053
      %v1055 = vrot.slane %v1034, 2
      %v1056 = vrot.slane %v1036, 2
      %v1057 = vsel %vm1045, %v1055, %v1056
      %v1066 = vadd.f32 %v1015, %v1048
      %v1067 = vadd.f32 %v1016, %v1051
      %v1068 = vadd.f32 %v1017, %v1047
      %v1069 = vadd.f32 %v1018, %v1050
      %v1070 = vadd.f32 %v1019, %v1054
      %v1071 = vadd.f32 %v1020, %v1057
      %v1072 = vadd.f32 %v1021, %v1053
      %v1073 = vadd.f32 %v1022, %v1056
      %v1074 = vperm.slane %v942, 3
      %v1075 = vperm.slane %v942, 7
      %v1078 = vperm.slane %v1074, 3
      %v1079 = vperm.slane %v1075, 3
      %v1080 = vmul.f32 %v876, %v1078
      %v1081 = vmul.f32 %v895, %v1079
      %v1082 = vmul.f32 %v878, %v1078
      %v1083 = vmul.f32 %v897, %v1079
      %v1084 = vmul.f32 %v881, %v1078
      %v1085 = vmul.f32 %v900, %v1079
      %v1086 = vmul.f32 %v883, %v1078
      %v1087 = vmul.f32 %v902, %v1079
      %vm1096 = vcmask 1044480
      %v1097 = vrot.slane %v1080, 3
      %v1098 = vrot.slane %v1082, 3
      %v1099 = vsel %vm1096, %v1097, %v1098
      %v1100 = vrot.slane %v1081, 3
      %v1101 = vrot.slane %v1083, 3
      %v1102 = vsel %vm1096, %v1100, %v1101
      %v1103 = vrot.slane %v1084, 3
      %v1104 = vrot.slane %v1086, 3
      %v1105 = vsel %vm1096, %v1103, %v1104
      %v1106 = vrot.slane %v1085, 3
      %v1107 = vrot.slane %v1087, 3
      %v1108 = vsel %vm1096, %v1106, %v1107
      %v1117 = vadd.f32 %v1066, %v1099
      %v1118 = vadd.f32 %v1067, %v1102
      %v1119 = vadd.f32 %v1068, %v1098
      %v1120 = vadd.f32 %v1069, %v1101
      %v1121 = vadd.f32 %v1070, %v1105
      %v1122 = vadd.f32 %v1071, %v1108
      %v1123 = vadd.f32 %v1072, %v1104
      %v1124 = vadd.f32 %v1073, %v1107
      %v1125 = vxor.u32 %v1117, 2147483648
      %v1126 = vxor.u32 %v1118, 2147483648
      %v1127 = vxor.u32 %v1119, 2147483648
      %v1128 = vxor.u32 %v1120, 2147483648
      %v1129 = vxor.u32 %v1121, 2147483648
      %v1130 = vxor.u32 %v1122, 2147483648
      %v1131 = vxor.u32 %v1123, 2147483648
      %v1132 = vxor.u32 %v1124, 2147483648
      %v1133 = vmul.f32 %v1125, 1.442695
      %v1134 = vpow.pop %v1133
      %v1135 = vmul.f32 %v1126, 1.442695
      %v1136 = vpow.pop %v1135
      %v1137 = vmul.f32 %v1127, 1.442695
      %v1138 = vpow.pop %v1137
      %v1139 = vmul.f32 %v1128, 1.442695
      %v1140 = vpow.pop %v1139
      %v1141 = vmul.f32 %v1129, 1.442695
      %v1142 = vpow.pop %v1141
      %v1143 = vmul.f32 %v1130, 1.442695
      %v1144 = vpow.pop %v1143
      %v1145 = vmul.f32 %v1131, 1.442695
      %v1146 = vpow.pop %v1145
      %v1147 = vmul.f32 %v1132, 1.442695
      %v1148 = vpow.pop %v1147
      %v1149 = vadd.f32 %v1134, 1.0
      %v1150 = vadd.f32 %v1136, 1.0
      %v1151 = vadd.f32 %v1138, 1.0
      %v1152 = vadd.f32 %v1140, 1.0
      %v1153 = vadd.f32 %v1142, 1.0
      %v1154 = vadd.f32 %v1144, 1.0
      %v1155 = vadd.f32 %v1146, 1.0
      %v1156 = vadd.f32 %v1148, 1.0
      %v1157 = vrcp.pop %v1149
      %v1158 = vmul.f32 %v1149, %v1157
      %v1159 = vsub.f32 1.0, %v1158
      %v1160 = vmul.f32 %v1157, %v1159
      %v1161 = vadd.f32 %v1157, %v1160
      %vm1162 = vweird.f32 %v1149
      %vm1163 = vweird.f32 %v1157
      %vm1164 = vmor %vm1162, %vm1163
      %v1165 = vsel %vm1164, %v1157, %v1161
      %v1166 = vand.u32 2147483647, %v1149
      %vm1167 = vcmp.eq.f32.partialorder %v1166, 8.507059e+37
      %v1168 = vand.u32 %v1149, 2147483648
      %v1169 = vor.u32 1.1754944e-38, %v1168
      %v1170 = vsel %vm1167, %v1169, %v1165
      %v1171 = vmul.f32 1.0, %v1170
      %v1172 = vrcp.pop %v1150
      %v1173 = vmul.f32 %v1150, %v1172
      %v1174 = vsub.f32 1.0, %v1173
      %v1175 = vmul.f32 %v1172, %v1174
      %v1176 = vadd.f32 %v1172, %v1175
      %vm1177 = vweird.f32 %v1150
      %vm1178 = vweird.f32 %v1172
      %vm1179 = vmor %vm1177, %vm1178
      %v1180 = vsel %vm1179, %v1172, %v1176
      %v1181 = vand.u32 2147483647, %v1150
      %vm1182 = vcmp.eq.f32.partialorder %v1181, 8.507059e+37
      %v1183 = vand.u32 %v1150, 2147483648
      %v1184 = vor.u32 1.1754944e-38, %v1183
      %v1185 = vsel %vm1182, %v1184, %v1180
      %v1186 = vmul.f32 1.0, %v1185
      %v1187 = vrcp.pop %v1151
      %v1188 = vmul.f32 %v1151, %v1187
      %v1189 = vsub.f32 1.0, %v1188
      %v1190 = vmul.f32 %v1187, %v1189
      %v1191 = vadd.f32 %v1187, %v1190
      %vm1192 = vweird.f32 %v1151
      %vm1193 = vweird.f32 %v1187
      %vm1194 = vmor %vm1192, %vm1193
      %v1195 = vsel %vm1194, %v1187, %v1191
      %v1196 = vand.u32 2147483647, %v1151
      %vm1197 = vcmp.eq.f32.partialorder %v1196, 8.507059e+37
      %v1198 = vand.u32 %v1151, 2147483648
      %v1199 = vor.u32 1.1754944e-38, %v1198
      %v1200 = vsel %vm1197, %v1199, %v1195
      %v1201 = vmul.f32 1.0, %v1200
      %v1202 = vrcp.pop %v1152
      %v1203 = vmul.f32 %v1152, %v1202
      %v1204 = vsub.f32 1.0, %v1203
      %v1205 = vmul.f32 %v1202, %v1204
      %v1206 = vadd.f32 %v1202, %v1205
      %vm1207 = vweird.f32 %v1152
      %vm1208 = vweird.f32 %v1202
      %vm1209 = vmor %vm1207, %vm1208
      %v1210 = vsel %vm1209, %v1202, %v1206
      %v1211 = vand.u32 2147483647, %v1152
      %vm1212 = vcmp.eq.f32.partialorder %v1211, 8.507059e+37
      %v1213 = vand.u32 %v1152, 2147483648
      %v1214 = vor.u32 1.1754944e-38, %v1213
      %v1215 = vsel %vm1212, %v1214, %v1210
      %v1216 = vmul.f32 1.0, %v1215
      %v1217 = vrcp.pop %v1153
      %v1218 = vmul.f32 %v1153, %v1217
      %v1219 = vsub.f32 1.0, %v1218
      %v1220 = vmul.f32 %v1217, %v1219
      %v1221 = vadd.f32 %v1217, %v1220
      %vm1222 = vweird.f32 %v1153
      %vm1223 = vweird.f32 %v1217
      %vm1224 = vmor %vm1222, %vm1223
      %v1225 = vsel %vm1224, %v1217, %v1221
      %v1226 = vand.u32 2147483647, %v1153
      %vm1227 = vcmp.eq.f32.partialorder %v1226, 8.507059e+37
      %v1228 = vand.u32 %v1153, 2147483648
      %v1229 = vor.u32 1.1754944e-38, %v1228
      %v1230 = vsel %vm1227, %v1229, %v1225
      %v1231 = vmul.f32 1.0, %v1230
      %v1232 = vrcp.pop %v1154
      %v1233 = vmul.f32 %v1154, %v1232
      %v1234 = vsub.f32 1.0, %v1233
      %v1235 = vmul.f32 %v1232, %v1234
      %v1236 = vadd.f32 %v1232, %v1235
      %vm1237 = vweird.f32 %v1154
      %vm1238 = vweird.f32 %v1232
      %vm1239 = vmor %vm1237, %vm1238
      %v1240 = vsel %vm1239, %v1232, %v1236
      %v1241 = vand.u32 2147483647, %v1154
      %vm1242 = vcmp.eq.f32.partialorder %v1241, 8.507059e+37
      %v1243 = vand.u32 %v1154, 2147483648
      %v1244 = vor.u32 1.1754944e-38, %v1243
      %v1245 = vsel %vm1242, %v1244, %v1240
      %v1246 = vmul.f32 1.0, %v1245
      %v1247 = vrcp.pop %v1155
      %v1248 = vmul.f32 %v1155, %v1247
      %v1249 = vsub.f32 1.0, %v1248
      %v1250 = vmul.f32 %v1247, %v1249
      %v1251 = vadd.f32 %v1247, %v1250
      %vm1252 = vweird.f32 %v1155
      %vm1253 = vweird.f32 %v1247
      %vm1254 = vmor %vm1252, %vm1253
      %v1255 = vsel %vm1254, %v1247, %v1251
      %v1256 = vand.u32 2147483647, %v1155
      %vm1257 = vcmp.eq.f32.partialorder %v1256, 8.507059e+37
      %v1258 = vand.u32 %v1155, 2147483648
      %v1259 = vor.u32 1.1754944e-38, %v1258
      %v1260 = vsel %vm1257, %v1259, %v1255
      %v1261 = vmul.f32 1.0, %v1260
      %v1262 = vrcp.pop %v1156
      %v1263 = vmul.f32 %v1156, %v1262
      %v1264 = vsub.f32 1.0, %v1263
      %v1265 = vmul.f32 %v1262, %v1264
      %v1266 = vadd.f32 %v1262, %v1265
      %vm1267 = vweird.f32 %v1156
      %vm1268 = vweird.f32 %v1262
      %vm1269 = vmor %vm1267, %vm1268
      %v1270 = vsel %vm1269, %v1262, %v1266
      %v1271 = vand.u32 2147483647, %v1156
      %vm1272 = vcmp.eq.f32.partialorder %v1271, 8.507059e+37
      %v1273 = vand.u32 %v1156, 2147483648
      %v1274 = vor.u32 1.1754944e-38, %v1273
      %v1275 = vsel %vm1272, %v1274, %v1270
      %v1276 = vmul.f32 1.0, %v1275
      %v1277 = vmul.f32 %v1117, %v1171
      %v1278 = vmul.f32 %v1118, %v1186
      %v1279 = vmul.f32 %v1119, %v1201
      %v1280 = vmul.f32 %v1120, %v1216
      %v1281 = vmul.f32 %v1121, %v1231
      %v1282 = vmul.f32 %v1122, %v1246
      %v1283 = vmul.f32 %v1123, %v1261
      %v1284 = vmul.f32 %v1124, %v1276
      %vm1293 = vcmask 1042432
      %v1294 = vrot.slane %v1277, 5
      %v1295 = vrot.slane %v1278, 5
      %v1296 = vrot.slane %v1279, 5
      %v1297 = vsel %vm1293, %v1294, %v1296
      %v1298 = vrot.slane %v1280, 5
      %v1299 = vsel %vm1293, %v1295, %v1298
      %v1300 = vrot.slane %v1281, 5
      %v1301 = vrot.slane %v1282, 5
      %v1302 = vrot.slane %v1283, 5
      %v1303 = vsel %vm1293, %v1300, %v1302
      %v1304 = vrot.slane %v1284, 5
      %v1305 = vsel %vm1293, %v1301, %v1304
      %v1314 = vsel %vm1293, 0.0, %v1294
      %v1315 = vsel %vm1293, 0.0, %v1295
      %v1316 = vsel %vm1293, 0.0, %v1300
      %v1317 = vsel %vm1293, 0.0, %v1301
      %v1318 = vsel %vm994, %v1297, 0.0
      %v1319 = vsel %vm994, %v1299, 0.0
      %v1320 = vsel %vm994, %v1303, 0.0
      %v1321 = vsel %vm994, %v1305, 0.0
      %v1322 = vpack.c.bf16 %v1318, %v1314
      %v1323 = vpack.c.bf16 %v1319, %v1315
      %v1324 = vpack.c.bf16 %v1320, %v1316
      %v1325 = vpack.c.bf16 %v1321, %v1317
      %v1326 = vld [vmem:[%s9] sm:$0xff]
      %v1327 = vld [vmem:[%s9 + $0x8] sm:$0xff]
      %v1328 = vld [vmem:[%s9 + $0x10] sm:$0xff]
      %v1329 = vld [vmem:[%s9 + $0x18] sm:$0xff]
      %v1330 = vld [vmem:[%s9 + $0x20] sm:$0xff]
      %v1331 = vld [vmem:[%s9 + $0x28] sm:$0xff]
      %v1332 = vld [vmem:[%s9 + $0x30] sm:$0xff]
      %v1333 = vld [vmem:[%s9 + $0x38] sm:$0xff]
      %v1334 = vld [vmem:[%s9 + $0x40] sm:$0xff]
      %v1335 = vld [vmem:[%s9 + $0x48] sm:$0xff]
      %v1336 = vld [vmem:[%s9 + $0x50] sm:$0xff]
      %v1337 = vld [vmem:[%s9 + $0x58] sm:$0xff]
      %v1338 = vld [vmem:[%s9 + $0x60] sm:$0xff]
      %v1339 = vld [vmem:[%s9 + $0x68] sm:$0xff]
      %v1340 = vld [vmem:[%s9 + $0x70] sm:$0xff]
      %v1341 = vld [vmem:[%s9 + $0x78] sm:$0xff]
      %v1342 = vld [vmem:[%s9 + $0x80] sm:$0xff]
      %v1343 = vld [vmem:[%s9 + $0x88] sm:$0xff]
      %v1344 = vld [vmem:[%s9 + $0x90] sm:$0xff]
      %v1345 = vld [vmem:[%s9 + $0x98] sm:$0xff]
      %v1346 = vld [vmem:[%s9 + $0xa0] sm:$0xff]
      %v1347 = vld [vmem:[%s9 + $0xa8] sm:$0xff]
      %v1348 = vld [vmem:[%s9 + $0xb0] sm:$0xff]
      %v1349 = vld [vmem:[%s9 + $0xb8] sm:$0xff]
      %v1350 = vld [vmem:[%s9 + $0xc0] sm:$0xff]
      %v1351 = vld [vmem:[%s9 + $0xc8] sm:$0xff]
      %v1352 = vld [vmem:[%s9 + $0xd0] sm:$0xff]
      %v1353 = vld [vmem:[%s9 + $0xd8] sm:$0xff]
      %v1354 = vld [vmem:[%s9 + $0xe0] sm:$0xff]
      %v1355 = vld [vmem:[%s9 + $0xe8] sm:$0xff]
      %v1356 = vld [vmem:[%s9 + $0xf0] sm:$0xff]
      %v1357 = vld [vmem:[%s9 + $0xf8] sm:$0xff]
      %v1358 = vld [vmem:[%s9 + $0x100] sm:$0xff]
      %v1359 = vld [vmem:[%s9 + $0x108] sm:$0xff]
      %v1360 = vld [vmem:[%s9 + $0x110] sm:$0xff]
      %v1361 = vld [vmem:[%s9 + $0x118] sm:$0xff]
      %v1362 = vld [vmem:[%s9 + $0x120] sm:$0xff]
      %v1363 = vld [vmem:[%s9 + $0x128] sm:$0xff]
      %v1364 = vld [vmem:[%s9 + $0x130] sm:$0xff]
      %v1365 = vld [vmem:[%s9 + $0x138] sm:$0xff]
      %v1366 = vld [vmem:[%s9 + $0x140] sm:$0xff]
      %v1367 = vld [vmem:[%s9 + $0x148] sm:$0xff]
      %v1368 = vld [vmem:[%s9 + $0x150] sm:$0xff]
      %v1369 = vld [vmem:[%s9 + $0x158] sm:$0xff]
      %v1370 = vld [vmem:[%s9 + $0x160] sm:$0xff]
      %v1371 = vld [vmem:[%s9 + $0x168] sm:$0xff]
      %v1372 = vld [vmem:[%s9 + $0x170] sm:$0xff]
      %v1373 = vld [vmem:[%s9 + $0x178] sm:$0xff]
      %v1374 = vld [vmem:[%s9 + $0x180] sm:$0xff]
      %v1375 = vld [vmem:[%s9 + $0x188] sm:$0xff]
      %v1376 = vld [vmem:[%s9 + $0x190] sm:$0xff]
      %v1377 = vld [vmem:[%s9 + $0x198] sm:$0xff]
      %v1378 = vld [vmem:[%s9 + $0x1a0] sm:$0xff]
      %v1379 = vld [vmem:[%s9 + $0x1a8] sm:$0xff]
      %v1380 = vld [vmem:[%s9 + $0x1b0] sm:$0xff]
      %v1381 = vld [vmem:[%s9 + $0x1b8] sm:$0xff]
      %v1382 = vld [vmem:[%s9 + $0x1c0] sm:$0xff]
      %v1383 = vld [vmem:[%s9 + $0x1c8] sm:$0xff]
      %v1384 = vld [vmem:[%s9 + $0x1d0] sm:$0xff]
      %v1385 = vld [vmem:[%s9 + $0x1d8] sm:$0xff]
      %v1386 = vld [vmem:[%s9 + $0x1e0] sm:$0xff]
      %v1387 = vld [vmem:[%s9 + $0x1e8] sm:$0xff]
      %v1388 = vld [vmem:[%s9 + $0x1f0] sm:$0xff]
      %v1389 = vld [vmem:[%s9 + $0x1f8] sm:$0xff]
      %v1454 = vunpack.c.l.b16 %v1326
      %v1455 = vunpack.c.h.b16 %v1326
      %v1456 = vunpack.c.l.b16 %v1327
      %v1457 = vunpack.c.h.b16 %v1327
      %v1458 = vunpack.c.l.b16 %v1328
      %v1459 = vunpack.c.h.b16 %v1328
      %v1460 = vunpack.c.l.b16 %v1329
      %v1461 = vunpack.c.h.b16 %v1329
      %v1462 = vunpack.c.l.b16 %v1330
      %v1463 = vunpack.c.h.b16 %v1330
      %v1464 = vunpack.c.l.b16 %v1331
      %v1465 = vunpack.c.h.b16 %v1331
      %v1466 = vunpack.c.l.b16 %v1332
      %v1467 = vunpack.c.h.b16 %v1332
      %v1468 = vunpack.c.l.b16 %v1333
      %v1469 = vunpack.c.h.b16 %v1333
      %v1470 = vunpack.c.l.b16 %v1334
      %v1471 = vunpack.c.h.b16 %v1334
      %v1472 = vunpack.c.l.b16 %v1335
      %v1473 = vunpack.c.h.b16 %v1335
      %v1474 = vunpack.c.l.b16 %v1336
      %v1475 = vunpack.c.h.b16 %v1336
      %v1476 = vunpack.c.l.b16 %v1337
      %v1477 = vunpack.c.h.b16 %v1337
      %v1478 = vunpack.c.l.b16 %v1338
      %v1479 = vunpack.c.h.b16 %v1338
      %v1480 = vunpack.c.l.b16 %v1339
      %v1481 = vunpack.c.h.b16 %v1339
      %v1482 = vunpack.c.l.b16 %v1340
      %v1483 = vunpack.c.h.b16 %v1340
      %v1484 = vunpack.c.l.b16 %v1341
      %v1485 = vunpack.c.h.b16 %v1341
      %v1486 = vunpack.c.l.b16 %v1342
      %v1487 = vunpack.c.h.b16 %v1342
      %v1488 = vunpack.c.l.b16 %v1343
      %v1489 = vunpack.c.h.b16 %v1343
      %v1490 = vunpack.c.l.b16 %v1344
      %v1491 = vunpack.c.h.b16 %v1344
      %v1492 = vunpack.c.l.b16 %v1345
      %v1493 = vunpack.c.h.b16 %v1345
      %v1494 = vunpack.c.l.b16 %v1346
      %v1495 = vunpack.c.h.b16 %v1346
      %v1496 = vunpack.c.l.b16 %v1347
      %v1497 = vunpack.c.h.b16 %v1347
      %v1498 = vunpack.c.l.b16 %v1348
      %v1499 = vunpack.c.h.b16 %v1348
      %v1500 = vunpack.c.l.b16 %v1349
      %v1501 = vunpack.c.h.b16 %v1349
      %v1502 = vunpack.c.l.b16 %v1350
      %v1503 = vunpack.c.h.b16 %v1350
      %v1504 = vunpack.c.l.b16 %v1351
      %v1505 = vunpack.c.h.b16 %v1351
      %v1506 = vunpack.c.l.b16 %v1352
      %v1507 = vunpack.c.h.b16 %v1352
      %v1508 = vunpack.c.l.b16 %v1353
      %v1509 = vunpack.c.h.b16 %v1353
      %v1510 = vunpack.c.l.b16 %v1354
      %v1511 = vunpack.c.h.b16 %v1354
      %v1512 = vunpack.c.l.b16 %v1355
      %v1513 = vunpack.c.h.b16 %v1355
      %v1514 = vunpack.c.l.b16 %v1356
      %v1515 = vunpack.c.h.b16 %v1356
      %v1516 = vunpack.c.l.b16 %v1357
      %v1517 = vunpack.c.h.b16 %v1357
      %v1518 = vunpack.c.l.b16 %v1358
      %v1519 = vunpack.c.h.b16 %v1358
      %v1520 = vunpack.c.l.b16 %v1359
      %v1521 = vunpack.c.h.b16 %v1359
      %v1522 = vunpack.c.l.b16 %v1360
      %v1523 = vunpack.c.h.b16 %v1360
      %v1524 = vunpack.c.l.b16 %v1361
      %v1525 = vunpack.c.h.b16 %v1361
      %v1526 = vunpack.c.l.b16 %v1362
      %v1527 = vunpack.c.h.b16 %v1362
      %v1528 = vunpack.c.l.b16 %v1363
      %v1529 = vunpack.c.h.b16 %v1363
      %v1530 = vunpack.c.l.b16 %v1364
      %v1531 = vunpack.c.h.b16 %v1364
      %v1532 = vunpack.c.l.b16 %v1365
      %v1533 = vunpack.c.h.b16 %v1365
      %v1534 = vunpack.c.l.b16 %v1366
      %v1535 = vunpack.c.h.b16 %v1366
      %v1536 = vunpack.c.l.b16 %v1367
      %v1537 = vunpack.c.h.b16 %v1367
      %v1538 = vunpack.c.l.b16 %v1368
      %v1539 = vunpack.c.h.b16 %v1368
      %v1540 = vunpack.c.l.b16 %v1369
      %v1541 = vunpack.c.h.b16 %v1369
      %v1542 = vunpack.c.l.b16 %v1370
      %v1543 = vunpack.c.h.b16 %v1370
      %v1544 = vunpack.c.l.b16 %v1371
      %v1545 = vunpack.c.h.b16 %v1371
      %v1546 = vunpack.c.l.b16 %v1372
      %v1547 = vunpack.c.h.b16 %v1372
      %v1548 = vunpack.c.l.b16 %v1373
      %v1549 = vunpack.c.h.b16 %v1373
      %v1550 = vunpack.c.l.b16 %v1374
      %v1551 = vunpack.c.h.b16 %v1374
      %v1552 = vunpack.c.l.b16 %v1375
      %v1553 = vunpack.c.h.b16 %v1375
      %v1554 = vunpack.c.l.b16 %v1376
      %v1555 = vunpack.c.h.b16 %v1376
      %v1556 = vunpack.c.l.b16 %v1377
      %v1557 = vunpack.c.h.b16 %v1377
      %v1558 = vunpack.c.l.b16 %v1378
      %v1559 = vunpack.c.h.b16 %v1378
      %v1560 = vunpack.c.l.b16 %v1379
      %v1561 = vunpack.c.h.b16 %v1379
      %v1562 = vunpack.c.l.b16 %v1380
      %v1563 = vunpack.c.h.b16 %v1380
      %v1564 = vunpack.c.l.b16 %v1381
      %v1565 = vunpack.c.h.b16 %v1381
      %v1566 = vunpack.c.l.b16 %v1382
      %v1567 = vunpack.c.h.b16 %v1382
      %v1568 = vunpack.c.l.b16 %v1383
      %v1569 = vunpack.c.h.b16 %v1383
      %v1570 = vunpack.c.l.b16 %v1384
      %v1571 = vunpack.c.h.b16 %v1384
      %v1572 = vunpack.c.l.b16 %v1385
      %v1573 = vunpack.c.h.b16 %v1385
      %v1574 = vunpack.c.l.b16 %v1386
      %v1575 = vunpack.c.h.b16 %v1386
      %v1576 = vunpack.c.l.b16 %v1387
      %v1577 = vunpack.c.h.b16 %v1387
      %v1578 = vunpack.c.l.b16 %v1388
      %v1579 = vunpack.c.h.b16 %v1388
      %v1580 = vunpack.c.l.b16 %v1389
      %v1581 = vunpack.c.h.b16 %v1389
      %v1582 = vpack.c.b16 %v1458, %v1454
      %v1583 = vpack.c.b16 %v1459, %v1455
      %v1584 = vpack.c.b16 %v1460, %v1456
      %v1585 = vpack.c.b16 %v1461, %v1457
      %v1586 = vpack.c.b16 %v1466, %v1462
      %v1587 = vpack.c.b16 %v1467, %v1463
      %v1588 = vpack.c.b16 %v1468, %v1464
      %v1589 = vpack.c.b16 %v1469, %v1465
      %v1590 = vpack.c.b16 %v1474, %v1470
      %v1591 = vpack.c.b16 %v1475, %v1471
      %v1592 = vpack.c.b16 %v1476, %v1472
      %v1593 = vpack.c.b16 %v1477, %v1473
      %v1594 = vpack.c.b16 %v1482, %v1478
      %v1595 = vpack.c.b16 %v1483, %v1479
      %v1596 = vpack.c.b16 %v1484, %v1480
      %v1597 = vpack.c.b16 %v1485, %v1481
      %v1598 = vpack.c.b16 %v1490, %v1486
      %v1599 = vpack.c.b16 %v1491, %v1487
      %v1600 = vpack.c.b16 %v1492, %v1488
      %v1601 = vpack.c.b16 %v1493, %v1489
      %v1602 = vpack.c.b16 %v1498, %v1494
      %v1603 = vpack.c.b16 %v1499, %v1495
      %v1604 = vpack.c.b16 %v1500, %v1496
      %v1605 = vpack.c.b16 %v1501, %v1497
      %v1606 = vpack.c.b16 %v1506, %v1502
      %v1607 = vpack.c.b16 %v1507, %v1503
      %v1608 = vpack.c.b16 %v1508, %v1504
      %v1609 = vpack.c.b16 %v1509, %v1505
      %v1610 = vpack.c.b16 %v1514, %v1510
      %v1611 = vpack.c.b16 %v1515, %v1511
      %v1612 = vpack.c.b16 %v1516, %v1512
      %v1613 = vpack.c.b16 %v1517, %v1513
      %v1614 = vpack.c.b16 %v1522, %v1518
      %v1615 = vpack.c.b16 %v1523, %v1519
      %v1616 = vpack.c.b16 %v1524, %v1520
      %v1617 = vpack.c.b16 %v1525, %v1521
      %v1618 = vpack.c.b16 %v1530, %v1526
      %v1619 = vpack.c.b16 %v1531, %v1527
      %v1620 = vpack.c.b16 %v1532, %v1528
      %v1621 = vpack.c.b16 %v1533, %v1529
      %v1622 = vpack.c.b16 %v1538, %v1534
      %v1623 = vpack.c.b16 %v1539, %v1535
      %v1624 = vpack.c.b16 %v1540, %v1536
      %v1625 = vpack.c.b16 %v1541, %v1537
      %v1626 = vpack.c.b16 %v1546, %v1542
      %v1627 = vpack.c.b16 %v1547, %v1543
      %v1628 = vpack.c.b16 %v1548, %v1544
      %v1629 = vpack.c.b16 %v1549, %v1545
      %v1630 = vpack.c.b16 %v1554, %v1550
      %v1631 = vpack.c.b16 %v1555, %v1551
      %v1632 = vpack.c.b16 %v1556, %v1552
      %v1633 = vpack.c.b16 %v1557, %v1553
      %v1634 = vpack.c.b16 %v1562, %v1558
      %v1635 = vpack.c.b16 %v1563, %v1559
      %v1636 = vpack.c.b16 %v1564, %v1560
      %v1637 = vpack.c.b16 %v1565, %v1561
      %v1638 = vpack.c.b16 %v1570, %v1566
      %v1639 = vpack.c.b16 %v1571, %v1567
      %v1640 = vpack.c.b16 %v1572, %v1568
      %v1641 = vpack.c.b16 %v1573, %v1569
      %v1642 = vpack.c.b16 %v1578, %v1574
      %v1643 = vpack.c.b16 %v1579, %v1575
      %v1644 = vpack.c.b16 %v1580, %v1576
      %v1645 = vpack.c.b16 %v1581, %v1577
      %1710 = vmatpush.bf16.msra.mxu0 %v1610
      %1711 = vmatpush.bf16.msra.mxu0 %v1606
      %1712 = vmatpush.bf16.msra.mxu0 %v1602
      %1713 = vmatpush.bf16.msra.mxu0 %v1598
      %1714 = vmatpush.bf16.msra.mxu0 %v1594
      %1715 = vmatpush.bf16.msra.mxu0 %v1590
      %1716 = vmatpush.bf16.msra.mxu0 %v1586
      %1717 = vmatpush.bf16.msra.mxu0 %v1582
      %1718 = vmatmul.bf16.gmra.mxu0 %v1322
      %v1719 = vpop.f32.mrf.mxu0
      %v1720 = vadd.f32 0.0, %v1719
      %v1721 = vpop.f32.mrf.mxu0
      %v1722 = vadd.f32 0.0, %v1721
      %1723 = vmatmul.bf16.gmra.mxu0 %v1324
      %v1724 = vpop.f32.mrf.mxu0
      %v1725 = vadd.f32 0.0, %v1724
      %v1726 = vpop.f32.mrf.mxu0
      %v1727 = vadd.f32 0.0, %v1726
      %1728 = vdwg.mxu0
      %1729 = vmatpush.bf16.msra.mxu0 %v1642
      %1730 = vmatpush.bf16.msra.mxu0 %v1638
      %1731 = vmatpush.bf16.msra.mxu0 %v1634
      %1732 = vmatpush.bf16.msra.mxu0 %v1630
      %1733 = vmatpush.bf16.msra.mxu0 %v1626
      %1734 = vmatpush.bf16.msra.mxu0 %v1622
      %1735 = vmatpush.bf16.msra.mxu0 %v1618
      %1736 = vmatpush.bf16.msra.mxu0 %v1614
      %1737 = vmatmul.bf16.gmra.mxu0 %v1323
      %v1738 = vpop.f32.mrf.mxu0
      %v1739 = vadd.f32 %v1720, %v1738
      %v1740 = vpop.f32.mrf.mxu0
      %v1741 = vadd.f32 %v1722, %v1740
      %1742 = vmatmul.bf16.gmra.mxu0 %v1325
      %v1743 = vpop.f32.mrf.mxu0
      %v1744 = vadd.f32 %v1725, %v1743
      %v1745 = vpop.f32.mrf.mxu0
      %v1746 = vadd.f32 %v1727, %v1745
      %1747 = vdwg.mxu0
      %1748 = vmatpush.bf16.msra.mxu0 %v1611
      %1749 = vmatpush.bf16.msra.mxu0 %v1607
      %1750 = vmatpush.bf16.msra.mxu0 %v1603
      %1751 = vmatpush.bf16.msra.mxu0 %v1599
      %1752 = vmatpush.bf16.msra.mxu0 %v1595
      %1753 = vmatpush.bf16.msra.mxu0 %v1591
      %1754 = vmatpush.bf16.msra.mxu0 %v1587
      %1755 = vmatpush.bf16.msra.mxu0 %v1583
      %1756 = vmatmul.bf16.gmra.mxu0 %v1322
      %v1757 = vpop.f32.mrf.mxu0
      %v1758 = vadd.f32 0.0, %v1757
      %v1759 = vpop.f32.mrf.mxu0
      %v1760 = vadd.f32 0.0, %v1759
      %1761 = vmatmul.bf16.gmra.mxu0 %v1324
      %v1762 = vpop.f32.mrf.mxu0
      %v1763 = vadd.f32 0.0, %v1762
      %v1764 = vpop.f32.mrf.mxu0
      %v1765 = vadd.f32 0.0, %v1764
      %1766 = vdwg.mxu0
      %1767 = vmatpush.bf16.msra.mxu0 %v1643
      %1768 = vmatpush.bf16.msra.mxu0 %v1639
      %1769 = vmatpush.bf16.msra.mxu0 %v1635
      %1770 = vmatpush.bf16.msra.mxu0 %v1631
      %1771 = vmatpush.bf16.msra.mxu0 %v1627
      %1772 = vmatpush.bf16.msra.mxu0 %v1623
      %1773 = vmatpush.bf16.msra.mxu0 %v1619
      %1774 = vmatpush.bf16.msra.mxu0 %v1615
      %1775 = vmatmul.bf16.gmra.mxu0 %v1323
      %v1776 = vpop.f32.mrf.mxu0
      %v1777 = vadd.f32 %v1758, %v1776
      %v1778 = vpop.f32.mrf.mxu0
      %v1779 = vadd.f32 %v1760, %v1778
      %1780 = vmatmul.bf16.gmra.mxu0 %v1325
      %v1781 = vpop.f32.mrf.mxu0
      %v1782 = vadd.f32 %v1763, %v1781
      %v1783 = vpop.f32.mrf.mxu0
      %v1784 = vadd.f32 %v1765, %v1783
      %1785 = vdwg.mxu0
      %1786 = vmatpush.bf16.msra.mxu0 %v1612
      %1787 = vmatpush.bf16.msra.mxu0 %v1608
      %1788 = vmatpush.bf16.msra.mxu0 %v1604
      %1789 = vmatpush.bf16.msra.mxu0 %v1600
      %1790 = vmatpush.bf16.msra.mxu0 %v1596
      %1791 = vmatpush.bf16.msra.mxu0 %v1592
      %1792 = vmatpush.bf16.msra.mxu0 %v1588
      %1793 = vmatpush.bf16.msra.mxu0 %v1584
      %1794 = vmatmul.bf16.gmra.mxu0 %v1322
      %v1795 = vpop.f32.mrf.mxu0
      %v1796 = vadd.f32 0.0, %v1795
      %v1797 = vpop.f32.mrf.mxu0
      %v1798 = vadd.f32 0.0, %v1797
      %1799 = vmatmul.bf16.gmra.mxu0 %v1324
      %v1800 = vpop.f32.mrf.mxu0
      %v1801 = vadd.f32 0.0, %v1800
      %v1802 = vpop.f32.mrf.mxu0
      %v1803 = vadd.f32 0.0, %v1802
      %1804 = vdwg.mxu0
      %1805 = vmatpush.bf16.msra.mxu0 %v1644
      %1806 = vmatpush.bf16.msra.mxu0 %v1640
      %1807 = vmatpush.bf16.msra.mxu0 %v1636
      %1808 = vmatpush.bf16.msra.mxu0 %v1632
      %1809 = vmatpush.bf16.msra.mxu0 %v1628
      %1810 = vmatpush.bf16.msra.mxu0 %v1624
      %1811 = vmatpush.bf16.msra.mxu0 %v1620
      %1812 = vmatpush.bf16.msra.mxu0 %v1616
      %1813 = vmatmul.bf16.gmra.mxu0 %v1323
      %v1814 = vpop.f32.mrf.mxu0
      %v1815 = vadd.f32 %v1796, %v1814
      %v1816 = vpop.f32.mrf.mxu0
      %v1817 = vadd.f32 %v1798, %v1816
      %1818 = vmatmul.bf16.gmra.mxu0 %v1325
      %v1819 = vpop.f32.mrf.mxu0
      %v1820 = vadd.f32 %v1801, %v1819
      %v1821 = vpop.f32.mrf.mxu0
      %v1822 = vadd.f32 %v1803, %v1821
      %1823 = vdwg.mxu0
      %1824 = vmatpush.bf16.msra.mxu0 %v1613
      %1825 = vmatpush.bf16.msra.mxu0 %v1609
      %1826 = vmatpush.bf16.msra.mxu0 %v1605
      %1827 = vmatpush.bf16.msra.mxu0 %v1601
      %1828 = vmatpush.bf16.msra.mxu0 %v1597
      %1829 = vmatpush.bf16.msra.mxu0 %v1593
      %1830 = vmatpush.bf16.msra.mxu0 %v1589
      %1831 = vmatpush.bf16.msra.mxu0 %v1585
      %1832 = vmatmul.bf16.gmra.mxu0 %v1322
      %v1833 = vpop.f32.mrf.mxu0
      %v1834 = vadd.f32 0.0, %v1833
      %v1835 = vpop.f32.mrf.mxu0
      %v1836 = vadd.f32 0.0, %v1835
      %1837 = vmatmul.bf16.gmra.mxu0 %v1324
      %v1838 = vpop.f32.mrf.mxu0
      %v1839 = vadd.f32 0.0, %v1838
      %v1840 = vpop.f32.mrf.mxu0
      %v1841 = vadd.f32 0.0, %v1840
      %1842 = vdwg.mxu0
      %1843 = vmatpush.bf16.msra.mxu0 %v1645
      %1844 = vmatpush.bf16.msra.mxu0 %v1641
      %1845 = vmatpush.bf16.msra.mxu0 %v1637
      %1846 = vmatpush.bf16.msra.mxu0 %v1633
      %1847 = vmatpush.bf16.msra.mxu0 %v1629
      %1848 = vmatpush.bf16.msra.mxu0 %v1625
      %1849 = vmatpush.bf16.msra.mxu0 %v1621
      %1850 = vmatpush.bf16.msra.mxu0 %v1617
      %1851 = vmatmul.bf16.gmra.mxu0 %v1323
      %v1852 = vpop.f32.mrf.mxu0
      %v1853 = vadd.f32 %v1834, %v1852
      %v1854 = vpop.f32.mrf.mxu0
      %v1855 = vadd.f32 %v1836, %v1854
      %1856 = vmatmul.bf16.gmra.mxu0 %v1325
      %v1857 = vpop.f32.mrf.mxu0
      %v1858 = vadd.f32 %v1839, %v1857
      %v1859 = vpop.f32.mrf.mxu0
      %v1860 = vadd.f32 %v1841, %v1859
      %1861 = vdwg.mxu0
      %v1862 = vld [vmem:[%s10] sm:$0x3]
      %v1864 = vperm.slane %v1862, 0
      %v1865 = vperm.slane %v1862, 1
      %v1868 = vadd.f32 %v1739, %v1864
      %v1869 = vadd.f32 %v1777, %v1865
      %v1870 = vadd.f32 %v1741, %v1864
      %v1871 = vadd.f32 %v1779, %v1865
      %v1872 = vadd.f32 %v1744, %v1864
      %v1873 = vadd.f32 %v1782, %v1865
      %v1874 = vadd.f32 %v1746, %v1864
      %v1875 = vadd.f32 %v1784, %v1865
      %v1876 = vmax.f32 %v1868, 0.0
      %v1877 = vmax.f32 %v1869, 0.0
      %v1878 = vmax.f32 %v1870, 0.0
      %v1879 = vmax.f32 %v1871, 0.0
      %v1880 = vmax.f32 %v1872, 0.0
      %v1881 = vmax.f32 %v1873, 0.0
      %v1882 = vmax.f32 %v1874, 0.0
      %v1883 = vmax.f32 %v1875, 0.0
      %vm1884 = vcmp.ne.f32.partialorder %v1868, %v1868
      %vm1885 = vcmp.ne.f32.partialorder %v1869, %v1869
      %vm1886 = vcmp.ne.f32.partialorder %v1870, %v1870
      %vm1887 = vcmp.ne.f32.partialorder %v1871, %v1871
      %vm1888 = vcmp.ne.f32.partialorder %v1872, %v1872
      %vm1889 = vcmp.ne.f32.partialorder %v1873, %v1873
      %vm1890 = vcmp.ne.f32.partialorder %v1874, %v1874
      %vm1891 = vcmp.ne.f32.partialorder %v1875, %v1875
      %v1892 = vadd.f32 %v1868, 0.0
      %v1893 = vadd.f32 %v1869, 0.0
      %v1894 = vadd.f32 %v1870, 0.0
      %v1895 = vadd.f32 %v1871, 0.0
      %v1896 = vadd.f32 %v1872, 0.0
      %v1897 = vadd.f32 %v1873, 0.0
      %v1898 = vadd.f32 %v1874, 0.0
      %v1899 = vadd.f32 %v1875, 0.0
      %v1900 = vand.u32 2147483647, %v1868
      %v1901 = vand.u32 2147483647, %v1869
      %v1902 = vand.u32 2147483647, %v1870
      %v1903 = vand.u32 2147483647, %v1871
      %v1904 = vand.u32 2147483647, %v1872
      %v1905 = vand.u32 2147483647, %v1873
      %v1906 = vand.u32 2147483647, %v1874
      %v1907 = vand.u32 2147483647, %v1875
      %v1908 = vsub.f32 0.0, %v1900
      %v1909 = vsub.f32 0.0, %v1901
      %v1910 = vsub.f32 0.0, %v1902
      %v1911 = vsub.f32 0.0, %v1903
      %v1912 = vsub.f32 0.0, %v1904
      %v1913 = vsub.f32 0.0, %v1905
      %v1914 = vsub.f32 0.0, %v1906
      %v1915 = vsub.f32 0.0, %v1907
      %v1916 = vmul.f32 %v1908, 1.442695
      %v1917 = vpow.pop %v1916
      %v1918 = vmul.f32 %v1909, 1.442695
      %v1919 = vpow.pop %v1918
      %v1920 = vmul.f32 %v1910, 1.442695
      %v1921 = vpow.pop %v1920
      %v1922 = vmul.f32 %v1911, 1.442695
      %v1923 = vpow.pop %v1922
      %v1924 = vmul.f32 %v1912, 1.442695
      %v1925 = vpow.pop %v1924
      %v1926 = vmul.f32 %v1913, 1.442695
      %v1927 = vpow.pop %v1926
      %v1928 = vmul.f32 %v1914, 1.442695
      %v1929 = vpow.pop %v1928
      %v1930 = vmul.f32 %v1915, 1.442695
      %v1931 = vpow.pop %v1930
      %v1932 = vadd.f32 %v1917, 1.0
      %v1933 = vlog2.pop %v1932
      %v1934 = vmul.f32 %v1933, 0.6931472
      %v1935 = vmul.f32 -0.5, %v1917
      %v1936 = vadd.f32 %v1935, 1.0
      %v1937 = vmul.f32 %v1936, %v1917
      %v1938 = vand.u32 2147483647, %v1917
      %vm1939 = vcmp.lt.f32.partialorder %v1938, 0.0004427343
      %v1940 = vsel %vm1939, %v1937, %v1934
      %v1941 = vadd.f32 %v1919, 1.0
      %v1942 = vlog2.pop %v1941
      %v1943 = vmul.f32 %v1942, 0.6931472
      %v1944 = vmul.f32 -0.5, %v1919
      %v1945 = vadd.f32 %v1944, 1.0
      %v1946 = vmul.f32 %v1945, %v1919
      %v1947 = vand.u32 2147483647, %v1919
      %vm1948 = vcmp.lt.f32.partialorder %v1947, 0.0004427343
      %v1949 = vsel %vm1948, %v1946, %v1943
      %v1950 = vadd.f32 %v1921, 1.0
      %v1951 = vlog2.pop %v1950
      %v1952 = vmul.f32 %v1951, 0.6931472
      %v1953 = vmul.f32 -0.5, %v1921
      %v1954 = vadd.f32 %v1953, 1.0
      %v1955 = vmul.f32 %v1954, %v1921
      %v1956 = vand.u32 2147483647, %v1921
      %vm1957 = vcmp.lt.f32.partialorder %v1956, 0.0004427343
      %v1958 = vsel %vm1957, %v1955, %v1952
      %v1959 = vadd.f32 %v1923, 1.0
      %v1960 = vlog2.pop %v1959
      %v1961 = vmul.f32 %v1960, 0.6931472
      %v1962 = vmul.f32 -0.5, %v1923
      %v1963 = vadd.f32 %v1962, 1.0
      %v1964 = vmul.f32 %v1963, %v1923
      %v1965 = vand.u32 2147483647, %v1923
      %vm1966 = vcmp.lt.f32.partialorder %v1965, 0.0004427343
      %v1967 = vsel %vm1966, %v1964, %v1961
      %v1968 = vadd.f32 %v1925, 1.0
      %v1969 = vlog2.pop %v1968
      %v1970 = vmul.f32 %v1969, 0.6931472
      %v1971 = vmul.f32 -0.5, %v1925
      %v1972 = vadd.f32 %v1971, 1.0
      %v1973 = vmul.f32 %v1972, %v1925
      %v1974 = vand.u32 2147483647, %v1925
      %vm1975 = vcmp.lt.f32.partialorder %v1974, 0.0004427343
      %v1976 = vsel %vm1975, %v1973, %v1970
      %v1977 = vadd.f32 %v1927, 1.0
      %v1978 = vlog2.pop %v1977
      %v1979 = vmul.f32 %v1978, 0.6931472
      %v1980 = vmul.f32 -0.5, %v1927
      %v1981 = vadd.f32 %v1980, 1.0
      %v1982 = vmul.f32 %v1981, %v1927
      %v1983 = vand.u32 2147483647, %v1927
      %vm1984 = vcmp.lt.f32.partialorder %v1983, 0.0004427343
      %v1985 = vsel %vm1984, %v1982, %v1979
      %v1986 = vadd.f32 %v1929, 1.0
      %v1987 = vlog2.pop %v1986
      %v1988 = vmul.f32 %v1987, 0.6931472
      %v1989 = vmul.f32 -0.5, %v1929
      %v1990 = vadd.f32 %v1989, 1.0
      %v1991 = vmul.f32 %v1990, %v1929
      %v1992 = vand.u32 2147483647, %v1929
      %vm1993 = vcmp.lt.f32.partialorder %v1992, 0.0004427343
      %v1994 = vsel %vm1993, %v1991, %v1988
      %v1995 = vadd.f32 %v1931, 1.0
      %v1996 = vlog2.pop %v1995
      %v1997 = vmul.f32 %v1996, 0.6931472
      %v1998 = vmul.f32 -0.5, %v1931
      %v1999 = vadd.f32 %v1998, 1.0
      %v2000 = vmul.f32 %v1999, %v1931
      %v2001 = vand.u32 2147483647, %v1931
      %vm2002 = vcmp.lt.f32.partialorder %v2001, 0.0004427343
      %v2003 = vsel %vm2002, %v2000, %v1997
      %v2004 = vadd.f32 %v1876, %v1940
      %v2005 = vadd.f32 %v1877, %v1949
      %v2006 = vadd.f32 %v1878, %v1958
      %v2007 = vadd.f32 %v1879, %v1967
      %v2008 = vadd.f32 %v1880, %v1976
      %v2009 = vadd.f32 %v1881, %v1985
      %v2010 = vadd.f32 %v1882, %v1994
      %v2011 = vadd.f32 %v1883, %v2003
      %v2012 = vsel %vm1884, %v1892, %v2004
      %v2013 = vsel %vm1885, %v1893, %v2005
      %v2014 = vsel %vm1886, %v1894, %v2006
      %v2015 = vsel %vm1887, %v1895, %v2007
      %v2016 = vsel %vm1888, %v1896, %v2008
      %v2017 = vsel %vm1889, %v1897, %v2009
      %v2018 = vsel %vm1890, %v1898, %v2010
      %v2019 = vsel %vm1891, %v1899, %v2011
      %v2020 = vmul.f32 %v2012, %v1294
      %v2021 = vmul.f32 %v2013, %v1295
      %v2022 = vmul.f32 %v2014, %v1297
      %v2023 = vmul.f32 %v2015, %v1299
      %v2024 = vmul.f32 %v2016, %v1300
      %v2025 = vmul.f32 %v2017, %v1301
      %v2026 = vmul.f32 %v2018, %v1303
      %v2027 = vmul.f32 %v2019, %v1305
      %v2028 = vld [vmem:[%s11] sm:$0xff]
      %v2029 = vld [vmem:[%s11 + $0x8] sm:$0xff]
      %v2030 = vld [vmem:[%s11 + $0x10] sm:$0xff]
      %v2031 = vld [vmem:[%s11 + $0x18] sm:$0xff]
      %2036 = vst [vmem:[#allocation1] sm:$0xff] %v2012
      %s2037 = scalar_lea.vmem [#allocation1], 3
      %v2038 = vld [vmem:[%s2037] ss:$9 sm:$0xff]
      %s2039 = scalar_lea.vmem [#allocation1], 4
      %v2040 = vld [vmem:[%s2039] ss:$9 sm:$0xff]
      %s2041 = scalar_lea.vmem [#allocation1], 5
      %v2042 = vld [vmem:[%s2041] ss:$9 sm:$0xff]
      %s2043 = scalar_lea.vmem [#allocation1], 6
      %v2044 = vld [vmem:[%s2043] ss:$9 sm:$0xff]
      %s2045 = scalar_lea.vmem [#allocation1], 7
      %v2046 = vld [vmem:[%s2045] ss:$9 sm:$0xff]
      %2047 = vst [vmem:[#allocation1] sm:$0xff] %v2014
      %v2048 = vld [vmem:[#allocation1] ss:$9 sm:$0xff]
      %s2049 = scalar_lea.vmem [#allocation1], 1
      %v2050 = vld [vmem:[%s2049] ss:$9 sm:$0xff]
      %s2051 = scalar_lea.vmem [#allocation1], 2
      %v2052 = vld [vmem:[%s2051] ss:$9 sm:$0xff]
      %v2053 = vld [vmem:[%s2037] ss:$9 sm:$0xff]
      %v2054 = vld [vmem:[%s2039] ss:$9 sm:$0xff]
      %v2055 = vld [vmem:[%s2041] ss:$9 sm:$0xff]
      %v2056 = vld [vmem:[%s2043] ss:$9 sm:$0xff]
      %2057 = vst [vmem:[#allocation1] sm:$0xff] %v2016
      %v2058 = vld [vmem:[%s2037] ss:$9 sm:$0xff]
      %v2059 = vld [vmem:[%s2039] ss:$9 sm:$0xff]
      %v2060 = vld [vmem:[%s2041] ss:$9 sm:$0xff]
      %v2061 = vld [vmem:[%s2043] ss:$9 sm:$0xff]
      %v2062 = vld [vmem:[%s2045] ss:$9 sm:$0xff]
      %2063 = vst [vmem:[#allocation1] sm:$0xff] %v2018
      %v2064 = vld [vmem:[#allocation1] ss:$9 sm:$0xff]
      %v2065 = vld [vmem:[%s2049] ss:$9 sm:$0xff]
      %v2066 = vld [vmem:[%s2051] ss:$9 sm:$0xff]
      %v2067 = vld [vmem:[%s2037] ss:$9 sm:$0xff]
      %v2068 = vld [vmem:[%s2039] ss:$9 sm:$0xff]
      %v2069 = vld [vmem:[%s2041] ss:$9 sm:$0xff]
      %v2070 = vld [vmem:[%s2043] ss:$9 sm:$0xff]
      %v2071 = vperm.slane %v2038, 0
      %v2072 = vperm.slane %v2040, 0
      %v2073 = vperm.slane %v2042, 0
      %v2074 = vperm.slane %v2044, 0
      %v2075 = vperm.slane %v2046, 0
      %v2076 = vperm.slane %v2048, 0
      %v2077 = vperm.slane %v2050, 0
      %v2078 = vperm.slane %v2052, 0
      %v2079 = vperm.slane %v2053, 0
      %v2080 = vperm.slane %v2054, 0
      %v2081 = vperm.slane %v2055, 0
      %v2082 = vperm.slane %v2056, 0
      %v2083 = vperm.slane %v2058, 0
      %v2084 = vperm.slane %v2059, 0
      %v2085 = vperm.slane %v2060, 0
      %v2086 = vperm.slane %v2061, 0
      %v2087 = vperm.slane %v2062, 0
      %v2088 = vperm.slane %v2064, 0
      %v2089 = vperm.slane %v2065, 0
      %v2090 = vperm.slane %v2066, 0
      %v2091 = vperm.slane %v2067, 0
      %v2092 = vperm.slane %v2068, 0
      %v2093 = vperm.slane %v2069, 0
      %v2094 = vperm.slane %v2070, 0
      %v2119 = vmul.f32 %v2071, %v2028
      %v2120 = vmul.f32 %v2071, %v2030
      %v2121 = vmul.f32 %v2072, %v2028
      %v2122 = vmul.f32 %v2072, %v2030
      %v2123 = vmul.f32 %v2073, %v2028
      %v2124 = vmul.f32 %v2073, %v2030
      %v2125 = vmul.f32 %v2074, %v2028
      %v2126 = vmul.f32 %v2074, %v2030
      %v2127 = vmul.f32 %v2075, %v2028
      %v2128 = vmul.f32 %v2075, %v2030
      %v2129 = vmul.f32 %v2076, %v2028
      %v2130 = vmul.f32 %v2076, %v2030
      %v2131 = vmul.f32 %v2077, %v2028
      %v2132 = vmul.f32 %v2077, %v2030
      %v2133 = vmul.f32 %v2078, %v2028
      %v2134 = vmul.f32 %v2078, %v2030
      %v2135 = vmul.f32 %v2079, %v2028
      %v2136 = vmul.f32 %v2079, %v2030
      %v2137 = vmul.f32 %v2080, %v2028
      %v2138 = vmul.f32 %v2080, %v2030
      %v2139 = vmul.f32 %v2081, %v2028
      %v2140 = vmul.f32 %v2081, %v2030
      %v2141 = vmul.f32 %v2082, %v2028
      %v2142 = vmul.f32 %v2082, %v2030
      %v2143 = vmul.f32 %v2083, %v2028
      %v2144 = vmul.f32 %v2083, %v2030
      %v2145 = vmul.f32 %v2084, %v2028
      %v2146 = vmul.f32 %v2084, %v2030
      %v2147 = vmul.f32 %v2085, %v2028
      %v2148 = vmul.f32 %v2085, %v2030
      %v2149 = vmul.f32 %v2086, %v2028
      %v2150 = vmul.f32 %v2086, %v2030
      %v2151 = vmul.f32 %v2087, %v2028
      %v2152 = vmul.f32 %v2087, %v2030
      %v2153 = vmul.f32 %v2088, %v2028
      %v2154 = vmul.f32 %v2088, %v2030
      %v2155 = vmul.f32 %v2089, %v2028
      %v2156 = vmul.f32 %v2089, %v2030
      %v2157 = vmul.f32 %v2090, %v2028
      %v2158 = vmul.f32 %v2090, %v2030
      %v2159 = vmul.f32 %v2091, %v2028
      %v2160 = vmul.f32 %v2091, %v2030
      %v2161 = vmul.f32 %v2092, %v2028
      %v2162 = vmul.f32 %v2092, %v2030
      %v2163 = vmul.f32 %v2093, %v2028
      %v2164 = vmul.f32 %v2093, %v2030
      %v2165 = vmul.f32 %v2094, %v2028
      %v2166 = vmul.f32 %v2094, %v2030
      %v2167 = vmul.f32 %v2119, 1.442695
      %v2168 = vpow.pop %v2167
      %v2169 = vmul.f32 %v2120, 1.442695
      %v2170 = vpow.pop %v2169
      %v2171 = vmul.f32 %v2121, 1.442695
      %v2172 = vpow.pop %v2171
      %v2173 = vmul.f32 %v2122, 1.442695
      %v2174 = vpow.pop %v2173
      %v2175 = vmul.f32 %v2123, 1.442695
      %v2176 = vpow.pop %v2175
      %v2177 = vmul.f32 %v2124, 1.442695
      %v2178 = vpow.pop %v2177
      %v2179 = vmul.f32 %v2125, 1.442695
      %v2180 = vpow.pop %v2179
      %v2181 = vmul.f32 %v2126, 1.442695
      %v2182 = vpow.pop %v2181
      %v2183 = vmul.f32 %v2127, 1.442695
      %v2184 = vpow.pop %v2183
      %v2185 = vmul.f32 %v2128, 1.442695
      %v2186 = vpow.pop %v2185
      %v2187 = vmul.f32 %v2129, 1.442695
      %v2188 = vpow.pop %v2187
      %v2189 = vmul.f32 %v2130, 1.442695
      %v2190 = vpow.pop %v2189
      %v2191 = vmul.f32 %v2131, 1.442695
      %v2192 = vpow.pop %v2191
      %v2193 = vmul.f32 %v2132, 1.442695
      %v2194 = vpow.pop %v2193
      %v2195 = vmul.f32 %v2133, 1.442695
      %v2196 = vpow.pop %v2195
      %v2197 = vmul.f32 %v2134, 1.442695
      %v2198 = vpow.pop %v2197
      %v2199 = vmul.f32 %v2135, 1.442695
      %v2200 = vpow.pop %v2199
      %v2201 = vmul.f32 %v2136, 1.442695
      %v2202 = vpow.pop %v2201
      %v2203 = vmul.f32 %v2137, 1.442695
      %v2204 = vpow.pop %v2203
      %v2205 = vmul.f32 %v2138, 1.442695
      %v2206 = vpow.pop %v2205
      %v2207 = vmul.f32 %v2139, 1.442695
      %v2208 = vpow.pop %v2207
      %v2209 = vmul.f32 %v2140, 1.442695
      %v2210 = vpow.pop %v2209
      %v2211 = vmul.f32 %v2141, 1.442695
      %v2212 = vpow.pop %v2211
      %v2213 = vmul.f32 %v2142, 1.442695
      %v2214 = vpow.pop %v2213
      %v2215 = vmul.f32 %v2143, 1.442695
      %v2216 = vpow.pop %v2215
      %v2217 = vmul.f32 %v2144, 1.442695
      %v2218 = vpow.pop %v2217
      %v2219 = vmul.f32 %v2145, 1.442695
      %v2220 = vpow.pop %v2219
      %v2221 = vmul.f32 %v2146, 1.442695
      %v2222 = vpow.pop %v2221
      %v2223 = vmul.f32 %v2147, 1.442695
      %v2224 = vpow.pop %v2223
      %v2225 = vmul.f32 %v2148, 1.442695
      %v2226 = vpow.pop %v2225
      %v2227 = vmul.f32 %v2149, 1.442695
      %v2228 = vpow.pop %v2227
      %v2229 = vmul.f32 %v2150, 1.442695
      %v2230 = vpow.pop %v2229
      %v2231 = vmul.f32 %v2151, 1.442695
      %v2232 = vpow.pop %v2231
      %v2233 = vmul.f32 %v2152, 1.442695
      %v2234 = vpow.pop %v2233
      %v2235 = vmul.f32 %v2153, 1.442695
      %v2236 = vpow.pop %v2235
      %v2237 = vmul.f32 %v2154, 1.442695
      %v2238 = vpow.pop %v2237
      %v2239 = vmul.f32 %v2155, 1.442695
      %v2240 = vpow.pop %v2239
      %v2241 = vmul.f32 %v2156, 1.442695
      %v2242 = vpow.pop %v2241
      %v2243 = vmul.f32 %v2157, 1.442695
      %v2244 = vpow.pop %v2243
      %v2245 = vmul.f32 %v2158, 1.442695
      %v2246 = vpow.pop %v2245
      %v2247 = vmul.f32 %v2159, 1.442695
      %v2248 = vpow.pop %v2247
      %v2249 = vmul.f32 %v2160, 1.442695
      %v2250 = vpow.pop %v2249
      %v2251 = vmul.f32 %v2161, 1.442695
      %v2252 = vpow.pop %v2251
      %v2253 = vmul.f32 %v2162, 1.442695
      %v2254 = vpow.pop %v2253
      %v2255 = vmul.f32 %v2163, 1.442695
      %v2256 = vpow.pop %v2255
      %v2257 = vmul.f32 %v2164, 1.442695
      %v2258 = vpow.pop %v2257
      %v2259 = vmul.f32 %v2165, 1.442695
      %v2260 = vpow.pop %v2259
      %v2261 = vmul.f32 %v2166, 1.442695
      %v2262 = vpow.pop %v2261
      %v2263 = vmul.f32 %v2168, 0.0
      %v2264 = vmul.f32 %v2170, 0.0
      %v2265 = vmul.f32 %v2216, 0.0
      %v2266 = vmul.f32 %v2218, 0.0
      %v2267 = vperm.slane %v1815, 3
      %v2268 = vlaneseq
      %v2269 = vshrl.u32 %v2268, 7
      %2271 = vset.pattern.permute.xlu0 %v2269
      %2272 = vperm.xlu0 %2271, %v2267
      %v2273 = vpop.permute.xlu0 %2272
      %v2274 = vlaneseq
      %v2275 = vshrl.u32 %v2274, 7
      %v2276 = vadd.s32 %v2275, 8
      %2277 = vset.pattern.permute.xlu0 %v2276
      %2278 = vperm.xlu0 %2277, %v2267
      %v2279 = vpop.permute.xlu0 %2278
      %v2280 = vperm.slane %v1820, 3
      %v2281 = vlaneseq
      %v2282 = vshrl.u32 %v2281, 7
      %2284 = vset.pattern.permute.xlu0 %v2282
      %2285 = vperm.xlu0 %2284, %v2280
      %v2286 = vpop.permute.xlu0 %2285
      %v2287 = vlaneseq
      %v2288 = vshrl.u32 %v2287, 7
      %v2289 = vadd.s32 %v2288, 8
      %2290 = vset.pattern.permute.xlu0 %v2289
      %2291 = vperm.xlu0 %2290, %v2280
      %v2292 = vpop.permute.xlu0 %2291
      %v2293 = vperm.slane %v2020, 3
      %v2294 = vperm.slane %v2024, 3
      %v2295 = vmul.f32 %v2293, %v2273
      %v2296 = vmul.f32 %v2293, %v2279
      %v2297 = vmul.f32 %v2294, %v2286
      %v2298 = vmul.f32 %v2294, %v2292
      %v2299 = vadd.f32 %v2263, %v2295
      %v2300 = vadd.f32 %v2264, %v2296
      %v2301 = vadd.f32 %v2265, %v2297
      %v2302 = vadd.f32 %v2266, %v2298
      %v2303 = vperm.slane %v1853, 3
      %v2304 = vlaneseq
      %v2305 = vshrl.u32 %v2304, 7
      %2307 = vset.pattern.permute.xlu0 %v2305
      %2308 = vperm.xlu0 %2307, %v2303
      %v2309 = vpop.permute.xlu0 %2308
      %v2310 = vlaneseq
      %v2311 = vshrl.u32 %v2310, 7
      %v2312 = vadd.s32 %v2311, 8
      %2313 = vset.pattern.permute.xlu0 %v2312
      %2314 = vperm.xlu0 %2313, %v2303
      %v2315 = vpop.permute.xlu0 %2314
      %v2316 = vperm.slane %v1858, 3
      %v2317 = vlaneseq
      %v2318 = vshrl.u32 %v2317, 7
      %2320 = vset.pattern.permute.xlu0 %v2318
      %2321 = vperm.xlu0 %2320, %v2316
      %v2322 = vpop.permute.xlu0 %2321
      %v2323 = vlaneseq
      %v2324 = vshrl.u32 %v2323, 7
      %v2325 = vadd.s32 %v2324, 8
      %2326 = vset.pattern.permute.xlu0 %v2325
      %2327 = vperm.xlu0 %2326, %v2316
      %v2328 = vpop.permute.xlu0 %2327
      %v2329 = vmul.f32 %v2299, %v2309
      %v2330 = vmul.f32 %v2300, %v2315
      %v2331 = vmul.f32 %v2301, %v2322
      %v2332 = vmul.f32 %v2302, %v2328
      %v2333 = vadd.f32 %v2329, %v2330
      %v2334 = vrot.slane %v2333, 4
      %v2335 = vadd.f32 %v2333, %v2334
      %v2336 = vrot.slane %v2335, 2
      %v2337 = vadd.f32 %v2335, %v2336
      %v2338 = vrot.slane %v2337, 1
      %v2339 = vadd.f32 %v2337, %v2338
      %v2340 = vadd.f32 %v2331, %v2332
      %v2341 = vrot.slane %v2340, 4
      %v2342 = vadd.f32 %v2340, %v2341
      %v2343 = vrot.slane %v2342, 2
      %v2344 = vadd.f32 %v2342, %v2343
      %v2345 = vrot.slane %v2344, 1
      %v2346 = vadd.f32 %v2344, %v2345
      %v2347 = vmul.f32 %v2172, %v2299
      %v2348 = vmul.f32 %v2174, %v2300
      %v2349 = vmul.f32 %v2220, %v2301
      %v2350 = vmul.f32 %v2222, %v2302
      %v2351 = vperm.slane %v1815, 4
      %v2352 = vlaneseq
      %v2353 = vshrl.u32 %v2352, 7
      %2355 = vset.pattern.permute.xlu0 %v2353
      %2356 = vperm.xlu0 %2355, %v2351
      %v2357 = vpop.permute.xlu0 %2356
      %v2358 = vlaneseq
      %v2359 = vshrl.u32 %v2358, 7
      %v2360 = vadd.s32 %v2359, 8
      %2361 = vset.pattern.permute.xlu0 %v2360
      %2362 = vperm.xlu0 %2361, %v2351
      %v2363 = vpop.permute.xlu0 %2362
      %v2364 = vperm.slane %v1820, 4
      %v2365 = vlaneseq
      %v2366 = vshrl.u32 %v2365, 7
      %2368 = vset.pattern.permute.xlu0 %v2366
      %2369 = vperm.xlu0 %2368, %v2364
      %v2370 = vpop.permute.xlu0 %2369
      %v2371 = vlaneseq
      %v2372 = vshrl.u32 %v2371, 7
      %v2373 = vadd.s32 %v2372, 8
      %2374 = vset.pattern.permute.xlu0 %v2373
      %2375 = vperm.xlu0 %2374, %v2364
      %v2376 = vpop.permute.xlu0 %2375
      %v2377 = vperm.slane %v2020, 4
      %v2378 = vperm.slane %v2024, 4
      %v2379 = vmul.f32 %v2377, %v2357
      %v2380 = vmul.f32 %v2377, %v2363
      %v2381 = vmul.f32 %v2378, %v2370
      %v2382 = vmul.f32 %v2378, %v2376
      %v2383 = vadd.f32 %v2347, %v2379
      %v2384 = vadd.f32 %v2348, %v2380
      %v2385 = vadd.f32 %v2349, %v2381
      %v2386 = vadd.f32 %v2350, %v2382
      %v2387 = vperm.slane %v1853, 4
      %v2388 = vlaneseq
      %v2389 = vshrl.u32 %v2388, 7
      %2391 = vset.pattern.permute.xlu0 %v2389
      %2392 = vperm.xlu0 %2391, %v2387
      %v2393 = vpop.permute.xlu0 %2392
      %v2394 = vlaneseq
      %v2395 = vshrl.u32 %v2394, 7
      %v2396 = vadd.s32 %v2395, 8
      %2397 = vset.pattern.permute.xlu0 %v2396
      %2398 = vperm.xlu0 %2397, %v2387
      %v2399 = vpop.permute.xlu0 %2398
      %v2400 = vperm.slane %v1858, 4
      %v2401 = vlaneseq
      %v2402 = vshrl.u32 %v2401, 7
      %2404 = vset.pattern.permute.xlu0 %v2402
      %2405 = vperm.xlu0 %2404, %v2400
      %v2406 = vpop.permute.xlu0 %2405
      %v2407 = vlaneseq
      %v2408 = vshrl.u32 %v2407, 7
      %v2409 = vadd.s32 %v2408, 8
      %2410 = vset.pattern.permute.xlu0 %v2409
      %2411 = vperm.xlu0 %2410, %v2400
      %v2412 = vpop.permute.xlu0 %2411
      %v2413 = vmul.f32 %v2383, %v2393
      %v2414 = vmul.f32 %v2384, %v2399
      %v2415 = vmul.f32 %v2385, %v2406
      %v2416 = vmul.f32 %v2386, %v2412
      %v2417 = vadd.f32 %v2413, %v2414
      %v2418 = vrot.slane %v2417, 4
      %v2419 = vadd.f32 %v2417, %v2418
      %v2420 = vrot.slane %v2419, 2
      %v2421 = vadd.f32 %v2419, %v2420
      %v2422 = vrot.slane %v2421, 1
      %v2423 = vadd.f32 %v2421, %v2422
      %v2424 = vadd.f32 %v2415, %v2416
      %v2425 = vrot.slane %v2424, 4
      %v2426 = vadd.f32 %v2424, %v2425
      %v2427 = vrot.slane %v2426, 2
      %v2428 = vadd.f32 %v2426, %v2427
      %v2429 = vrot.slane %v2428, 1
      %v2430 = vadd.f32 %v2428, %v2429
      %v2431 = vmul.f32 %v2176, %v2383
      %v2432 = vmul.f32 %v2178, %v2384
      %v2433 = vmul.f32 %v2224, %v2385
      %v2434 = vmul.f32 %v2226, %v2386
      %v2435 = vperm.slane %v1815, 5
      %v2436 = vlaneseq
      %v2437 = vshrl.u32 %v2436, 7
      %2439 = vset.pattern.permute.xlu0 %v2437
      %2440 = vperm.xlu0 %2439, %v2435
      %v2441 = vpop.permute.xlu0 %2440
      %v2442 = vlaneseq
      %v2443 = vshrl.u32 %v2442, 7
      %v2444 = vadd.s32 %v2443, 8
      %2445 = vset.pattern.permute.xlu0 %v2444
      %2446 = vperm.xlu0 %2445, %v2435
      %v2447 = vpop.permute.xlu0 %2446
      %v2448 = vperm.slane %v1820, 5
      %v2449 = vlaneseq
      %v2450 = vshrl.u32 %v2449, 7
      %2452 = vset.pattern.permute.xlu0 %v2450
      %2453 = vperm.xlu0 %2452, %v2448
      %v2454 = vpop.permute.xlu0 %2453
      %v2455 = vlaneseq
      %v2456 = vshrl.u32 %v2455, 7
      %v2457 = vadd.s32 %v2456, 8
      %2458 = vset.pattern.permute.xlu0 %v2457
      %2459 = vperm.xlu0 %2458, %v2448
      %v2460 = vpop.permute.xlu0 %2459
      %v2461 = vperm.slane %v2020, 5
      %v2462 = vperm.slane %v2024, 5
      %v2463 = vmul.f32 %v2461, %v2441
      %v2464 = vmul.f32 %v2461, %v2447
      %v2465 = vmul.f32 %v2462, %v2454
      %v2466 = vmul.f32 %v2462, %v2460
      %v2467 = vadd.f32 %v2431, %v2463
      %v2468 = vadd.f32 %v2432, %v2464
      %v2469 = vadd.f32 %v2433, %v2465
      %v2470 = vadd.f32 %v2434, %v2466
      %v2471 = vperm.slane %v1853, 5
      %v2472 = vlaneseq
      %v2473 = vshrl.u32 %v2472, 7
      %2475 = vset.pattern.permute.xlu0 %v2473
      %2476 = vperm.xlu0 %2475, %v2471
      %v2477 = vpop.permute.xlu0 %2476
      %v2478 = vlaneseq
      %v2479 = vshrl.u32 %v2478, 7
      %v2480 = vadd.s32 %v2479, 8
      %2481 = vset.pattern.permute.xlu0 %v2480
      %2482 = vperm.xlu0 %2481, %v2471
      %v2483 = vpop.permute.xlu0 %2482
      %v2484 = vperm.slane %v1858, 5
      %v2485 = vlaneseq
      %v2486 = vshrl.u32 %v2485, 7
      %2488 = vset.pattern.permute.xlu0 %v2486
      %2489 = vperm.xlu0 %2488, %v2484
      %v2490 = vpop.permute.xlu0 %2489
      %v2491 = vlaneseq
      %v2492 = vshrl.u32 %v2491, 7
      %v2493 = vadd.s32 %v2492, 8
      %2494 = vset.pattern.permute.xlu0 %v2493
      %2495 = vperm.xlu0 %2494, %v2484
      %v2496 = vpop.permute.xlu0 %2495
      %v2497 = vmul.f32 %v2467, %v2477
      %v2498 = vmul.f32 %v2468, %v2483
      %v2499 = vmul.f32 %v2469, %v2490
      %v2500 = vmul.f32 %v2470, %v2496
      %v2501 = vadd.f32 %v2497, %v2498
      %v2502 = vrot.slane %v2501, 4
      %v2503 = vadd.f32 %v2501, %v2502
      %v2504 = vrot.slane %v2503, 2
      %v2505 = vadd.f32 %v2503, %v2504
      %v2506 = vrot.slane %v2505, 1
      %v2507 = vadd.f32 %v2505, %v2506
      %v2508 = vadd.f32 %v2499, %v2500
      %v2509 = vrot.slane %v2508, 4
      %v2510 = vadd.f32 %v2508, %v2509
      %v2511 = vrot.slane %v2510, 2
      %v2512 = vadd.f32 %v2510, %v2511
      %v2513 = vrot.slane %v2512, 1
      %v2514 = vadd.f32 %v2512, %v2513
      %v2515 = vmul.f32 %v2180, %v2467
      %v2516 = vmul.f32 %v2182, %v2468
      %v2517 = vmul.f32 %v2228, %v2469
      %v2518 = vmul.f32 %v2230, %v2470
      %v2519 = vperm.slane %v1815, 6
      %v2520 = vlaneseq
      %v2521 = vshrl.u32 %v2520, 7
      %2523 = vset.pattern.permute.xlu0 %v2521
      %2524 = vperm.xlu0 %2523, %v2519
      %v2525 = vpop.permute.xlu0 %2524
      %v2526 = vlaneseq
      %v2527 = vshrl.u32 %v2526, 7
      %v2528 = vadd.s32 %v2527, 8
      %2529 = vset.pattern.permute.xlu0 %v2528
      %2530 = vperm.xlu0 %2529, %v2519
      %v2531 = vpop.permute.xlu0 %2530
      %v2532 = vperm.slane %v1820, 6
      %v2533 = vlaneseq
      %v2534 = vshrl.u32 %v2533, 7
      %2536 = vset.pattern.permute.xlu0 %v2534
      %2537 = vperm.xlu0 %2536, %v2532
      %v2538 = vpop.permute.xlu0 %2537
      %v2539 = vlaneseq
      %v2540 = vshrl.u32 %v2539, 7
      %v2541 = vadd.s32 %v2540, 8
      %2542 = vset.pattern.permute.xlu0 %v2541
      %2543 = vperm.xlu0 %2542, %v2532
      %v2544 = vpop.permute.xlu0 %2543
      %v2545 = vperm.slane %v2020, 6
      %v2546 = vperm.slane %v2024, 6
      %v2547 = vmul.f32 %v2545, %v2525
      %v2548 = vmul.f32 %v2545, %v2531
      %v2549 = vmul.f32 %v2546, %v2538
      %v2550 = vmul.f32 %v2546, %v2544
      %v2551 = vadd.f32 %v2515, %v2547
      %v2552 = vadd.f32 %v2516, %v2548
      %v2553 = vadd.f32 %v2517, %v2549
      %v2554 = vadd.f32 %v2518, %v2550
      %v2555 = vperm.slane %v1853, 6
      %v2556 = vlaneseq
      %v2557 = vshrl.u32 %v2556, 7
      %2559 = vset.pattern.permute.xlu0 %v2557
      %2560 = vperm.xlu0 %2559, %v2555
      %v2561 = vpop.permute.xlu0 %2560
      %v2562 = vlaneseq
      %v2563 = vshrl.u32 %v2562, 7
      %v2564 = vadd.s32 %v2563, 8
      %2565 = vset.pattern.permute.xlu0 %v2564
      %2566 = vperm.xlu0 %2565, %v2555
      %v2567 = vpop.permute.xlu0 %2566
      %v2568 = vperm.slane %v1858, 6
      %v2569 = vlaneseq
      %v2570 = vshrl.u32 %v2569, 7
      %2572 = vset.pattern.permute.xlu0 %v2570
      %2573 = vperm.xlu0 %2572, %v2568
      %v2574 = vpop.permute.xlu0 %2573
      %v2575 = vlaneseq
      %v2576 = vshrl.u32 %v2575, 7
      %v2577 = vadd.s32 %v2576, 8
      %2578 = vset.pattern.permute.xlu0 %v2577
      %2579 = vperm.xlu0 %2578, %v2568
      %v2580 = vpop.permute.xlu0 %2579
      %v2581 = vmul.f32 %v2551, %v2561
      %v2582 = vmul.f32 %v2552, %v2567
      %v2583 = vmul.f32 %v2553, %v2574
      %v2584 = vmul.f32 %v2554, %v2580
      %v2585 = vadd.f32 %v2581, %v2582
      %v2586 = vrot.slane %v2585, 4
      %v2587 = vadd.f32 %v2585, %v2586
      %v2588 = vrot.slane %v2587, 2
      %v2589 = vadd.f32 %v2587, %v2588
      %v2590 = vrot.slane %v2589, 1
      %v2591 = vadd.f32 %v2589, %v2590
      %v2592 = vadd.f32 %v2583, %v2584
      %v2593 = vrot.slane %v2592, 4
      %v2594 = vadd.f32 %v2592, %v2593
      %v2595 = vrot.slane %v2594, 2
      %v2596 = vadd.f32 %v2594, %v2595
      %v2597 = vrot.slane %v2596, 1
      %v2598 = vadd.f32 %v2596, %v2597
      %v2599 = vmul.f32 %v2184, %v2551
      %v2600 = vmul.f32 %v2186, %v2552
      %v2601 = vmul.f32 %v2232, %v2553
      %v2602 = vmul.f32 %v2234, %v2554
      %v2603 = vperm.slane %v1815, 7
      %v2604 = vlaneseq
      %v2605 = vshrl.u32 %v2604, 7
      %2607 = vset.pattern.permute.xlu0 %v2605
      %2608 = vperm.xlu0 %2607, %v2603
      %v2609 = vpop.permute.xlu0 %2608
      %v2610 = vlaneseq
      %v2611 = vshrl.u32 %v2610, 7
      %v2612 = vadd.s32 %v2611, 8
      %2613 = vset.pattern.permute.xlu0 %v2612
      %2614 = vperm.xlu0 %2613, %v2603
      %v2615 = vpop.permute.xlu0 %2614
      %v2616 = vperm.slane %v1820, 7
      %v2617 = vlaneseq
      %v2618 = vshrl.u32 %v2617, 7
      %2620 = vset.pattern.permute.xlu0 %v2618
      %2621 = vperm.xlu0 %2620, %v2616
      %v2622 = vpop.permute.xlu0 %2621
      %v2623 = vlaneseq
      %v2624 = vshrl.u32 %v2623, 7
      %v2625 = vadd.s32 %v2624, 8
      %2626 = vset.pattern.permute.xlu0 %v2625
      %2627 = vperm.xlu0 %2626, %v2616
      %v2628 = vpop.permute.xlu0 %2627
      %v2629 = vperm.slane %v2020, 7
      %v2630 = vperm.slane %v2024, 7
      %v2631 = vmul.f32 %v2629, %v2609
      %v2632 = vmul.f32 %v2629, %v2615
      %v2633 = vmul.f32 %v2630, %v2622
      %v2634 = vmul.f32 %v2630, %v2628
      %v2635 = vadd.f32 %v2599, %v2631
      %v2636 = vadd.f32 %v2600, %v2632
      %v2637 = vadd.f32 %v2601, %v2633
      %v2638 = vadd.f32 %v2602, %v2634
      %v2639 = vperm.slane %v1853, 7
      %v2640 = vlaneseq
      %v2641 = vshrl.u32 %v2640, 7
      %2643 = vset.pattern.permute.xlu0 %v2641
      %2644 = vperm.xlu0 %2643, %v2639
      %v2645 = vpop.permute.xlu0 %2644
      %v2646 = vlaneseq
      %v2647 = vshrl.u32 %v2646, 7
      %v2648 = vadd.s32 %v2647, 8
      %2649 = vset.pattern.permute.xlu0 %v2648
      %2650 = vperm.xlu0 %2649, %v2639
      %v2651 = vpop.permute.xlu0 %2650
      %v2652 = vperm.slane %v1858, 7
      %v2653 = vlaneseq
      %v2654 = vshrl.u32 %v2653, 7
      %2656 = vset.pattern.permute.xlu0 %v2654
      %2657 = vperm.xlu0 %2656, %v2652
      %v2658 = vpop.permute.xlu0 %2657
      %v2659 = vlaneseq
      %v2660 = vshrl.u32 %v2659, 7
      %v2661 = vadd.s32 %v2660, 8
      %2662 = vset.pattern.permute.xlu0 %v2661
      %2663 = vperm.xlu0 %2662, %v2652
      %v2664 = vpop.permute.xlu0 %2663
      %v2665 = vmul.f32 %v2635, %v2645
      %v2666 = vmul.f32 %v2636, %v2651
      %v2667 = vmul.f32 %v2637, %v2658
      %v2668 = vmul.f32 %v2638, %v2664
      %v2669 = vadd.f32 %v2665, %v2666
      %v2670 = vrot.slane %v2669, 4
      %v2671 = vadd.f32 %v2669, %v2670
      %v2672 = vrot.slane %v2671, 2
      %v2673 = vadd.f32 %v2671, %v2672
      %v2674 = vrot.slane %v2673, 1
      %v2675 = vadd.f32 %v2673, %v2674
      %v2676 = vadd.f32 %v2667, %v2668
      %v2677 = vrot.slane %v2676, 4
      %v2678 = vadd.f32 %v2676, %v2677
      %v2679 = vrot.slane %v2678, 2
      %v2680 = vadd.f32 %v2678, %v2679
      %v2681 = vrot.slane %v2680, 1
      %v2682 = vadd.f32 %v2680, %v2681
      %v2683 = vmul.f32 %v2188, %v2635
      %v2684 = vmul.f32 %v2190, %v2636
      %v2685 = vmul.f32 %v2236, %v2637
      %v2686 = vmul.f32 %v2238, %v2638
      %v2687 = vperm.slane %v1817, 0
      %v2688 = vlaneseq
      %v2689 = vshrl.u32 %v2688, 7
      %2691 = vset.pattern.permute.xlu0 %v2689
      %2692 = vperm.xlu0 %2691, %v2687
      %v2693 = vpop.permute.xlu0 %2692
      %v2694 = vlaneseq
      %v2695 = vshrl.u32 %v2694, 7
      %v2696 = vadd.s32 %v2695, 8
      %2697 = vset.pattern.permute.xlu0 %v2696
      %2698 = vperm.xlu0 %2697, %v2687
      %v2699 = vpop.permute.xlu0 %2698
      %v2700 = vperm.slane %v1822, 0
      %v2701 = vlaneseq
      %v2702 = vshrl.u32 %v2701, 7
      %2704 = vset.pattern.permute.xlu0 %v2702
      %2705 = vperm.xlu0 %2704, %v2700
      %v2706 = vpop.permute.xlu0 %2705
      %v2707 = vlaneseq
      %v2708 = vshrl.u32 %v2707, 7
      %v2709 = vadd.s32 %v2708, 8
      %2710 = vset.pattern.permute.xlu0 %v2709
      %2711 = vperm.xlu0 %2710, %v2700
      %v2712 = vpop.permute.xlu0 %2711
      %v2713 = vperm.slane %v2022, 0
      %v2714 = vperm.slane %v2026, 0
      %v2715 = vmul.f32 %v2713, %v2693
      %v2716 = vmul.f32 %v2713, %v2699
      %v2717 = vmul.f32 %v2714, %v2706
      %v2718 = vmul.f32 %v2714, %v2712
      %v2719 = vadd.f32 %v2683, %v2715
      %v2720 = vadd.f32 %v2684, %v2716
      %v2721 = vadd.f32 %v2685, %v2717
      %v2722 = vadd.f32 %v2686, %v2718
      %v2723 = vperm.slane %v1855, 0
      %v2724 = vlaneseq
      %v2725 = vshrl.u32 %v2724, 7
      %2727 = vset.pattern.permute.xlu0 %v2725
      %2728 = vperm.xlu0 %2727, %v2723
      %v2729 = vpop.permute.xlu0 %2728
      %v2730 = vlaneseq
      %v2731 = vshrl.u32 %v2730, 7
      %v2732 = vadd.s32 %v2731, 8
      %2733 = vset.pattern.permute.xlu0 %v2732
      %2734 = vperm.xlu0 %2733, %v2723
      %v2735 = vpop.permute.xlu0 %2734
      %v2736 = vperm.slane %v1860, 0
      %v2737 = vlaneseq
      %v2738 = vshrl.u32 %v2737, 7
      %2740 = vset.pattern.permute.xlu0 %v2738
      %2741 = vperm.xlu0 %2740, %v2736
      %v2742 = vpop.permute.xlu0 %2741
      %v2743 = vlaneseq
      %v2744 = vshrl.u32 %v2743, 7
      %v2745 = vadd.s32 %v2744, 8
      %2746 = vset.pattern.permute.xlu0 %v2745
      %2747 = vperm.xlu0 %2746, %v2736
      %v2748 = vpop.permute.xlu0 %2747
      %v2749 = vmul.f32 %v2719, %v2729
      %v2750 = vmul.f32 %v2720, %v2735
      %v2751 = vmul.f32 %v2721, %v2742
      %v2752 = vmul.f32 %v2722, %v2748
      %v2753 = vadd.f32 %v2749, %v2750
      %v2754 = vrot.slane %v2753, 4
      %v2755 = vadd.f32 %v2753, %v2754
      %v2756 = vrot.slane %v2755, 2
      %v2757 = vadd.f32 %v2755, %v2756
      %v2758 = vrot.slane %v2757, 1
      %v2759 = vadd.f32 %v2757, %v2758
      %v2760 = vadd.f32 %v2751, %v2752
      %v2761 = vrot.slane %v2760, 4
      %v2762 = vadd.f32 %v2760, %v2761
      %v2763 = vrot.slane %v2762, 2
      %v2764 = vadd.f32 %v2762, %v2763
      %v2765 = vrot.slane %v2764, 1
      %v2766 = vadd.f32 %v2764, %v2765
      %v2767 = vmul.f32 %v2192, %v2719
      %v2768 = vmul.f32 %v2194, %v2720
      %v2769 = vmul.f32 %v2240, %v2721
      %v2770 = vmul.f32 %v2242, %v2722
      %v2771 = vperm.slane %v1817, 1
      %v2772 = vlaneseq
      %v2773 = vshrl.u32 %v2772, 7
      %2775 = vset.pattern.permute.xlu0 %v2773
      %2776 = vperm.xlu0 %2775, %v2771
      %v2777 = vpop.permute.xlu0 %2776
      %v2778 = vlaneseq
      %v2779 = vshrl.u32 %v2778, 7
      %v2780 = vadd.s32 %v2779, 8
      %2781 = vset.pattern.permute.xlu0 %v2780
      %2782 = vperm.xlu0 %2781, %v2771
      %v2783 = vpop.permute.xlu0 %2782
      %v2784 = vperm.slane %v1822, 1
      %v2785 = vlaneseq
      %v2786 = vshrl.u32 %v2785, 7
      %2788 = vset.pattern.permute.xlu0 %v2786
      %2789 = vperm.xlu0 %2788, %v2784
      %v2790 = vpop.permute.xlu0 %2789
      %v2791 = vlaneseq
      %v2792 = vshrl.u32 %v2791, 7
      %v2793 = vadd.s32 %v2792, 8
      %2794 = vset.pattern.permute.xlu0 %v2793
      %2795 = vperm.xlu0 %2794, %v2784
      %v2796 = vpop.permute.xlu0 %2795
      %v2797 = vperm.slane %v2022, 1
      %v2798 = vperm.slane %v2026, 1
      %v2799 = vmul.f32 %v2797, %v2777
      %v2800 = vmul.f32 %v2797, %v2783
      %v2801 = vmul.f32 %v2798, %v2790
      %v2802 = vmul.f32 %v2798, %v2796
      %v2803 = vadd.f32 %v2767, %v2799
      %v2804 = vadd.f32 %v2768, %v2800
      %v2805 = vadd.f32 %v2769, %v2801
      %v2806 = vadd.f32 %v2770, %v2802
      %v2807 = vperm.slane %v1855, 1
      %v2808 = vlaneseq
      %v2809 = vshrl.u32 %v2808, 7
      %2811 = vset.pattern.permute.xlu0 %v2809
      %2812 = vperm.xlu0 %2811, %v2807
      %v2813 = vpop.permute.xlu0 %2812
      %v2814 = vlaneseq
      %v2815 = vshrl.u32 %v2814, 7
      %v2816 = vadd.s32 %v2815, 8
      %2817 = vset.pattern.permute.xlu0 %v2816
      %2818 = vperm.xlu0 %2817, %v2807
      %v2819 = vpop.permute.xlu0 %2818
      %v2820 = vperm.slane %v1860, 1
      %v2821 = vlaneseq
      %v2822 = vshrl.u32 %v2821, 7
      %2824 = vset.pattern.permute.xlu0 %v2822
      %2825 = vperm.xlu0 %2824, %v2820
      %v2826 = vpop.permute.xlu0 %2825
      %v2827 = vlaneseq
      %v2828 = vshrl.u32 %v2827, 7
      %v2829 = vadd.s32 %v2828, 8
      %2830 = vset.pattern.permute.xlu0 %v2829
      %2831 = vperm.xlu0 %2830, %v2820
      %v2832 = vpop.permute.xlu0 %2831
      %v2833 = vmul.f32 %v2803, %v2813
      %v2834 = vmul.f32 %v2804, %v2819
      %v2835 = vmul.f32 %v2805, %v2826
      %v2836 = vmul.f32 %v2806, %v2832
      %v2837 = vadd.f32 %v2833, %v2834
      %v2838 = vrot.slane %v2837, 4
      %v2839 = vadd.f32 %v2837, %v2838
      %v2840 = vrot.slane %v2839, 2
      %v2841 = vadd.f32 %v2839, %v2840
      %v2842 = vrot.slane %v2841, 1
      %v2843 = vadd.f32 %v2841, %v2842
      %v2844 = vadd.f32 %v2835, %v2836
      %v2845 = vrot.slane %v2844, 4
      %v2846 = vadd.f32 %v2844, %v2845
      %v2847 = vrot.slane %v2846, 2
      %v2848 = vadd.f32 %v2846, %v2847
      %v2849 = vrot.slane %v2848, 1
      %v2850 = vadd.f32 %v2848, %v2849
      %v2851 = vmul.f32 %v2196, %v2803
      %v2852 = vmul.f32 %v2198, %v2804
      %v2853 = vmul.f32 %v2244, %v2805
      %v2854 = vmul.f32 %v2246, %v2806
      %v2855 = vperm.slane %v1817, 2
      %v2856 = vlaneseq
      %v2857 = vshrl.u32 %v2856, 7
      %2859 = vset.pattern.permute.xlu0 %v2857
      %2860 = vperm.xlu0 %2859, %v2855
      %v2861 = vpop.permute.xlu0 %2860
      %v2862 = vlaneseq
      %v2863 = vshrl.u32 %v2862, 7
      %v2864 = vadd.s32 %v2863, 8
      %2865 = vset.pattern.permute.xlu0 %v2864
      %2866 = vperm.xlu0 %2865, %v2855
      %v2867 = vpop.permute.xlu0 %2866
      %v2868 = vperm.slane %v1822, 2
      %v2869 = vlaneseq
      %v2870 = vshrl.u32 %v2869, 7
      %2872 = vset.pattern.permute.xlu0 %v2870
      %2873 = vperm.xlu0 %2872, %v2868
      %v2874 = vpop.permute.xlu0 %2873
      %v2875 = vlaneseq
      %v2876 = vshrl.u32 %v2875, 7
      %v2877 = vadd.s32 %v2876, 8
      %2878 = vset.pattern.permute.xlu0 %v2877
      %2879 = vperm.xlu0 %2878, %v2868
      %v2880 = vpop.permute.xlu0 %2879
      %v2881 = vperm.slane %v2022, 2
      %v2882 = vperm.slane %v2026, 2
      %v2883 = vmul.f32 %v2881, %v2861
      %v2884 = vmul.f32 %v2881, %v2867
      %v2885 = vmul.f32 %v2882, %v2874
      %v2886 = vmul.f32 %v2882, %v2880
      %v2887 = vadd.f32 %v2851, %v2883
      %v2888 = vadd.f32 %v2852, %v2884
      %v2889 = vadd.f32 %v2853, %v2885
      %v2890 = vadd.f32 %v2854, %v2886
      %v2891 = vperm.slane %v1855, 2
      %v2892 = vlaneseq
      %v2893 = vshrl.u32 %v2892, 7
      %2895 = vset.pattern.permute.xlu0 %v2893
      %2896 = vperm.xlu0 %2895, %v2891
      %v2897 = vpop.permute.xlu0 %2896
      %v2898 = vlaneseq
      %v2899 = vshrl.u32 %v2898, 7
      %v2900 = vadd.s32 %v2899, 8
      %2901 = vset.pattern.permute.xlu0 %v2900
      %2902 = vperm.xlu0 %2901, %v2891
      %v2903 = vpop.permute.xlu0 %2902
      %v2904 = vperm.slane %v1860, 2
      %v2905 = vlaneseq
      %v2906 = vshrl.u32 %v2905, 7
      %2908 = vset.pattern.permute.xlu0 %v2906
      %2909 = vperm.xlu0 %2908, %v2904
      %v2910 = vpop.permute.xlu0 %2909
      %v2911 = vlaneseq
      %v2912 = vshrl.u32 %v2911, 7
      %v2913 = vadd.s32 %v2912, 8
      %2914 = vset.pattern.permute.xlu0 %v2913
      %2915 = vperm.xlu0 %2914, %v2904
      %v2916 = vpop.permute.xlu0 %2915
      %v2917 = vmul.f32 %v2887, %v2897
      %v2918 = vmul.f32 %v2888, %v2903
      %v2919 = vmul.f32 %v2889, %v2910
      %v2920 = vmul.f32 %v2890, %v2916
      %v2921 = vadd.f32 %v2917, %v2918
      %v2922 = vrot.slane %v2921, 4
      %v2923 = vadd.f32 %v2921, %v2922
      %v2924 = vrot.slane %v2923, 2
      %v2925 = vadd.f32 %v2923, %v2924
      %v2926 = vrot.slane %v2925, 1
      %v2927 = vadd.f32 %v2925, %v2926
      %v2928 = vadd.f32 %v2919, %v2920
      %v2929 = vrot.slane %v2928, 4
      %v2930 = vadd.f32 %v2928, %v2929
      %v2931 = vrot.slane %v2930, 2
      %v2932 = vadd.f32 %v2930, %v2931
      %v2933 = vrot.slane %v2932, 1
      %v2934 = vadd.f32 %v2932, %v2933
      %v2935 = vmul.f32 %v2200, %v2887
      %v2936 = vmul.f32 %v2202, %v2888
      %v2937 = vmul.f32 %v2248, %v2889
      %v2938 = vmul.f32 %v2250, %v2890
      %v2939 = vperm.slane %v1817, 3
      %v2940 = vlaneseq
      %v2941 = vshrl.u32 %v2940, 7
      %2943 = vset.pattern.permute.xlu0 %v2941
      %2944 = vperm.xlu0 %2943, %v2939
      %v2945 = vpop.permute.xlu0 %2944
      %v2946 = vlaneseq
      %v2947 = vshrl.u32 %v2946, 7
      %v2948 = vadd.s32 %v2947, 8
      %2949 = vset.pattern.permute.xlu0 %v2948
      %2950 = vperm.xlu0 %2949, %v2939
      %v2951 = vpop.permute.xlu0 %2950
      %v2952 = vperm.slane %v1822, 3
      %v2953 = vlaneseq
      %v2954 = vshrl.u32 %v2953, 7
      %2956 = vset.pattern.permute.xlu0 %v2954
      %2957 = vperm.xlu0 %2956, %v2952
      %v2958 = vpop.permute.xlu0 %2957
      %v2959 = vlaneseq
      %v2960 = vshrl.u32 %v2959, 7
      %v2961 = vadd.s32 %v2960, 8
      %2962 = vset.pattern.permute.xlu0 %v2961
      %2963 = vperm.xlu0 %2962, %v2952
      %v2964 = vpop.permute.xlu0 %2963
      %v2965 = vperm.slane %v2022, 3
      %v2966 = vperm.slane %v2026, 3
      %v2967 = vmul.f32 %v2965, %v2945
      %v2968 = vmul.f32 %v2965, %v2951
      %v2969 = vmul.f32 %v2966, %v2958
      %v2970 = vmul.f32 %v2966, %v2964
      %v2971 = vadd.f32 %v2935, %v2967
      %v2972 = vadd.f32 %v2936, %v2968
      %v2973 = vadd.f32 %v2937, %v2969
      %v2974 = vadd.f32 %v2938, %v2970
      %v2975 = vperm.slane %v1855, 3
      %v2976 = vlaneseq
      %v2977 = vshrl.u32 %v2976, 7
      %2979 = vset.pattern.permute.xlu0 %v2977
      %2980 = vperm.xlu0 %2979, %v2975
      %v2981 = vpop.permute.xlu0 %2980
      %v2982 = vlaneseq
      %v2983 = vshrl.u32 %v2982, 7
      %v2984 = vadd.s32 %v2983, 8
      %2985 = vset.pattern.permute.xlu0 %v2984
      %2986 = vperm.xlu0 %2985, %v2975
      %v2987 = vpop.permute.xlu0 %2986
      %v2988 = vperm.slane %v1860, 3
      %v2989 = vlaneseq
      %v2990 = vshrl.u32 %v2989, 7
      %2992 = vset.pattern.permute.xlu0 %v2990
      %2993 = vperm.xlu0 %2992, %v2988
      %v2994 = vpop.permute.xlu0 %2993
      %v2995 = vlaneseq
      %v2996 = vshrl.u32 %v2995, 7
      %v2997 = vadd.s32 %v2996, 8
      %2998 = vset.pattern.permute.xlu0 %v2997
      %2999 = vperm.xlu0 %2998, %v2988
      %v3000 = vpop.permute.xlu0 %2999
      %v3001 = vmul.f32 %v2971, %v2981
      %v3002 = vmul.f32 %v2972, %v2987
      %v3003 = vmul.f32 %v2973, %v2994
      %v3004 = vmul.f32 %v2974, %v3000
      %v3005 = vadd.f32 %v3001, %v3002
      %v3006 = vrot.slane %v3005, 4
      %v3007 = vadd.f32 %v3005, %v3006
      %v3008 = vrot.slane %v3007, 2
      %v3009 = vadd.f32 %v3007, %v3008
      %v3010 = vrot.slane %v3009, 1
      %v3011 = vadd.f32 %v3009, %v3010
      %v3012 = vadd.f32 %v3003, %v3004
      %v3013 = vrot.slane %v3012, 4
      %v3014 = vadd.f32 %v3012, %v3013
      %v3015 = vrot.slane %v3014, 2
      %v3016 = vadd.f32 %v3014, %v3015
      %v3017 = vrot.slane %v3016, 1
      %v3018 = vadd.f32 %v3016, %v3017
      %v3019 = vmul.f32 %v2204, %v2971
      %v3020 = vmul.f32 %v2206, %v2972
      %v3021 = vmul.f32 %v2252, %v2973
      %v3022 = vmul.f32 %v2254, %v2974
      %v3023 = vperm.slane %v1817, 4
      %v3024 = vlaneseq
      %v3025 = vshrl.u32 %v3024, 7
      %3027 = vset.pattern.permute.xlu0 %v3025
      %3028 = vperm.xlu0 %3027, %v3023
      %v3029 = vpop.permute.xlu0 %3028
      %v3030 = vlaneseq
      %v3031 = vshrl.u32 %v3030, 7
      %v3032 = vadd.s32 %v3031, 8
      %3033 = vset.pattern.permute.xlu0 %v3032
      %3034 = vperm.xlu0 %3033, %v3023
      %v3035 = vpop.permute.xlu0 %3034
      %v3036 = vperm.slane %v1822, 4
      %v3037 = vlaneseq
      %v3038 = vshrl.u32 %v3037, 7
      %3040 = vset.pattern.permute.xlu0 %v3038
      %3041 = vperm.xlu0 %3040, %v3036
      %v3042 = vpop.permute.xlu0 %3041
      %v3043 = vlaneseq
      %v3044 = vshrl.u32 %v3043, 7
      %v3045 = vadd.s32 %v3044, 8
      %3046 = vset.pattern.permute.xlu0 %v3045
      %3047 = vperm.xlu0 %3046, %v3036
      %v3048 = vpop.permute.xlu0 %3047
      %v3049 = vperm.slane %v2022, 4
      %v3050 = vperm.slane %v2026, 4
      %v3051 = vmul.f32 %v3049, %v3029
      %v3052 = vmul.f32 %v3049, %v3035
      %v3053 = vmul.f32 %v3050, %v3042
      %v3054 = vmul.f32 %v3050, %v3048
      %v3055 = vadd.f32 %v3019, %v3051
      %v3056 = vadd.f32 %v3020, %v3052
      %v3057 = vadd.f32 %v3021, %v3053
      %v3058 = vadd.f32 %v3022, %v3054
      %v3059 = vperm.slane %v1855, 4
      %v3060 = vlaneseq
      %v3061 = vshrl.u32 %v3060, 7
      %3063 = vset.pattern.permute.xlu0 %v3061
      %3064 = vperm.xlu0 %3063, %v3059
      %v3065 = vpop.permute.xlu0 %3064
      %v3066 = vlaneseq
      %v3067 = vshrl.u32 %v3066, 7
      %v3068 = vadd.s32 %v3067, 8
      %3069 = vset.pattern.permute.xlu0 %v3068
      %3070 = vperm.xlu0 %3069, %v3059
      %v3071 = vpop.permute.xlu0 %3070
      %v3072 = vperm.slane %v1860, 4
      %v3073 = vlaneseq
      %v3074 = vshrl.u32 %v3073, 7
      %3076 = vset.pattern.permute.xlu0 %v3074
      %3077 = vperm.xlu0 %3076, %v3072
      %v3078 = vpop.permute.xlu0 %3077
      %v3079 = vlaneseq
      %v3080 = vshrl.u32 %v3079, 7
      %v3081 = vadd.s32 %v3080, 8
      %3082 = vset.pattern.permute.xlu0 %v3081
      %3083 = vperm.xlu0 %3082, %v3072
      %v3084 = vpop.permute.xlu0 %3083
      %v3085 = vmul.f32 %v3055, %v3065
      %v3086 = vmul.f32 %v3056, %v3071
      %v3087 = vmul.f32 %v3057, %v3078
      %v3088 = vmul.f32 %v3058, %v3084
      %v3089 = vadd.f32 %v3085, %v3086
      %v3090 = vrot.slane %v3089, 4
      %v3091 = vadd.f32 %v3089, %v3090
      %v3092 = vrot.slane %v3091, 2
      %v3093 = vadd.f32 %v3091, %v3092
      %v3094 = vrot.slane %v3093, 1
      %v3095 = vadd.f32 %v3093, %v3094
      %v3096 = vadd.f32 %v3087, %v3088
      %v3097 = vrot.slane %v3096, 4
      %v3098 = vadd.f32 %v3096, %v3097
      %v3099 = vrot.slane %v3098, 2
      %v3100 = vadd.f32 %v3098, %v3099
      %v3101 = vrot.slane %v3100, 1
      %v3102 = vadd.f32 %v3100, %v3101
      %v3103 = vmul.f32 %v2208, %v3055
      %v3104 = vmul.f32 %v2210, %v3056
      %v3105 = vmul.f32 %v2256, %v3057
      %v3106 = vmul.f32 %v2258, %v3058
      %v3107 = vperm.slane %v1817, 5
      %v3108 = vlaneseq
      %v3109 = vshrl.u32 %v3108, 7
      %3111 = vset.pattern.permute.xlu0 %v3109
      %3112 = vperm.xlu0 %3111, %v3107
      %v3113 = vpop.permute.xlu0 %3112
      %v3114 = vlaneseq
      %v3115 = vshrl.u32 %v3114, 7
      %v3116 = vadd.s32 %v3115, 8
      %3117 = vset.pattern.permute.xlu0 %v3116
      %3118 = vperm.xlu0 %3117, %v3107
      %v3119 = vpop.permute.xlu0 %3118
      %v3120 = vperm.slane %v1822, 5
      %v3121 = vlaneseq
      %v3122 = vshrl.u32 %v3121, 7
      %3124 = vset.pattern.permute.xlu0 %v3122
      %3125 = vperm.xlu0 %3124, %v3120
      %v3126 = vpop.permute.xlu0 %3125
      %v3127 = vlaneseq
      %v3128 = vshrl.u32 %v3127, 7
      %v3129 = vadd.s32 %v3128, 8
      %3130 = vset.pattern.permute.xlu0 %v3129
      %3131 = vperm.xlu0 %3130, %v3120
      %v3132 = vpop.permute.xlu0 %3131
      %v3133 = vperm.slane %v2022, 5
      %v3134 = vperm.slane %v2026, 5
      %v3135 = vmul.f32 %v3133, %v3113
      %v3136 = vmul.f32 %v3133, %v3119
      %v3137 = vmul.f32 %v3134, %v3126
      %v3138 = vmul.f32 %v3134, %v3132
      %v3139 = vadd.f32 %v3103, %v3135
      %v3140 = vadd.f32 %v3104, %v3136
      %v3141 = vadd.f32 %v3105, %v3137
      %v3142 = vadd.f32 %v3106, %v3138
      %v3143 = vperm.slane %v1855, 5
      %v3144 = vlaneseq
      %v3145 = vshrl.u32 %v3144, 7
      %3147 = vset.pattern.permute.xlu0 %v3145
      %3148 = vperm.xlu0 %3147, %v3143
      %v3149 = vpop.permute.xlu0 %3148
      %v3150 = vlaneseq
      %v3151 = vshrl.u32 %v3150, 7
      %v3152 = vadd.s32 %v3151, 8
      %3153 = vset.pattern.permute.xlu0 %v3152
      %3154 = vperm.xlu0 %3153, %v3143
      %v3155 = vpop.permute.xlu0 %3154
      %v3156 = vperm.slane %v1860, 5
      %v3157 = vlaneseq
      %v3158 = vshrl.u32 %v3157, 7
      %3160 = vset.pattern.permute.xlu0 %v3158
      %3161 = vperm.xlu0 %3160, %v3156
      %v3162 = vpop.permute.xlu0 %3161
      %v3163 = vlaneseq
      %v3164 = vshrl.u32 %v3163, 7
      %v3165 = vadd.s32 %v3164, 8
      %3166 = vset.pattern.permute.xlu0 %v3165
      %3167 = vperm.xlu0 %3166, %v3156
      %v3168 = vpop.permute.xlu0 %3167
      %v3169 = vmul.f32 %v3139, %v3149
      %v3170 = vmul.f32 %v3140, %v3155
      %v3171 = vmul.f32 %v3141, %v3162
      %v3172 = vmul.f32 %v3142, %v3168
      %v3173 = vadd.f32 %v3169, %v3170
      %v3174 = vrot.slane %v3173, 4
      %v3175 = vadd.f32 %v3173, %v3174
      %v3176 = vrot.slane %v3175, 2
      %v3177 = vadd.f32 %v3175, %v3176
      %v3178 = vrot.slane %v3177, 1
      %v3179 = vadd.f32 %v3177, %v3178
      %v3180 = vadd.f32 %v3171, %v3172
      %v3181 = vrot.slane %v3180, 4
      %v3182 = vadd.f32 %v3180, %v3181
      %v3183 = vrot.slane %v3182, 2
      %v3184 = vadd.f32 %v3182, %v3183
      %v3185 = vrot.slane %v3184, 1
      %v3186 = vadd.f32 %v3184, %v3185
      %v3187 = vmul.f32 %v2212, %v3139
      %v3188 = vmul.f32 %v2214, %v3140
      %v3189 = vmul.f32 %v2260, %v3141
      %v3190 = vmul.f32 %v2262, %v3142
      %v3191 = vperm.slane %v1817, 6
      %v3192 = vlaneseq
      %v3193 = vshrl.u32 %v3192, 7
      %3195 = vset.pattern.permute.xlu0 %v3193
      %3196 = vperm.xlu0 %3195, %v3191
      %v3197 = vpop.permute.xlu0 %3196
      %v3198 = vlaneseq
      %v3199 = vshrl.u32 %v3198, 7
      %v3200 = vadd.s32 %v3199, 8
      %3201 = vset.pattern.permute.xlu0 %v3200
      %3202 = vperm.xlu0 %3201, %v3191
      %v3203 = vpop.permute.xlu0 %3202
      %v3204 = vperm.slane %v1822, 6
      %v3205 = vlaneseq
      %v3206 = vshrl.u32 %v3205, 7
      %3208 = vset.pattern.permute.xlu0 %v3206
      %3209 = vperm.xlu0 %3208, %v3204
      %v3210 = vpop.permute.xlu0 %3209
      %v3211 = vlaneseq
      %v3212 = vshrl.u32 %v3211, 7
      %v3213 = vadd.s32 %v3212, 8
      %3214 = vset.pattern.permute.xlu0 %v3213
      %3215 = vperm.xlu0 %3214, %v3204
      %v3216 = vpop.permute.xlu0 %3215
      %v3217 = vperm.slane %v2022, 6
      %v3218 = vperm.slane %v2026, 6
      %v3219 = vmul.f32 %v3217, %v3197
      %v3220 = vmul.f32 %v3217, %v3203
      %v3221 = vmul.f32 %v3218, %v3210
      %v3222 = vmul.f32 %v3218, %v3216
      %v3223 = vadd.f32 %v3187, %v3219
      %v3224 = vadd.f32 %v3188, %v3220
      %v3225 = vadd.f32 %v3189, %v3221
      %v3226 = vadd.f32 %v3190, %v3222
      %v3227 = vperm.slane %v1855, 6
      %v3228 = vlaneseq
      %v3229 = vshrl.u32 %v3228, 7
      %3231 = vset.pattern.permute.xlu0 %v3229
      %3232 = vperm.xlu0 %3231, %v3227
      %v3233 = vpop.permute.xlu0 %3232
      %v3234 = vlaneseq
      %v3235 = vshrl.u32 %v3234, 7
      %v3236 = vadd.s32 %v3235, 8
      %3237 = vset.pattern.permute.xlu0 %v3236
      %3238 = vperm.xlu0 %3237, %v3227
      %v3239 = vpop.permute.xlu0 %3238
      %v3240 = vperm.slane %v1860, 6
      %v3241 = vlaneseq
      %v3242 = vshrl.u32 %v3241, 7
      %3244 = vset.pattern.permute.xlu0 %v3242
      %3245 = vperm.xlu0 %3244, %v3240
      %v3246 = vpop.permute.xlu0 %3245
      %v3247 = vlaneseq
      %v3248 = vshrl.u32 %v3247, 7
      %v3249 = vadd.s32 %v3248, 8
      %3250 = vset.pattern.permute.xlu0 %v3249
      %3251 = vperm.xlu0 %3250, %v3240
      %v3252 = vpop.permute.xlu0 %3251
      %v3253 = vmul.f32 %v3223, %v3233
      %v3254 = vmul.f32 %v3224, %v3239
      %v3255 = vmul.f32 %v3225, %v3246
      %v3256 = vmul.f32 %v3226, %v3252
      %v3257 = vadd.f32 %v3253, %v3254
      %v3258 = vrot.slane %v3257, 4
      %v3259 = vadd.f32 %v3257, %v3258
      %v3260 = vrot.slane %v3259, 2
      %v3261 = vadd.f32 %v3259, %v3260
      %v3262 = vrot.slane %v3261, 1
      %v3263 = vadd.f32 %v3261, %v3262
      %v3264 = vadd.f32 %v3255, %v3256
      %v3265 = vrot.slane %v3264, 4
      %v3266 = vadd.f32 %v3264, %v3265
      %v3267 = vrot.slane %v3266, 2
      %v3268 = vadd.f32 %v3266, %v3267
      %v3269 = vrot.slane %v3268, 1
      %v3270 = vadd.f32 %v3268, %v3269
      %vm3271 = vcmask 1040384
      %v3272 = vsel %vm3271, %v2339, %v2423
      %v3273 = vsel %vm3271, %v2346, %v2430
      %vm3274 = vcmask 1041408
      %v3275 = vsel %vm3274, %v3272, %v2507
      %v3276 = vsel %vm3274, %v3273, %v2514
      %v3277 = vsel %vm1293, %v3275, %v2591
      %v3278 = vsel %vm1293, %v3276, %v2598
      %vm3279 = vcmask 1043456
      %v3280 = vsel %vm3279, %v3277, %v2675
      %v3281 = vsel %vm3279, %v3278, %v2682
      %v3282 = vsel %vm1096, %v3280, %v2759
      %v3283 = vsel %vm1096, %v3281, %v2766
      %v3284 = vsel %vm1045, %v3282, %v2843
      %v3285 = vsel %vm1045, %v3283, %v2850
      %v3286 = vsel %vm994, %v3284, %v2927
      %v3287 = vsel %vm994, %v3285, %v2934
      %v3288 = vsel %vm3271, %v3011, %v3095
      %v3289 = vsel %vm3271, %v3018, %v3102
      %v3290 = vsel %vm3274, %v3288, %v3179
      %v3291 = vsel %vm3274, %v3289, %v3186
      %v3292 = vsel %vm1293, %v3290, %v3263
      %v3293 = vsel %vm1293, %v3291, %v3270
      %3298 = vst [vmem:[#allocation1] sm:$0xff] %v2013
      %s3299 = scalar_lea.vmem [#allocation1], 3
      %v3300 = vld [vmem:[%s3299] ss:$9 sm:$0xff]
      %s3301 = scalar_lea.vmem [#allocation1], 4
      %v3302 = vld [vmem:[%s3301] ss:$9 sm:$0xff]
      %s3303 = scalar_lea.vmem [#allocation1], 5
      %v3304 = vld [vmem:[%s3303] ss:$9 sm:$0xff]
      %s3305 = scalar_lea.vmem [#allocation1], 6
      %v3306 = vld [vmem:[%s3305] ss:$9 sm:$0xff]
      %s3307 = scalar_lea.vmem [#allocation1], 7
      %v3308 = vld [vmem:[%s3307] ss:$9 sm:$0xff]
      %3309 = vst [vmem:[#allocation1] sm:$0xff] %v2015
      %v3310 = vld [vmem:[#allocation1] ss:$9 sm:$0xff]
      %s3311 = scalar_lea.vmem [#allocation1], 1
      %v3312 = vld [vmem:[%s3311] ss:$9 sm:$0xff]
      %s3313 = scalar_lea.vmem [#allocation1], 2
      %v3314 = vld [vmem:[%s3313] ss:$9 sm:$0xff]
      %v3315 = vld [vmem:[%s3299] ss:$9 sm:$0xff]
      %v3316 = vld [vmem:[%s3301] ss:$9 sm:$0xff]
      %v3317 = vld [vmem:[%s3303] ss:$9 sm:$0xff]
      %v3318 = vld [vmem:[%s3305] ss:$9 sm:$0xff]
      %3319 = vst [vmem:[#allocation1] sm:$0xff] %v2017
      %v3320 = vld [vmem:[%s3299] ss:$9 sm:$0xff]
      %v3321 = vld [vmem:[%s3301] ss:$9 sm:$0xff]
      %v3322 = vld [vmem:[%s3303] ss:$9 sm:$0xff]
      %v3323 = vld [vmem:[%s3305] ss:$9 sm:$0xff]
      %v3324 = vld [vmem:[%s3307] ss:$9 sm:$0xff]
      %3325 = vst [vmem:[#allocation1] sm:$0xff] %v2019
      %v3326 = vld [vmem:[#allocation1] ss:$9 sm:$0xff]
      %v3327 = vld [vmem:[%s3311] ss:$9 sm:$0xff]
      %v3328 = vld [vmem:[%s3313] ss:$9 sm:$0xff]
      %v3329 = vld [vmem:[%s3299] ss:$9 sm:$0xff]
      %v3330 = vld [vmem:[%s3301] ss:$9 sm:$0xff]
      %v3331 = vld [vmem:[%s3303] ss:$9 sm:$0xff]
      %v3332 = vld [vmem:[%s3305] ss:$9 sm:$0xff]
      %v3333 = vperm.slane %v3300, 0
      %v3334 = vperm.slane %v3302, 0
      %v3335 = vperm.slane %v3304, 0
      %v3336 = vperm.slane %v3306, 0
      %v3337 = vperm.slane %v3308, 0
      %v3338 = vperm.slane %v3310, 0
      %v3339 = vperm.slane %v3312, 0
      %v3340 = vperm.slane %v3314, 0
      %v3341 = vperm.slane %v3315, 0
      %v3342 = vperm.slane %v3316, 0
      %v3343 = vperm.slane %v3317, 0
      %v3344 = vperm.slane %v3318, 0
      %v3345 = vperm.slane %v3320, 0
      %v3346 = vperm.slane %v3321, 0
      %v3347 = vperm.slane %v3322, 0
      %v3348 = vperm.slane %v3323, 0
      %v3349 = vperm.slane %v3324, 0
      %v3350 = vperm.slane %v3326, 0
      %v3351 = vperm.slane %v3327, 0
      %v3352 = vperm.slane %v3328, 0
      %v3353 = vperm.slane %v3329, 0
      %v3354 = vperm.slane %v3330, 0
      %v3355 = vperm.slane %v3331, 0
      %v3356 = vperm.slane %v3332, 0
      %v3381 = vmul.f32 %v3333, %v2029
      %v3382 = vmul.f32 %v3333, %v2031
      %v3383 = vmul.f32 %v3334, %v2029
      %v3384 = vmul.f32 %v3334, %v2031
      %v3385 = vmul.f32 %v3335, %v2029
      %v3386 = vmul.f32 %v3335, %v2031
      %v3387 = vmul.f32 %v3336, %v2029
      %v3388 = vmul.f32 %v3336, %v2031
      %v3389 = vmul.f32 %v3337, %v2029
      %v3390 = vmul.f32 %v3337, %v2031
      %v3391 = vmul.f32 %v3338, %v2029
      %v3392 = vmul.f32 %v3338, %v2031
      %v3393 = vmul.f32 %v3339, %v2029
      %v3394 = vmul.f32 %v3339, %v2031
      %v3395 = vmul.f32 %v3340, %v2029
      %v3396 = vmul.f32 %v3340, %v2031
      %v3397 = vmul.f32 %v3341, %v2029
      %v3398 = vmul.f32 %v3341, %v2031
      %v3399 = vmul.f32 %v3342, %v2029
      %v3400 = vmul.f32 %v3342, %v2031
      %v3401 = vmul.f32 %v3343, %v2029
      %v3402 = vmul.f32 %v3343, %v2031
      %v3403 = vmul.f32 %v3344, %v2029
      %v3404 = vmul.f32 %v3344, %v2031
      %v3405 = vmul.f32 %v3345, %v2029
      %v3406 = vmul.f32 %v3345, %v2031
      %v3407 = vmul.f32 %v3346, %v2029
      %v3408 = vmul.f32 %v3346, %v2031
      %v3409 = vmul.f32 %v3347, %v2029
      %v3410 = vmul.f32 %v3347, %v2031
      %v3411 = vmul.f32 %v3348, %v2029
      %v3412 = vmul.f32 %v3348, %v2031
      %v3413 = vmul.f32 %v3349, %v2029
      %v3414 = vmul.f32 %v3349, %v2031
      %v3415 = vmul.f32 %v3350, %v2029
      %v3416 = vmul.f32 %v3350, %v2031
      %v3417 = vmul.f32 %v3351, %v2029
      %v3418 = vmul.f32 %v3351, %v2031
      %v3419 = vmul.f32 %v3352, %v2029
      %v3420 = vmul.f32 %v3352, %v2031
      %v3421 = vmul.f32 %v3353, %v2029
      %v3422 = vmul.f32 %v3353, %v2031
      %v3423 = vmul.f32 %v3354, %v2029
      %v3424 = vmul.f32 %v3354, %v2031
      %v3425 = vmul.f32 %v3355, %v2029
      %v3426 = vmul.f32 %v3355, %v2031
      %v3427 = vmul.f32 %v3356, %v2029
      %v3428 = vmul.f32 %v3356, %v2031
      %v3429 = vmul.f32 %v3381, 1.442695
      %v3430 = vpow.pop %v3429
      %v3431 = vmul.f32 %v3382, 1.442695
      %v3432 = vpow.pop %v3431
      %v3433 = vmul.f32 %v3383, 1.442695
      %v3434 = vpow.pop %v3433
      %v3435 = vmul.f32 %v3384, 1.442695
      %v3436 = vpow.pop %v3435
      %v3437 = vmul.f32 %v3385, 1.442695
      %v3438 = vpow.pop %v3437
      %v3439 = vmul.f32 %v3386, 1.442695
      %v3440 = vpow.pop %v3439
      %v3441 = vmul.f32 %v3387, 1.442695
      %v3442 = vpow.pop %v3441
      %v3443 = vmul.f32 %v3388, 1.442695
      %v3444 = vpow.pop %v3443
      %v3445 = vmul.f32 %v3389, 1.442695
      %v3446 = vpow.pop %v3445
      %v3447 = vmul.f32 %v3390, 1.442695
      %v3448 = vpow.pop %v3447
      %v3449 = vmul.f32 %v3391, 1.442695
      %v3450 = vpow.pop %v3449
      %v3451 = vmul.f32 %v3392, 1.442695
      %v3452 = vpow.pop %v3451
      %v3453 = vmul.f32 %v3393, 1.442695
      %v3454 = vpow.pop %v3453
      %v3455 = vmul.f32 %v3394, 1.442695
      %v3456 = vpow.pop %v3455
      %v3457 = vmul.f32 %v3395, 1.442695
      %v3458 = vpow.pop %v3457
      %v3459 = vmul.f32 %v3396, 1.442695
      %v3460 = vpow.pop %v3459
      %v3461 = vmul.f32 %v3397, 1.442695
      %v3462 = vpow.pop %v3461
      %v3463 = vmul.f32 %v3398, 1.442695
      %v3464 = vpow.pop %v3463
      %v3465 = vmul.f32 %v3399, 1.442695
      %v3466 = vpow.pop %v3465
      %v3467 = vmul.f32 %v3400, 1.442695
      %v3468 = vpow.pop %v3467
      %v3469 = vmul.f32 %v3401, 1.442695
      %v3470 = vpow.pop %v3469
      %v3471 = vmul.f32 %v3402, 1.442695
      %v3472 = vpow.pop %v3471
      %v3473 = vmul.f32 %v3403, 1.442695
      %v3474 = vpow.pop %v3473
      %v3475 = vmul.f32 %v3404, 1.442695
      %v3476 = vpow.pop %v3475
      %v3477 = vmul.f32 %v3405, 1.442695
      %v3478 = vpow.pop %v3477
      %v3479 = vmul.f32 %v3406, 1.442695
      %v3480 = vpow.pop %v3479
      %v3481 = vmul.f32 %v3407, 1.442695
      %v3482 = vpow.pop %v3481
      %v3483 = vmul.f32 %v3408, 1.442695
      %v3484 = vpow.pop %v3483
      %v3485 = vmul.f32 %v3409, 1.442695
      %v3486 = vpow.pop %v3485
      %v3487 = vmul.f32 %v3410, 1.442695
      %v3488 = vpow.pop %v3487
      %v3489 = vmul.f32 %v3411, 1.442695
      %v3490 = vpow.pop %v3489
      %v3491 = vmul.f32 %v3412, 1.442695
      %v3492 = vpow.pop %v3491
      %v3493 = vmul.f32 %v3413, 1.442695
      %v3494 = vpow.pop %v3493
      %v3495 = vmul.f32 %v3414, 1.442695
      %v3496 = vpow.pop %v3495
      %v3497 = vmul.f32 %v3415, 1.442695
      %v3498 = vpow.pop %v3497
      %v3499 = vmul.f32 %v3416, 1.442695
      %v3500 = vpow.pop %v3499
      %v3501 = vmul.f32 %v3417, 1.442695
      %v3502 = vpow.pop %v3501
      %v3503 = vmul.f32 %v3418, 1.442695
      %v3504 = vpow.pop %v3503
      %v3505 = vmul.f32 %v3419, 1.442695
      %v3506 = vpow.pop %v3505
      %v3507 = vmul.f32 %v3420, 1.442695
      %v3508 = vpow.pop %v3507
      %v3509 = vmul.f32 %v3421, 1.442695
      %v3510 = vpow.pop %v3509
      %v3511 = vmul.f32 %v3422, 1.442695
      %v3512 = vpow.pop %v3511
      %v3513 = vmul.f32 %v3423, 1.442695
      %v3514 = vpow.pop %v3513
      %v3515 = vmul.f32 %v3424, 1.442695
      %v3516 = vpow.pop %v3515
      %v3517 = vmul.f32 %v3425, 1.442695
      %v3518 = vpow.pop %v3517
      %v3519 = vmul.f32 %v3426, 1.442695
      %v3520 = vpow.pop %v3519
      %v3521 = vmul.f32 %v3427, 1.442695
      %v3522 = vpow.pop %v3521
      %v3523 = vmul.f32 %v3428, 1.442695
      %v3524 = vpow.pop %v3523
      %v3525 = vmul.f32 %v3430, 0.0
      %v3526 = vmul.f32 %v3432, 0.0
      %v3527 = vmul.f32 %v3478, 0.0
      %v3528 = vmul.f32 %v3480, 0.0
      %v3529 = vperm.slane %v2021, 3
      %v3530 = vperm.slane %v2025, 3
      %v3531 = vmul.f32 %v3529, %v2273
      %v3532 = vmul.f32 %v3529, %v2279
      %v3533 = vmul.f32 %v3530, %v2286
      %v3534 = vmul.f32 %v3530, %v2292
      %v3535 = vadd.f32 %v3525, %v3531
      %v3536 = vadd.f32 %v3526, %v3532
      %v3537 = vadd.f32 %v3527, %v3533
      %v3538 = vadd.f32 %v3528, %v3534
      %v3539 = vmul.f32 %v3535, %v2309
      %v3540 = vmul.f32 %v3536, %v2315
      %v3541 = vmul.f32 %v3537, %v2322
      %v3542 = vmul.f32 %v3538, %v2328
      %v3543 = vadd.f32 %v3539, %v3540
      %v3544 = vrot.slane %v3543, 4
      %v3545 = vadd.f32 %v3543, %v3544
      %v3546 = vrot.slane %v3545, 2
      %v3547 = vadd.f32 %v3545, %v3546
      %v3548 = vrot.slane %v3547, 1
      %v3549 = vadd.f32 %v3547, %v3548
      %v3550 = vadd.f32 %v3541, %v3542
      %v3551 = vrot.slane %v3550, 4
      %v3552 = vadd.f32 %v3550, %v3551
      %v3553 = vrot.slane %v3552, 2
      %v3554 = vadd.f32 %v3552, %v3553
      %v3555 = vrot.slane %v3554, 1
      %v3556 = vadd.f32 %v3554, %v3555
      %v3557 = vmul.f32 %v3434, %v3535
      %v3558 = vmul.f32 %v3436, %v3536
      %v3559 = vmul.f32 %v3482, %v3537
      %v3560 = vmul.f32 %v3484, %v3538
      %v3561 = vperm.slane %v2021, 4
      %v3562 = vperm.slane %v2025, 4
      %v3563 = vmul.f32 %v3561, %v2357
      %v3564 = vmul.f32 %v3561, %v2363
      %v3565 = vmul.f32 %v3562, %v2370
      %v3566 = vmul.f32 %v3562, %v2376
      %v3567 = vadd.f32 %v3557, %v3563
      %v3568 = vadd.f32 %v3558, %v3564
      %v3569 = vadd.f32 %v3559, %v3565
      %v3570 = vadd.f32 %v3560, %v3566
      %v3571 = vmul.f32 %v3567, %v2393
      %v3572 = vmul.f32 %v3568, %v2399
      %v3573 = vmul.f32 %v3569, %v2406
      %v3574 = vmul.f32 %v3570, %v2412
      %v3575 = vadd.f32 %v3571, %v3572
      %v3576 = vrot.slane %v3575, 4
      %v3577 = vadd.f32 %v3575, %v3576
      %v3578 = vrot.slane %v3577, 2
      %v3579 = vadd.f32 %v3577, %v3578
      %v3580 = vrot.slane %v3579, 1
      %v3581 = vadd.f32 %v3579, %v3580
      %v3582 = vadd.f32 %v3573, %v3574
      %v3583 = vrot.slane %v3582, 4
      %v3584 = vadd.f32 %v3582, %v3583
      %v3585 = vrot.slane %v3584, 2
      %v3586 = vadd.f32 %v3584, %v3585
      %v3587 = vrot.slane %v3586, 1
      %v3588 = vadd.f32 %v3586, %v3587
      %v3589 = vmul.f32 %v3438, %v3567
      %v3590 = vmul.f32 %v3440, %v3568
      %v3591 = vmul.f32 %v3486, %v3569
      %v3592 = vmul.f32 %v3488, %v3570
      %v3593 = vperm.slane %v2021, 5
      %v3594 = vperm.slane %v2025, 5
      %v3595 = vmul.f32 %v3593, %v2441
      %v3596 = vmul.f32 %v3593, %v2447
      %v3597 = vmul.f32 %v3594, %v2454
      %v3598 = vmul.f32 %v3594, %v2460
      %v3599 = vadd.f32 %v3589, %v3595
      %v3600 = vadd.f32 %v3590, %v3596
      %v3601 = vadd.f32 %v3591, %v3597
      %v3602 = vadd.f32 %v3592, %v3598
      %v3603 = vmul.f32 %v3599, %v2477
      %v3604 = vmul.f32 %v3600, %v2483
      %v3605 = vmul.f32 %v3601, %v2490
      %v3606 = vmul.f32 %v3602, %v2496
      %v3607 = vadd.f32 %v3603, %v3604
      %v3608 = vrot.slane %v3607, 4
      %v3609 = vadd.f32 %v3607, %v3608
      %v3610 = vrot.slane %v3609, 2
      %v3611 = vadd.f32 %v3609, %v3610
      %v3612 = vrot.slane %v3611, 1
      %v3613 = vadd.f32 %v3611, %v3612
      %v3614 = vadd.f32 %v3605, %v3606
      %v3615 = vrot.slane %v3614, 4
      %v3616 = vadd.f32 %v3614, %v3615
      %v3617 = vrot.slane %v3616, 2
      %v3618 = vadd.f32 %v3616, %v3617
      %v3619 = vrot.slane %v3618, 1
      %v3620 = vadd.f32 %v3618, %v3619
      %v3621 = vmul.f32 %v3442, %v3599
      %v3622 = vmul.f32 %v3444, %v3600
      %v3623 = vmul.f32 %v3490, %v3601
      %v3624 = vmul.f32 %v3492, %v3602
      %v3625 = vperm.slane %v2021, 6
      %v3626 = vperm.slane %v2025, 6
      %v3627 = vmul.f32 %v3625, %v2525
      %v3628 = vmul.f32 %v3625, %v2531
      %v3629 = vmul.f32 %v3626, %v2538
      %v3630 = vmul.f32 %v3626, %v2544
      %v3631 = vadd.f32 %v3621, %v3627
      %v3632 = vadd.f32 %v3622, %v3628
      %v3633 = vadd.f32 %v3623, %v3629
      %v3634 = vadd.f32 %v3624, %v3630
      %v3635 = vmul.f32 %v3631, %v2561
      %v3636 = vmul.f32 %v3632, %v2567
      %v3637 = vmul.f32 %v3633, %v2574
      %v3638 = vmul.f32 %v3634, %v2580
      %v3639 = vadd.f32 %v3635, %v3636
      %v3640 = vrot.slane %v3639, 4
      %v3641 = vadd.f32 %v3639, %v3640
      %v3642 = vrot.slane %v3641, 2
      %v3643 = vadd.f32 %v3641, %v3642
      %v3644 = vrot.slane %v3643, 1
      %v3645 = vadd.f32 %v3643, %v3644
      %v3646 = vadd.f32 %v3637, %v3638
      %v3647 = vrot.slane %v3646, 4
      %v3648 = vadd.f32 %v3646, %v3647
      %v3649 = vrot.slane %v3648, 2
      %v3650 = vadd.f32 %v3648, %v3649
      %v3651 = vrot.slane %v3650, 1
      %v3652 = vadd.f32 %v3650, %v3651
      %v3653 = vmul.f32 %v3446, %v3631
      %v3654 = vmul.f32 %v3448, %v3632
      %v3655 = vmul.f32 %v3494, %v3633
      %v3656 = vmul.f32 %v3496, %v3634
      %v3657 = vperm.slane %v2021, 7
      %v3658 = vperm.slane %v2025, 7
      %v3659 = vmul.f32 %v3657, %v2609
      %v3660 = vmul.f32 %v3657, %v2615
      %v3661 = vmul.f32 %v3658, %v2622
      %v3662 = vmul.f32 %v3658, %v2628
      %v3663 = vadd.f32 %v3653, %v3659
      %v3664 = vadd.f32 %v3654, %v3660
      %v3665 = vadd.f32 %v3655, %v3661
      %v3666 = vadd.f32 %v3656, %v3662
      %v3667 = vmul.f32 %v3663, %v2645
      %v3668 = vmul.f32 %v3664, %v2651
      %v3669 = vmul.f32 %v3665, %v2658
      %v3670 = vmul.f32 %v3666, %v2664
      %v3671 = vadd.f32 %v3667, %v3668
      %v3672 = vrot.slane %v3671, 4
      %v3673 = vadd.f32 %v3671, %v3672
      %v3674 = vrot.slane %v3673, 2
      %v3675 = vadd.f32 %v3673, %v3674
      %v3676 = vrot.slane %v3675, 1
      %v3677 = vadd.f32 %v3675, %v3676
      %v3678 = vadd.f32 %v3669, %v3670
      %v3679 = vrot.slane %v3678, 4
      %v3680 = vadd.f32 %v3678, %v3679
      %v3681 = vrot.slane %v3680, 2
      %v3682 = vadd.f32 %v3680, %v3681
      %v3683 = vrot.slane %v3682, 1
      %v3684 = vadd.f32 %v3682, %v3683
      %v3685 = vmul.f32 %v3450, %v3663
      %v3686 = vmul.f32 %v3452, %v3664
      %v3687 = vmul.f32 %v3498, %v3665
      %v3688 = vmul.f32 %v3500, %v3666
      %v3689 = vperm.slane %v2023, 0
      %v3690 = vperm.slane %v2027, 0
      %v3691 = vmul.f32 %v3689, %v2693
      %v3692 = vmul.f32 %v3689, %v2699
      %v3693 = vmul.f32 %v3690, %v2706
      %v3694 = vmul.f32 %v3690, %v2712
      %v3695 = vadd.f32 %v3685, %v3691
      %v3696 = vadd.f32 %v3686, %v3692
      %v3697 = vadd.f32 %v3687, %v3693
      %v3698 = vadd.f32 %v3688, %v3694
      %v3699 = vmul.f32 %v3695, %v2729
      %v3700 = vmul.f32 %v3696, %v2735
      %v3701 = vmul.f32 %v3697, %v2742
      %v3702 = vmul.f32 %v3698, %v2748
      %v3703 = vadd.f32 %v3699, %v3700
      %v3704 = vrot.slane %v3703, 4
      %v3705 = vadd.f32 %v3703, %v3704
      %v3706 = vrot.slane %v3705, 2
      %v3707 = vadd.f32 %v3705, %v3706
      %v3708 = vrot.slane %v3707, 1
      %v3709 = vadd.f32 %v3707, %v3708
      %v3710 = vadd.f32 %v3701, %v3702
      %v3711 = vrot.slane %v3710, 4
      %v3712 = vadd.f32 %v3710, %v3711
      %v3713 = vrot.slane %v3712, 2
      %v3714 = vadd.f32 %v3712, %v3713
      %v3715 = vrot.slane %v3714, 1
      %v3716 = vadd.f32 %v3714, %v3715
      %v3717 = vmul.f32 %v3454, %v3695
      %v3718 = vmul.f32 %v3456, %v3696
      %v3719 = vmul.f32 %v3502, %v3697
      %v3720 = vmul.f32 %v3504, %v3698
      %v3721 = vperm.slane %v2023, 1
      %v3722 = vperm.slane %v2027, 1
      %v3723 = vmul.f32 %v3721, %v2777
      %v3724 = vmul.f32 %v3721, %v2783
      %v3725 = vmul.f32 %v3722, %v2790
      %v3726 = vmul.f32 %v3722, %v2796
      %v3727 = vadd.f32 %v3717, %v3723
      %v3728 = vadd.f32 %v3718, %v3724
      %v3729 = vadd.f32 %v3719, %v3725
      %v3730 = vadd.f32 %v3720, %v3726
      %v3731 = vmul.f32 %v3727, %v2813
      %v3732 = vmul.f32 %v3728, %v2819
      %v3733 = vmul.f32 %v3729, %v2826
      %v3734 = vmul.f32 %v3730, %v2832
      %v3735 = vadd.f32 %v3731, %v3732
      %v3736 = vrot.slane %v3735, 4
      %v3737 = vadd.f32 %v3735, %v3736
      %v3738 = vrot.slane %v3737, 2
      %v3739 = vadd.f32 %v3737, %v3738
      %v3740 = vrot.slane %v3739, 1
      %v3741 = vadd.f32 %v3739, %v3740
      %v3742 = vadd.f32 %v3733, %v3734
      %v3743 = vrot.slane %v3742, 4
      %v3744 = vadd.f32 %v3742, %v3743
      %v3745 = vrot.slane %v3744, 2
      %v3746 = vadd.f32 %v3744, %v3745
      %v3747 = vrot.slane %v3746, 1
      %v3748 = vadd.f32 %v3746, %v3747
      %v3749 = vmul.f32 %v3458, %v3727
      %v3750 = vmul.f32 %v3460, %v3728
      %v3751 = vmul.f32 %v3506, %v3729
      %v3752 = vmul.f32 %v3508, %v3730
      %v3753 = vperm.slane %v2023, 2
      %v3754 = vperm.slane %v2027, 2
      %v3755 = vmul.f32 %v3753, %v2861
      %v3756 = vmul.f32 %v3753, %v2867
      %v3757 = vmul.f32 %v3754, %v2874
      %v3758 = vmul.f32 %v3754, %v2880
      %v3759 = vadd.f32 %v3749, %v3755
      %v3760 = vadd.f32 %v3750, %v3756
      %v3761 = vadd.f32 %v3751, %v3757
      %v3762 = vadd.f32 %v3752, %v3758
      %v3763 = vmul.f32 %v3759, %v2897
      %v3764 = vmul.f32 %v3760, %v2903
      %v3765 = vmul.f32 %v3761, %v2910
      %v3766 = vmul.f32 %v3762, %v2916
      %v3767 = vadd.f32 %v3763, %v3764
      %v3768 = vrot.slane %v3767, 4
      %v3769 = vadd.f32 %v3767, %v3768
      %v3770 = vrot.slane %v3769, 2
      %v3771 = vadd.f32 %v3769, %v3770
      %v3772 = vrot.slane %v3771, 1
      %v3773 = vadd.f32 %v3771, %v3772
      %v3774 = vadd.f32 %v3765, %v3766
      %v3775 = vrot.slane %v3774, 4
      %v3776 = vadd.f32 %v3774, %v3775
      %v3777 = vrot.slane %v3776, 2
      %v3778 = vadd.f32 %v3776, %v3777
      %v3779 = vrot.slane %v3778, 1
      %v3780 = vadd.f32 %v3778, %v3779
      %v3781 = vmul.f32 %v3462, %v3759
      %v3782 = vmul.f32 %v3464, %v3760
      %v3783 = vmul.f32 %v3510, %v3761
      %v3784 = vmul.f32 %v3512, %v3762
      %v3785 = vperm.slane %v2023, 3
      %v3786 = vperm.slane %v2027, 3
      %v3787 = vmul.f32 %v3785, %v2945
      %v3788 = vmul.f32 %v3785, %v2951
      %v3789 = vmul.f32 %v3786, %v2958
      %v3790 = vmul.f32 %v3786, %v2964
      %v3791 = vadd.f32 %v3781, %v3787
      %v3792 = vadd.f32 %v3782, %v3788
      %v3793 = vadd.f32 %v3783, %v3789
      %v3794 = vadd.f32 %v3784, %v3790
      %v3795 = vmul.f32 %v3791, %v2981
      %v3796 = vmul.f32 %v3792, %v2987
      %v3797 = vmul.f32 %v3793, %v2994
      %v3798 = vmul.f32 %v3794, %v3000
      %v3799 = vadd.f32 %v3795, %v3796
      %v3800 = vrot.slane %v3799, 4
      %v3801 = vadd.f32 %v3799, %v3800
      %v3802 = vrot.slane %v3801, 2
      %v3803 = vadd.f32 %v3801, %v3802
      %v3804 = vrot.slane %v3803, 1
      %v3805 = vadd.f32 %v3803, %v3804
      %v3806 = vadd.f32 %v3797, %v3798
      %v3807 = vrot.slane %v3806, 4
      %v3808 = vadd.f32 %v3806, %v3807
      %v3809 = vrot.slane %v3808, 2
      %v3810 = vadd.f32 %v3808, %v3809
      %v3811 = vrot.slane %v3810, 1
      %v3812 = vadd.f32 %v3810, %v3811
      %v3813 = vmul.f32 %v3466, %v3791
      %v3814 = vmul.f32 %v3468, %v3792
      %v3815 = vmul.f32 %v3514, %v3793
      %v3816 = vmul.f32 %v3516, %v3794
      %v3817 = vperm.slane %v2023, 4
      %v3818 = vperm.slane %v2027, 4
      %v3819 = vmul.f32 %v3817, %v3029
      %v3820 = vmul.f32 %v3817, %v3035
      %v3821 = vmul.f32 %v3818, %v3042
      %v3822 = vmul.f32 %v3818, %v3048
      %v3823 = vadd.f32 %v3813, %v3819
      %v3824 = vadd.f32 %v3814, %v3820
      %v3825 = vadd.f32 %v3815, %v3821
      %v3826 = vadd.f32 %v3816, %v3822
      %v3827 = vmul.f32 %v3823, %v3065
      %v3828 = vmul.f32 %v3824, %v3071
      %v3829 = vmul.f32 %v3825, %v3078
      %v3830 = vmul.f32 %v3826, %v3084
      %v3831 = vadd.f32 %v3827, %v3828
      %v3832 = vrot.slane %v3831, 4
      %v3833 = vadd.f32 %v3831, %v3832
      %v3834 = vrot.slane %v3833, 2
      %v3835 = vadd.f32 %v3833, %v3834
      %v3836 = vrot.slane %v3835, 1
      %v3837 = vadd.f32 %v3835, %v3836
      %v3838 = vadd.f32 %v3829, %v3830
      %v3839 = vrot.slane %v3838, 4
      %v3840 = vadd.f32 %v3838, %v3839
      %v3841 = vrot.slane %v3840, 2
      %v3842 = vadd.f32 %v3840, %v3841
      %v3843 = vrot.slane %v3842, 1
      %v3844 = vadd.f32 %v3842, %v3843
      %v3845 = vmul.f32 %v3470, %v3823
      %v3846 = vmul.f32 %v3472, %v3824
      %v3847 = vmul.f32 %v3518, %v3825
      %v3848 = vmul.f32 %v3520, %v3826
      %v3849 = vperm.slane %v2023, 5
      %v3850 = vperm.slane %v2027, 5
      %v3851 = vmul.f32 %v3849, %v3113
      %v3852 = vmul.f32 %v3849, %v3119
      %v3853 = vmul.f32 %v3850, %v3126
      %v3854 = vmul.f32 %v3850, %v3132
      %v3855 = vadd.f32 %v3845, %v3851
      %v3856 = vadd.f32 %v3846, %v3852
      %v3857 = vadd.f32 %v3847, %v3853
      %v3858 = vadd.f32 %v3848, %v3854
      %v3859 = vmul.f32 %v3855, %v3149
      %v3860 = vmul.f32 %v3856, %v3155
      %v3861 = vmul.f32 %v3857, %v3162
      %v3862 = vmul.f32 %v3858, %v3168
      %v3863 = vadd.f32 %v3859, %v3860
      %v3864 = vrot.slane %v3863, 4
      %v3865 = vadd.f32 %v3863, %v3864
      %v3866 = vrot.slane %v3865, 2
      %v3867 = vadd.f32 %v3865, %v3866
      %v3868 = vrot.slane %v3867, 1
      %v3869 = vadd.f32 %v3867, %v3868
      %v3870 = vadd.f32 %v3861, %v3862
      %v3871 = vrot.slane %v3870, 4
      %v3872 = vadd.f32 %v3870, %v3871
      %v3873 = vrot.slane %v3872, 2
      %v3874 = vadd.f32 %v3872, %v3873
      %v3875 = vrot.slane %v3874, 1
      %v3876 = vadd.f32 %v3874, %v3875
      %v3877 = vmul.f32 %v3474, %v3855
      %v3878 = vmul.f32 %v3476, %v3856
      %v3879 = vmul.f32 %v3522, %v3857
      %v3880 = vmul.f32 %v3524, %v3858
      %v3881 = vperm.slane %v2023, 6
      %v3882 = vperm.slane %v2027, 6
      %v3883 = vmul.f32 %v3881, %v3197
      %v3884 = vmul.f32 %v3881, %v3203
      %v3885 = vmul.f32 %v3882, %v3210
      %v3886 = vmul.f32 %v3882, %v3216
      %v3887 = vadd.f32 %v3877, %v3883
      %v3888 = vadd.f32 %v3878, %v3884
      %v3889 = vadd.f32 %v3879, %v3885
      %v3890 = vadd.f32 %v3880, %v3886
      %v3891 = vmul.f32 %v3887, %v3233
      %v3892 = vmul.f32 %v3888, %v3239
      %v3893 = vmul.f32 %v3889, %v3246
      %v3894 = vmul.f32 %v3890, %v3252
      %v3895 = vadd.f32 %v3891, %v3892
      %v3896 = vrot.slane %v3895, 4
      %v3897 = vadd.f32 %v3895, %v3896
      %v3898 = vrot.slane %v3897, 2
      %v3899 = vadd.f32 %v3897, %v3898
      %v3900 = vrot.slane %v3899, 1
      %v3901 = vadd.f32 %v3899, %v3900
      %v3902 = vadd.f32 %v3893, %v3894
      %v3903 = vrot.slane %v3902, 4
      %v3904 = vadd.f32 %v3902, %v3903
      %v3905 = vrot.slane %v3904, 2
      %v3906 = vadd.f32 %v3904, %v3905
      %v3907 = vrot.slane %v3906, 1
      %v3908 = vadd.f32 %v3906, %v3907
      %v3909 = vsel %vm3271, %v3549, %v3581
      %v3910 = vsel %vm3271, %v3556, %v3588
      %v3911 = vsel %vm3274, %v3909, %v3613
      %v3912 = vsel %vm3274, %v3910, %v3620
      %v3913 = vsel %vm1293, %v3911, %v3645
      %v3914 = vsel %vm1293, %v3912, %v3652
      %v3915 = vsel %vm3279, %v3913, %v3677
      %v3916 = vsel %vm3279, %v3914, %v3684
      %v3917 = vsel %vm1096, %v3915, %v3709
      %v3918 = vsel %vm1096, %v3916, %v3716
      %v3919 = vsel %vm1045, %v3917, %v3741
      %v3920 = vsel %vm1045, %v3918, %v3748
      %v3921 = vsel %vm994, %v3919, %v3773
      %v3922 = vsel %vm994, %v3920, %v3780
      %v3923 = vsel %vm3271, %v3805, %v3837
      %v3924 = vsel %vm3271, %v3812, %v3844
      %v3925 = vsel %vm3274, %v3923, %v3869
      %v3926 = vsel %vm3274, %v3924, %v3876
      %v3927 = vsel %vm1293, %v3925, %v3901
      %v3928 = vsel %vm1293, %v3926, %v3908
      %v3929 = vld [vmem:[%s12] sm:$0x3]
      %v3931 = vperm.slane %v3929, 0
      %v3932 = vperm.slane %v3929, 1
      %v3935 = vmul.f32 %v1277, %v3931
      %v3936 = vmul.f32 %v1278, %v3932
      %v3937 = vmul.f32 %v1279, %v3931
      %v3938 = vmul.f32 %v1280, %v3932
      %v3939 = vmul.f32 %v1281, %v3931
      %v3940 = vmul.f32 %v1282, %v3932
      %v3941 = vmul.f32 %v1283, %v3931
      %v3942 = vmul.f32 %v1284, %v3932
      %v3943 = vadd.f32 %v3286, %v3935
      %v3944 = vadd.f32 %v3921, %v3936
      %v3945 = vadd.f32 %v3292, %v3937
      %v3946 = vadd.f32 %v3927, %v3938
      %v3947 = vadd.f32 %v3287, %v3939
      %v3948 = vadd.f32 %v3922, %v3940
      %v3949 = vadd.f32 %v3293, %v3941
      %v3950 = vadd.f32 %v3928, %v3942
      %v3951 = vxor.u32 %v914, 2147483648
      %v3952 = vxor.u32 %v933, 2147483648
      %v3953 = vxor.u32 %v916, 2147483648
      %v3954 = vxor.u32 %v935, 2147483648
      %v3955 = vxor.u32 %v919, 2147483648
      %v3956 = vxor.u32 %v938, 2147483648
      %v3957 = vxor.u32 %v921, 2147483648
      %v3958 = vxor.u32 %v940, 2147483648
      %v3959 = vmul.f32 %v3951, 1.442695
      %v3960 = vpow.pop %v3959
      %v3961 = vmul.f32 %v3952, 1.442695
      %v3962 = vpow.pop %v3961
      %v3963 = vmul.f32 %v3953, 1.442695
      %v3964 = vpow.pop %v3963
      %v3965 = vmul.f32 %v3954, 1.442695
      %v3966 = vpow.pop %v3965
      %v3967 = vmul.f32 %v3955, 1.442695
      %v3968 = vpow.pop %v3967
      %v3969 = vmul.f32 %v3956, 1.442695
      %v3970 = vpow.pop %v3969
      %v3971 = vmul.f32 %v3957, 1.442695
      %v3972 = vpow.pop %v3971
      %v3973 = vmul.f32 %v3958, 1.442695
      %v3974 = vpow.pop %v3973
      %v3975 = vadd.f32 %v3960, 1.0
      %v3976 = vadd.f32 %v3962, 1.0
      %v3977 = vadd.f32 %v3964, 1.0
      %v3978 = vadd.f32 %v3966, 1.0
      %v3979 = vadd.f32 %v3968, 1.0
      %v3980 = vadd.f32 %v3970, 1.0
      %v3981 = vadd.f32 %v3972, 1.0
      %v3982 = vadd.f32 %v3974, 1.0
      %v3983 = vrcp.pop %v3975
      %v3984 = vmul.f32 %v3975, %v3983
      %v3985 = vsub.f32 1.0, %v3984
      %v3986 = vmul.f32 %v3983, %v3985
      %v3987 = vadd.f32 %v3983, %v3986
      %vm3988 = vweird.f32 %v3975
      %vm3989 = vweird.f32 %v3983
      %vm3990 = vmor %vm3988, %vm3989
      %v3991 = vsel %vm3990, %v3983, %v3987
      %v3992 = vand.u32 2147483647, %v3975
      %vm3993 = vcmp.eq.f32.partialorder %v3992, 8.507059e+37
      %v3994 = vand.u32 %v3975, 2147483648
      %v3995 = vor.u32 1.1754944e-38, %v3994
      %v3996 = vsel %vm3993, %v3995, %v3991
      %v3997 = vmul.f32 1.0, %v3996
      %v3998 = vrcp.pop %v3976
      %v3999 = vmul.f32 %v3976, %v3998
      %v4000 = vsub.f32 1.0, %v3999
      %v4001 = vmul.f32 %v3998, %v4000
      %v4002 = vadd.f32 %v3998, %v4001
      %vm4003 = vweird.f32 %v3976
      %vm4004 = vweird.f32 %v3998
      %vm4005 = vmor %vm4003, %vm4004
      %v4006 = vsel %vm4005, %v3998, %v4002
      %v4007 = vand.u32 2147483647, %v3976
      %vm4008 = vcmp.eq.f32.partialorder %v4007, 8.507059e+37
      %v4009 = vand.u32 %v3976, 2147483648
      %v4010 = vor.u32 1.1754944e-38, %v4009
      %v4011 = vsel %vm4008, %v4010, %v4006
      %v4012 = vmul.f32 1.0, %v4011
      %v4013 = vrcp.pop %v3977
      %v4014 = vmul.f32 %v3977, %v4013
      %v4015 = vsub.f32 1.0, %v4014
      %v4016 = vmul.f32 %v4013, %v4015
      %v4017 = vadd.f32 %v4013, %v4016
      %vm4018 = vweird.f32 %v3977
      %vm4019 = vweird.f32 %v4013
      %vm4020 = vmor %vm4018, %vm4019
      %v4021 = vsel %vm4020, %v4013, %v4017
      %v4022 = vand.u32 2147483647, %v3977
      %vm4023 = vcmp.eq.f32.partialorder %v4022, 8.507059e+37
      %v4024 = vand.u32 %v3977, 2147483648
      %v4025 = vor.u32 1.1754944e-38, %v4024
      %v4026 = vsel %vm4023, %v4025, %v4021
      %v4027 = vmul.f32 1.0, %v4026
      %v4028 = vrcp.pop %v3978
      %v4029 = vmul.f32 %v3978, %v4028
      %v4030 = vsub.f32 1.0, %v4029
      %v4031 = vmul.f32 %v4028, %v4030
      %v4032 = vadd.f32 %v4028, %v4031
      %vm4033 = vweird.f32 %v3978
      %vm4034 = vweird.f32 %v4028
      %vm4035 = vmor %vm4033, %vm4034
      %v4036 = vsel %vm4035, %v4028, %v4032
      %v4037 = vand.u32 2147483647, %v3978
      %vm4038 = vcmp.eq.f32.partialorder %v4037, 8.507059e+37
      %v4039 = vand.u32 %v3978, 2147483648
      %v4040 = vor.u32 1.1754944e-38, %v4039
      %v4041 = vsel %vm4038, %v4040, %v4036
      %v4042 = vmul.f32 1.0, %v4041
      %v4043 = vrcp.pop %v3979
      %v4044 = vmul.f32 %v3979, %v4043
      %v4045 = vsub.f32 1.0, %v4044
      %v4046 = vmul.f32 %v4043, %v4045
      %v4047 = vadd.f32 %v4043, %v4046
      %vm4048 = vweird.f32 %v3979
      %vm4049 = vweird.f32 %v4043
      %vm4050 = vmor %vm4048, %vm4049
      %v4051 = vsel %vm4050, %v4043, %v4047
      %v4052 = vand.u32 2147483647, %v3979
      %vm4053 = vcmp.eq.f32.partialorder %v4052, 8.507059e+37
      %v4054 = vand.u32 %v3979, 2147483648
      %v4055 = vor.u32 1.1754944e-38, %v4054
      %v4056 = vsel %vm4053, %v4055, %v4051
      %v4057 = vmul.f32 1.0, %v4056
      %v4058 = vrcp.pop %v3980
      %v4059 = vmul.f32 %v3980, %v4058
      %v4060 = vsub.f32 1.0, %v4059
      %v4061 = vmul.f32 %v4058, %v4060
      %v4062 = vadd.f32 %v4058, %v4061
      %vm4063 = vweird.f32 %v3980
      %vm4064 = vweird.f32 %v4058
      %vm4065 = vmor %vm4063, %vm4064
      %v4066 = vsel %vm4065, %v4058, %v4062
      %v4067 = vand.u32 2147483647, %v3980
      %vm4068 = vcmp.eq.f32.partialorder %v4067, 8.507059e+37
      %v4069 = vand.u32 %v3980, 2147483648
      %v4070 = vor.u32 1.1754944e-38, %v4069
      %v4071 = vsel %vm4068, %v4070, %v4066
      %v4072 = vmul.f32 1.0, %v4071
      %v4073 = vrcp.pop %v3981
      %v4074 = vmul.f32 %v3981, %v4073
      %v4075 = vsub.f32 1.0, %v4074
      %v4076 = vmul.f32 %v4073, %v4075
      %v4077 = vadd.f32 %v4073, %v4076
      %vm4078 = vweird.f32 %v3981
      %vm4079 = vweird.f32 %v4073
      %vm4080 = vmor %vm4078, %vm4079
      %v4081 = vsel %vm4080, %v4073, %v4077
      %v4082 = vand.u32 2147483647, %v3981
      %vm4083 = vcmp.eq.f32.partialorder %v4082, 8.507059e+37
      %v4084 = vand.u32 %v3981, 2147483648
      %v4085 = vor.u32 1.1754944e-38, %v4084
      %v4086 = vsel %vm4083, %v4085, %v4081
      %v4087 = vmul.f32 1.0, %v4086
      %v4088 = vrcp.pop %v3982
      %v4089 = vmul.f32 %v3982, %v4088
      %v4090 = vsub.f32 1.0, %v4089
      %v4091 = vmul.f32 %v4088, %v4090
      %v4092 = vadd.f32 %v4088, %v4091
      %vm4093 = vweird.f32 %v3982
      %vm4094 = vweird.f32 %v4088
      %vm4095 = vmor %vm4093, %vm4094
      %v4096 = vsel %vm4095, %v4088, %v4092
      %v4097 = vand.u32 2147483647, %v3982
      %vm4098 = vcmp.eq.f32.partialorder %v4097, 8.507059e+37
      %v4099 = vand.u32 %v3982, 2147483648
      %v4100 = vor.u32 1.1754944e-38, %v4099
      %v4101 = vsel %vm4098, %v4100, %v4096
      %v4102 = vmul.f32 1.0, %v4101
      %v4103 = vmul.f32 %v914, %v3997
      %v4104 = vmul.f32 %v933, %v4012
      %v4105 = vmul.f32 %v916, %v4027
      %v4106 = vmul.f32 %v935, %v4042
      %v4107 = vmul.f32 %v919, %v4057
      %v4108 = vmul.f32 %v938, %v4072
      %v4109 = vmul.f32 %v921, %v4087
      %v4110 = vmul.f32 %v940, %v4102
      %v4119 = vrot.slane %v4103, 3
      %v4120 = vrot.slane %v4105, 3
      %v4121 = vsel %vm1096, %v4119, %v4120
      %v4122 = vrot.slane %v4104, 3
      %v4123 = vrot.slane %v4106, 3
      %v4124 = vsel %vm1096, %v4122, %v4123
      %v4125 = vrot.slane %v4107, 3
      %v4126 = vrot.slane %v4109, 3
      %v4127 = vsel %vm1096, %v4125, %v4126
      %v4128 = vrot.slane %v4108, 3
      %v4129 = vrot.slane %v4110, 3
      %v4130 = vsel %vm1096, %v4128, %v4129
      %v4139 = vmul.f32 %v3943, %v4121
      %v4140 = vmul.f32 %v3944, %v4124
      %v4141 = vmul.f32 %v3945, %v4120
      %v4142 = vmul.f32 %v3946, %v4123
      %v4143 = vmul.f32 %v3947, %v4127
      %v4144 = vmul.f32 %v3948, %v4130
      %v4145 = vmul.f32 %v3949, %v4126
      %v4146 = vmul.f32 %v3950, %v4129
      %v4155 = vrot.slane %v4139, 5
      %v4156 = vrot.slane %v4140, 5
      %v4157 = vrot.slane %v4141, 5
      %v4158 = vsel %vm1293, %v4155, %v4157
      %v4159 = vrot.slane %v4142, 5
      %v4160 = vsel %vm1293, %v4156, %v4159
      %v4161 = vrot.slane %v4143, 5
      %v4162 = vrot.slane %v4144, 5
      %v4163 = vrot.slane %v4145, 5
      %v4164 = vsel %vm1293, %v4161, %v4163
      %v4165 = vrot.slane %v4146, 5
      %v4166 = vsel %vm1293, %v4162, %v4165
      %v4175 = vsel %vm1293, 0.0, %v4155
      %v4176 = vsel %vm1293, 0.0, %v4156
      %v4177 = vsel %vm1293, 0.0, %v4161
      %v4178 = vsel %vm1293, 0.0, %v4162
      %v4179 = vsel %vm994, %v4158, 0.0
      %v4180 = vsel %vm994, %v4160, 0.0
      %v4181 = vsel %vm994, %v4164, 0.0
      %v4182 = vsel %vm994, %v4166, 0.0
      %v4183 = vpack.c.bf16 %v4179, %v4175
      %v4184 = vpack.c.bf16 %v4180, %v4176
      %v4185 = vpack.c.bf16 %v4181, %v4177
      %v4186 = vpack.c.bf16 %v4182, %v4178
      %v4187 = vld [vmem:[%s13] sm:$0xf]
      %v4188 = vld [vmem:[%s13 + $0x4] sm:$0xf]
      %v4189 = vld [vmem:[%s13 + $0x8] sm:$0xf]
      %v4190 = vld [vmem:[%s13 + $0xc] sm:$0xf]
      %v4191 = vld [vmem:[%s13 + $0x10] sm:$0xf]
      %v4192 = vld [vmem:[%s13 + $0x14] sm:$0xf]
      %v4193 = vld [vmem:[%s13 + $0x18] sm:$0xf]
      %v4194 = vld [vmem:[%s13 + $0x1c] sm:$0xf]
      %v4195 = vld [vmem:[%s13 + $0x20] sm:$0xf]
      %v4196 = vld [vmem:[%s13 + $0x24] sm:$0xf]
      %v4197 = vld [vmem:[%s13 + $0x28] sm:$0xf]
      %v4198 = vld [vmem:[%s13 + $0x2c] sm:$0xf]
      %v4199 = vld [vmem:[%s13 + $0x30] sm:$0xf]
      %v4200 = vld [vmem:[%s13 + $0x34] sm:$0xf]
      %v4201 = vld [vmem:[%s13 + $0x38] sm:$0xf]
      %v4202 = vld [vmem:[%s13 + $0x3c] sm:$0xf]
      %v4203 = vld [vmem:[%s13 + $0x40] sm:$0xf]
      %v4204 = vld [vmem:[%s13 + $0x44] sm:$0xf]
      %v4205 = vld [vmem:[%s13 + $0x48] sm:$0xf]
      %v4206 = vld [vmem:[%s13 + $0x4c] sm:$0xf]
      %v4207 = vld [vmem:[%s13 + $0x50] sm:$0xf]
      %v4208 = vld [vmem:[%s13 + $0x54] sm:$0xf]
      %v4209 = vld [vmem:[%s13 + $0x58] sm:$0xf]
      %v4210 = vld [vmem:[%s13 + $0x5c] sm:$0xf]
      %v4211 = vld [vmem:[%s13 + $0x60] sm:$0xf]
      %v4212 = vld [vmem:[%s13 + $0x64] sm:$0xf]
      %v4213 = vld [vmem:[%s13 + $0x68] sm:$0xf]
      %v4214 = vld [vmem:[%s13 + $0x6c] sm:$0xf]
      %v4215 = vld [vmem:[%s13 + $0x70] sm:$0xf]
      %v4216 = vld [vmem:[%s13 + $0x74] sm:$0xf]
      %v4217 = vld [vmem:[%s13 + $0x78] sm:$0xf]
      %v4218 = vld [vmem:[%s13 + $0x7c] sm:$0xf]
      %v4251 = vunpack.c.l.b16 %v4187
      %v4252 = vunpack.c.l.b16 %v4188
      %v4253 = vunpack.c.l.b16 %v4189
      %v4254 = vunpack.c.l.b16 %v4190
      %v4255 = vunpack.c.l.b16 %v4191
      %v4256 = vunpack.c.l.b16 %v4192
      %v4257 = vunpack.c.l.b16 %v4193
      %v4258 = vunpack.c.l.b16 %v4194
      %v4259 = vunpack.c.l.b16 %v4195
      %v4260 = vunpack.c.l.b16 %v4196
      %v4261 = vunpack.c.l.b16 %v4197
      %v4262 = vunpack.c.l.b16 %v4198
      %v4263 = vunpack.c.l.b16 %v4199
      %v4264 = vunpack.c.l.b16 %v4200
      %v4265 = vunpack.c.l.b16 %v4201
      %v4266 = vunpack.c.l.b16 %v4202
      %v4267 = vunpack.c.l.b16 %v4203
      %v4268 = vunpack.c.l.b16 %v4204
      %v4269 = vunpack.c.l.b16 %v4205
      %v4270 = vunpack.c.l.b16 %v4206
      %v4271 = vunpack.c.l.b16 %v4207
      %v4272 = vunpack.c.l.b16 %v4208
      %v4273 = vunpack.c.l.b16 %v4209
      %v4274 = vunpack.c.l.b16 %v4210
      %v4275 = vunpack.c.l.b16 %v4211
      %v4276 = vunpack.c.l.b16 %v4212
      %v4277 = vunpack.c.l.b16 %v4213
      %v4278 = vunpack.c.l.b16 %v4214
      %v4279 = vunpack.c.l.b16 %v4215
      %v4280 = vunpack.c.l.b16 %v4216
      %v4281 = vunpack.c.l.b16 %v4217
      %v4282 = vunpack.c.l.b16 %v4218
      %v4283 = vpack.c.b16 %v4252, %v4251
      %v4284 = vpack.c.b16 %v4254, %v4253
      %v4285 = vpack.c.b16 %v4256, %v4255
      %v4286 = vpack.c.b16 %v4258, %v4257
      %v4287 = vpack.c.b16 %v4260, %v4259
      %v4288 = vpack.c.b16 %v4262, %v4261
      %v4289 = vpack.c.b16 %v4264, %v4263
      %v4290 = vpack.c.b16 %v4266, %v4265
      %v4291 = vpack.c.b16 %v4268, %v4267
      %v4292 = vpack.c.b16 %v4270, %v4269
      %v4293 = vpack.c.b16 %v4272, %v4271
      %v4294 = vpack.c.b16 %v4274, %v4273
      %v4295 = vpack.c.b16 %v4276, %v4275
      %v4296 = vpack.c.b16 %v4278, %v4277
      %v4297 = vpack.c.b16 %v4280, %v4279
      %v4298 = vpack.c.b16 %v4282, %v4281
      %4315 = vmatpush.bf16.msra.mxu0 %v4290
      %4316 = vmatpush.bf16.msra.mxu0 %v4289
      %4317 = vmatpush.bf16.msra.mxu0 %v4288
      %4318 = vmatpush.bf16.msra.mxu0 %v4287
      %4319 = vmatpush.bf16.msra.mxu0 %v4286
      %4320 = vmatpush.bf16.msra.mxu0 %v4285
      %4321 = vmatpush.bf16.msra.mxu0 %v4284
      %4322 = vmatpush.bf16.msra.mxu0 %v4283
      %4323 = vmatmul.bf16.gmra.mxu0 %v4183
      %v4324 = vpop.f32.mrf.mxu0
      %v4325 = vadd.f32 0.0, %v4324
      %v4326 = vpop.f32.mrf.mxu0
      %v4327 = vadd.f32 0.0, %v4326
      %4328 = vmatmul.bf16.gmra.mxu0 %v4185
      %v4329 = vpop.f32.mrf.mxu0
      %v4330 = vadd.f32 0.0, %v4329
      %v4331 = vpop.f32.mrf.mxu0
      %v4332 = vadd.f32 0.0, %v4331
      %4333 = vdwg.mxu0
      %4334 = vmatpush.bf16.msra.mxu0 %v4298
      %4335 = vmatpush.bf16.msra.mxu0 %v4297
      %4336 = vmatpush.bf16.msra.mxu0 %v4296
      %4337 = vmatpush.bf16.msra.mxu0 %v4295
      %4338 = vmatpush.bf16.msra.mxu0 %v4294
      %4339 = vmatpush.bf16.msra.mxu0 %v4293
      %4340 = vmatpush.bf16.msra.mxu0 %v4292
      %4341 = vmatpush.bf16.msra.mxu0 %v4291
      %4342 = vmatmul.bf16.gmra.mxu0 %v4184
      %v4343 = vpop.f32.mrf.mxu0
      %v4344 = vadd.f32 %v4325, %v4343
      %v4345 = vpop.f32.mrf.mxu0
      %v4346 = vadd.f32 %v4327, %v4345
      %4347 = vmatmul.bf16.gmra.mxu0 %v4186
      %v4348 = vpop.f32.mrf.mxu0
      %v4349 = vadd.f32 %v4330, %v4348
      %v4350 = vpop.f32.mrf.mxu0
      %v4351 = vadd.f32 %v4332, %v4350
      %4352 = vdwg.mxu0
      %4353 = vadd.xlane.f32.xlu0 %v4344
      %v4354 = vpop.xlane.xlu0 %4353
      %4355 = vadd.xlane.f32.xlu0 %v4346
      %v4356 = vpop.xlane.xlu0 %4355
      %4357 = vadd.xlane.f32.xlu0 %v4349
      %v4358 = vpop.xlane.xlu0 %4357
      %4359 = vadd.xlane.f32.xlu0 %v4351
      %v4360 = vpop.xlane.xlu0 %4359
      %v4361 = vrcp.pop 128.0
      %v4362 = vmul.f32 128.0, %v4361
      %v4363 = vsub.f32 1.0, %v4362
      %v4364 = vmul.f32 %v4361, %v4363
      %v4365 = vadd.f32 %v4361, %v4364
      %vm4366 = vweird.f32 %v4361
      %v4367 = vsel %vm4366, %v4361, %v4365
      %v4368 = vmul.f32 %v4354, %v4367
      %v4369 = vmul.f32 %v4356, %v4367
      %v4370 = vmul.f32 %v4358, %v4367
      %v4371 = vmul.f32 %v4360, %v4367
      %v4372 = vsub.f32 %v4344, %v4368
      %v4373 = vsub.f32 %v4346, %v4369
      %v4374 = vsub.f32 %v4349, %v4370
      %v4375 = vsub.f32 %v4351, %v4371
      %v4376 = vmul.f32 %v4372, %v4372
      %v4377 = vmul.f32 %v4373, %v4373
      %v4378 = vmul.f32 %v4374, %v4374
      %v4379 = vmul.f32 %v4375, %v4375
      %4380 = vadd.xlane.f32.xlu0 %v4376
      %v4381 = vpop.xlane.xlu0 %4380
      %4382 = vadd.xlane.f32.xlu0 %v4377
      %v4383 = vpop.xlane.xlu0 %4382
      %4384 = vadd.xlane.f32.xlu0 %v4378
      %v4385 = vpop.xlane.xlu0 %4384
      %4386 = vadd.xlane.f32.xlu0 %v4379
      %v4387 = vpop.xlane.xlu0 %4386
      %v4388 = vmul.f32 %v4381, %v4367
      %v4389 = vmul.f32 %v4383, %v4367
      %v4390 = vmul.f32 %v4385, %v4367
      %v4391 = vmul.f32 %v4387, %v4367
      %v4392 = vadd.f32 %v4388, 1e-05
      %v4393 = vadd.f32 %v4389, 1e-05
      %v4394 = vadd.f32 %v4390, 1e-05
      %v4395 = vadd.f32 %v4391, 1e-05
      %v4396 = vrsqrt.pop %v4392
      %v4397 = vmul.f32 %v4396, %v4392
      %v4398 = vmul.f32 %v4397, %v4396
      %v4399 = vmul.f32 0.5, %v4398
      %v4400 = vsub.f32 1.5, %v4399
      %v4401 = vmul.f32 %v4396, %v4400
      %vm4402 = vweird.f32 %v4392
      %vm4403 = vweird.f32 %v4396
      %vm4404 = vmor %vm4402, %vm4403
      %v4405 = vsel %vm4404, %v4396, %v4401
      %v4406 = vrsqrt.pop %v4393
      %v4407 = vmul.f32 %v4406, %v4393
      %v4408 = vmul.f32 %v4407, %v4406
      %v4409 = vmul.f32 0.5, %v4408
      %v4410 = vsub.f32 1.5, %v4409
      %v4411 = vmul.f32 %v4406, %v4410
      %vm4412 = vweird.f32 %v4393
      %vm4413 = vweird.f32 %v4406
      %vm4414 = vmor %vm4412, %vm4413
      %v4415 = vsel %vm4414, %v4406, %v4411
      %v4416 = vrsqrt.pop %v4394
      %v4417 = vmul.f32 %v4416, %v4394
      %v4418 = vmul.f32 %v4417, %v4416
      %v4419 = vmul.f32 0.5, %v4418
      %v4420 = vsub.f32 1.5, %v4419
      %v4421 = vmul.f32 %v4416, %v4420
      %vm4422 = vweird.f32 %v4394
      %vm4423 = vweird.f32 %v4416
      %vm4424 = vmor %vm4422, %vm4423
      %v4425 = vsel %vm4424, %v4416, %v4421
      %v4426 = vrsqrt.pop %v4395
      %v4427 = vmul.f32 %v4426, %v4395
      %v4428 = vmul.f32 %v4427, %v4426
      %v4429 = vmul.f32 0.5, %v4428
      %v4430 = vsub.f32 1.5, %v4429
      %v4431 = vmul.f32 %v4426, %v4430
      %vm4432 = vweird.f32 %v4395
      %vm4433 = vweird.f32 %v4426
      %vm4434 = vmor %vm4432, %vm4433
      %v4435 = vsel %vm4434, %v4426, %v4431
      %v4436 = vmul.f32 %v4372, %v4405
      %v4437 = vmul.f32 %v4373, %v4415
      %v4438 = vmul.f32 %v4374, %v4425
      %v4439 = vmul.f32 %v4375, %v4435
      %v4440 = vld [vmem:[%s14] sm:$0x1]
      %v4442 = vperm.slane %v4440, 0
      %v4444 = vmul.f32 %v4436, %v4442
      %v4445 = vmul.f32 %v4437, %v4442
      %v4446 = vmul.f32 %v4438, %v4442
      %v4447 = vmul.f32 %v4439, %v4442
      %v4448 = vld [vmem:[%s15] sm:$0x1]
      %v4450 = vperm.slane %v4448, 0
      %v4452 = vadd.f32 %v4444, %v4450
      %v4453 = vadd.f32 %v4445, %v4450
      %v4454 = vadd.f32 %v4446, %v4450
      %v4455 = vadd.f32 %v4447, %v4450
      %4456 = vst [vmem:[%s572] sm:$0xff] %v4452
      %4457 = vst [vmem:[%s572 + $0x8] sm:$0xff] %v4453
      %4458 = vst [vmem:[%s572 + $0x10] sm:$0xff] %v4454
      %4459 = vst [vmem:[%s572 + $0x18] sm:$0xff] %v4455
      %s4460 = smul.u32 2, %s27
      %p4461 = scmp.lt.s32.totalorder %s4460, 3
      %s4462 = scalar_select %p4461, %s4460, 3
      %s4463 = smul.addr %s4462, 2
      %s4464 = smul.addr %s4463, 8
      %s4465 = scalar_lea.vmem %s16, %s4464
      // Predicated region
      $region85: #{adt_encoder_forward.3} parent=83 // pred_check
        %p4466 = pneg %p396
      $region86: #{adt_encoder_forward.3} parent=83 // pred_check_branch
        %4468 = sbr.rel (%p4466) target = $region88
      $region87: #{adt_encoder_forward.3} parent=83 // pred_region
        %s4469 = smul.u32 2, %s27
      $region88: #{adt_encoder_forward.3} parent=83 // pred_fallthru
        _
    $region84: #{adt_encoder_forward.3} parent=5 // pred_fallthru
      _
    %p4470 = scmp.le.s32.totalorder 2, %s22
    // Predicated region
    $region89: #{adt_encoder_forward.3} parent=5 // pred_check
      %p4471 = pneg %p4470
    $region90: #{adt_encoder_forward.3} parent=5 // pred_check_branch
      %4473 = sbr.rel (%p4471) target = $region92
    $region91: #{adt_encoder_forward.3} parent=5 // pred_region
      %s4474 = ssub.s32 %s22, 2
      // Predicated region
      $region93: #{adt_encoder_forward.3} parent=91 // pred_check
        %p4475 = pneg %p402
      $region94: #{adt_encoder_forward.3} parent=91 // pred_check_branch
        %4477 = sbr.rel (%p4475) target = $region96
      $region95: #{adt_encoder_forward.3} parent=91 // pred_region
        %s4478 = smul.u32 2, %s28
        %p4479 = scmp.lt.s32.totalorder %s4478, 3
        %s4480 = scalar_select %p4479, %s4478, 3
        %s4481 = smul.addr %s4480, 2
        %s4482 = smul.addr %s4481, 8
        %s4483 = scalar_lea.vmem %s16, %s4482
      $region96: #{adt_encoder_forward.3} parent=91 // pred_fallthru
        _
    $region92: #{adt_encoder_forward.3} parent=5 // pred_fallthru
      _
  $region6: #{adt_encoder_forward.3} parent=0 // loop_footer
    %s26 = sadd.s32 1, %s22
  $region7: #{adt_encoder_forward.3} parent=0 // loop_footer_branch
    %21 = sbr.rel target = $region3
  $region8: #{adt_encoder_forward.3} parent=0 // loop_exit
    _

</llo_original>
